<compile_context>
chip_gen: v6e
topology: v6e:2x2x1
jax: 0.10.0
libtpu: 0.0.40
codegen_flags: <defaults>
</compile_context>

<pallas_src>
import functools
import math

import numpy as np
import jax
import jax.numpy as jnp
from jax.experimental import pallas as pl
from jax.experimental.pallas import tpu as pltpu

# ----------------------------- model constants ------------------------------
CDS_IN = 2            # ConvDeepSet.in_channels (density + value channel)
ENC_DIM = 8           # ConvDeepSet.encoder_dim
RHO_IN = 8            # rho.in_channels == encoder out_channels
RHO_OUT = 16          # rho.out_channels
RHO_K = 5             # rho conv kernel size
RHO_NUM_HALVING = 0   # rho.num_halving_layers -> multiplier = 1
POINTS_PER_UNIT = 16

# --------- packed-scalar layout (single (SCAL_LEN,) f32 array in SMEM) -------
SC_INV_CROSS0 = 0     # encoder cross inverse scales (2)
SC_INV_CROSS1 = 1
SC_INV_SF0 = 2        # encoder self-forward inverse scales (2)
SC_INV_SF1 = 3
SC_INV_SB = 4         # encoder self-backward inverse scales (8)
SC_C0 = 12            # dec_w * enc_b          (8)
SC_C1 = 20            # dec_w * enc_w[0]       (8)
SC_C2 = 28            # dec_w * enc_w[1]       (8)
SC_DEC_BN = 36        # n_ctx * dec_b
SC_INV_V1 = 37        # sigma_x_encoder inverse scale
SC_V1_C = 38          # sigma_x_encoder bias + density weight
SC_V1_W1 = 39         # sigma_x_encoder weight for the mean feature
SC_INV_V2 = 40        # sigma_x_out_encoder inverse scale
SC_MEAN_B = 41        # mean FinalLayer bias
SC_SIG_B = 42         # sigma FinalLayer bias
SC_INV_MEAN = 43      # mean FinalLayer inverse scales      (16)
SC_MEAN_W = 59        # mean FinalLayer output weights      (16)
SC_INV_SIG = 75       # sigma FinalLayer inverse scales     (32)
SC_SIG_W = 107        # sigma FinalLayer output weights     (32)
SCAL_LEN = 139


# ------------------------------ fused kernel ---------------------------------
def _npprov_kernel(scal_ref, xcol_ref, xrow_ref, ycol_ref, yrow_ref,
                   xg_row_ref, xg_col_ref, xo_col_ref,
                   enc_rows_ref, g_wT_ref, g_cols_ref,
                   rho_wf_ref, rho_b_ref, v2_cols_ref,
                   mean_out_ref, sigma_out_ref, loss_out_ref,
                   *, n_ctx, p_real, p_pad, m8):
    f32 = jnp.float32

    def s(i):                                             # SMEM scalar read
        return scal_ref[i]

    xcol = xcol_ref[0]                                    # (N, 1)
    xrow = xrow_ref[0]                                    # (1, N)
    ycol = ycol_ref[0]                                    # (N, 1)
    yrow = yrow_ref[0]                                    # (1, N)
    xg_r = xg_row_ref[...]                                # (1, Ppad)
    xo_c = xo_col_ref[0]                                  # (m8, 1)

    lane = jax.lax.broadcasted_iota(jnp.int32, (1, p_pad), 1)
    pmask = (lane < p_real).astype(f32)                   # (1, Ppad) grid validity

    # ---------------- shared RBF pieces (ConvDeepSet cross + self) -----------
    d_cross = (xcol - xg_r) ** 2                          # (N, Ppad)
    w_c0 = jnp.exp(-d_cross * s(SC_INV_CROSS0))           # density-channel weights
    w_c1 = jnp.exp(-d_cross * s(SC_INV_CROSS1))           # value-channel weights
    dens = jnp.sum(w_c0, axis=0, keepdims=True)           # (1, Ppad)
    inv_dens = pl.reciprocal(dens + 1e-8, approx=True)

    ds = (xcol - xrow) ** 2                               # (N, N)
    wf0 = jnp.exp(-ds * s(SC_INV_SF0))
    wf1 = jnp.exp(-ds * s(SC_INV_SF1))
    inv_nn = 1.0 / float(n_ctx * n_ctx)
    mwf0 = jnp.sum(jnp.sum(wf0, axis=1, keepdims=True),
                   axis=0, keepdims=True) * inv_nn        # (1, 1)

    # ---------------- Variance(out=1): x_var = sigma_x_encoder(x, x_grid) ----
    w_v1 = jnp.exp(-d_cross * s(SC_INV_V1)) * pmask       # explicit pad mask
    m_v1 = jnp.sum(w_v1, axis=1, keepdims=True) * (1.0 / float(p_real))  # (N, 1)
    xvar_col = s(SC_V1_C) + s(SC_V1_W1) * m_v1            # (N, 1)

    # ---------------- ConvDeepSet -> h (RHO_IN, Ppad), channels-first --------
    enc_b_row = enc_rows_ref[0]                           # (1, 8)
    enc_w0_row = enc_rows_ref[1]
    enc_w1_row = enc_rows_ref[2]
    g_b_col = g_cols_ref[0]                               # (8, 1)
    g_dens_col = g_cols_ref[1]
    g_norm_col = g_cols_ref[2]
    g_wT = g_wT_ref[...]                                  # (8, 8): [o, e] = g_w[e, o]

    def encoder_h(vcol):
        conv = jnp.sum(vcol * w_c1, axis=0, keepdims=True)            # (1, Ppad)
        norm = conv * inv_dens
        mwv = jnp.sum(jnp.sum(vcol * wf1, axis=1, keepdims=True),
                      axis=0, keepdims=True) * inv_nn                 # (1, 1)
        ysm_row = enc_b_row + enc_w0_row * mwf0 + enc_w1_row * mwv    # (1, 8)
        a_col = g_b_col + jnp.sum(g_wT * ysm_row, axis=1, keepdims=True)  # (8, 1)
        return a_col + g_dens_col * dens + g_norm_col * norm          # (8, Ppad)

    # ---------------- rho: Conv1d(8 -> 16, k=5, 'same') + ReLU ---------------
    # Five lane-shifted copies of h are stacked to (40, Ppad); one MXU dot.
    rho_wf = rho_wf_ref[...]                              # (16, 40)
    rho_b_col = rho_b_ref[...]                            # (16, 1)
    half = RHO_K // 2

    def rho(hin):                                         # hin zeroed past p_real
        parts = []
        for k in range(RHO_K):
            d = k - half                                  # tap offset, -2..2
            if d == 0:
                parts.append(hin)
                continue
            # shifted[:, p] = hin[:, p + d]  (jnp.roll convention)
            shifted = pltpu.roll(hin, shift=(-d) % p_pad, axis=1)
            if d < 0:
                shifted = shifted * (lane >= -d).astype(f32)
            else:
                shifted = shifted * (lane < (p_pad - d)).astype(f32)
            parts.append(shifted)
        h_stack = jnp.concatenate(parts, axis=0)          # (40, Ppad)
        out = jnp.dot(rho_wf, h_stack, preferred_element_type=f32) + rho_b_col
        return jnp.maximum(out, 0.0)                      # (16, Ppad)

    # ---------------- mean branch --------------------------------------------
    h1 = pl.reciprocal(1.0 + jnp.exp(-encoder_h(ycol)), approx=True) * pmask
    g1 = rho(h1) * pmask                                  # (16, Ppad)

    # ---------------- variance branch ----------------------------------------
    h2 = encoder_h(xvar_col) * pmask                      # (no activation here)
    g2 = rho(h2) * pmask                                  # (16, Ppad)

    # Variance(out=16): x_out_var = sigma_x_out_encoder(x_grid, x_grid),
    # accumulated over 128-row chunks of x_grid (no full (Ppad, Ppad) tensor).
    wt_gg = jnp.zeros((1, p_pad), f32)
    CS = 128
    for ci in range(p_pad // CS):
        xg_chunk = xg_col_ref[ci * CS:(ci + 1) * CS, :]   # (CS, 1)
        ridx = jax.lax.broadcasted_iota(jnp.int32, (CS, 1), 0) + ci * CS
        rmask = (ridx < p_real).astype(f32)               # explicit pad-row mask
        w = jnp.exp(-((xg_chunk - xg_r) ** 2) * s(SC_INV_V2)) * rmask
        wt_gg = wt_gg + jnp.sum(w, axis=0, keepdims=True)
    wt_gg = wt_gg * (1.0 / float(p_real))                 # (1, Ppad)
    xov = (v2_cols_ref[0] + v2_cols_ref[1] * wt_gg) * pmask   # (16, Ppad)

    # ---------------- FinalLayers: per-channel set-conv + folded linear ------
    d_mp = (xo_c - xg_r) ** 2                             # (m8, Ppad), m8 = rnd8(M)

    def setconv_linear(hcp, inv_base, w_base, nchan):
        # acc[m] = sum_c w[c] * sum_p hcp[c, p] * exp(-inv_c * (xg[p]-xo[m])^2)
        acc = jnp.zeros((m8, 1), f32)
        for c in range(nchan):
            w = jnp.exp(-d_mp * s(inv_base + c))          # (m8, Ppad)
            t = jnp.sum(hcp[c:c + 1, :] * w, axis=1, keepdims=True)   # (m8, 1)
            acc = acc + s(w_base + c) * t
        return acc                                        # (m8, 1)

    mean_col = s(SC_MEAN_B) + setconv_linear(g1, SC_INV_MEAN, SC_MEAN_W, RHO_OUT)
    z_col = (s(SC_SIG_B)
             + setconv_linear(g2, SC_INV_SIG, SC_SIG_W, RHO_OUT)
             + setconv_linear(xov, SC_INV_SIG + RHO_OUT, SC_SIG_W + RHO_OUT,
                              RHO_OUT))
    sigma_col = jnp.maximum(z_col, 0.0) + jnp.log(1.0 + jnp.exp(-jnp.abs(z_col)))

    mean_out_ref[...] = mean_col[None]                    # (1, m8, 1)
    sigma_out_ref[...] = sigma_col[None]

    # ---------------- encoder self-reconstruction loss (first call only) -----
    ywf1 = ycol * wf1                                     # (N, N)
    rec = jnp.zeros((1, n_ctx), f32) + s(SC_DEC_BN)       # (1, N)
    for e in range(ENC_DIM):
        wb = jnp.exp(-ds * s(SC_INV_SB + e))
        inner = s(SC_C0 + e) + s(SC_C1 + e) * wf0 + s(SC_C2 + e) * ywf1
        rec = rec + jnp.sum(wb * inner, axis=0, keepdims=True)
    err = rec - yrow
    sq = jnp.sum(jnp.sum(err * err, axis=1, keepdims=True),
                 axis=0, keepdims=True)                   # (1, 1)
    loss_out_ref[...] = sq[None]                          # (1, 1, 1)


# ------------------------------ wrapper ---------------------------------------
def to_multiple(v, multiple):
    return int(math.ceil(v / multiple) * multiple)


def _round_up(v, m):
    return ((v + m - 1) // m) * m


def _prep_params(params, n_ctx):
    """Fold / reshape the model parameters into the kernel layouts."""
    f32 = jnp.float32

    def inv_scale(sigma):
        # exp(-0.5 * d / exp(sigma)^2) == exp(-d * inv),  inv = 0.5 * exp(-2*sigma)
        return 0.5 * jnp.exp(-2.0 * sigma.astype(f32))

    pe = params["encoder"]
    pv1 = params["sigma_x_encoder"]
    pv2 = params["sigma_x_out_encoder"]
    pm = params["mean_layer"]
    ps = params["sigma_layer"]

    dec_w = pe["dec_w"][:, 0]                        # (8,)
    enc_w = pe["enc_w"]                              # (2, 8)
    enc_b = pe["enc_b"][0]                           # (8,)

    scal = jnp.concatenate([
        inv_scale(pe["sigma_cross"]),                                  # 0..1
        inv_scale(pe["sigma_self_for"]),                               # 2..3
        inv_scale(pe["sigma_self_back"]),                              # 4..11
        dec_w * enc_b,                                                 # 12..19
        dec_w * enc_w[0],                                              # 20..27
        dec_w * enc_w[1],                                              # 28..35
        jnp.reshape(float(n_ctx) * pe["dec_b"][0, 0], (1,)),           # 36
        jnp.reshape(inv_scale(pv1["sigma"]), (1,)),                    # 37
        jnp.reshape(pv1["g_b"][0, 0] + pv1["g_w"][0, 0], (1,)),        # 38
        jnp.reshape(pv1["g_w"][1, 0], (1,)),                           # 39
        jnp.reshape(inv_scale(pv2["sigma"]), (1,)),                    # 40
        jnp.reshape(pm["g_b"][0, 0], (1,)),                            # 41
        jnp.reshape(ps["g_b"][0, 0], (1,)),                            # 42
        inv_scale(pm["sigma"]),                                        # 43..58
        pm["g_w"][:, 0],                                               # 59..74
        inv_scale(ps["sigma"]),                                        # 75..106
        ps["g_w"][:, 0],                                               # 107..138
    ]).astype(f32)
    assert scal.shape[0] == SCAL_LEN

    enc_rows = jnp.stack([pe["enc_b"], enc_w[0:1, :], enc_w[1:2, :]])  # (3, 1, 8)
    g_w = pe["g_w"]                                                    # (10, 8)
    g_wT = jnp.transpose(g_w[:ENC_DIM, :])                             # (8, 8)
    g_cols = jnp.stack([pe["g_b"].reshape(ENC_DIM, 1),
                        g_w[ENC_DIM].reshape(ENC_DIM, 1),
                        g_w[ENC_DIM + 1].reshape(ENC_DIM, 1)])         # (3, 8, 1)
    # rho taps flattened: rho_wf[o, k*8+i] = w[k, i, o]
    rho_wf = jnp.transpose(params["rho"]["w"], (2, 0, 1)).reshape(
        RHO_OUT, RHO_K * RHO_IN)
    rho_b = params["rho"]["b"].reshape(RHO_OUT, 1)
    v2_cols = jnp.stack([(pv2["g_b"][0] + pv2["g_w"][0]).reshape(RHO_OUT, 1),
                         pv2["g_w"][1].reshape(RHO_OUT, 1)])           # (2, 16, 1)
    return scal, enc_rows, g_wT, g_cols, rho_wf, rho_b, v2_cols


def npprov_forward(params, x, y, x_out,
                   points_per_unit=POINTS_PER_UNIT,
                   multiplier=2 ** RHO_NUM_HALVING):
    f32 = jnp.float32
    B, N, _ = x.shape
    M = x_out.shape[1]

    # Host-side, data-dependent grid construction (mirrors the PyTorch forward).
    x_min = min(float(jnp.min(x)), float(jnp.min(x_out)), -2.0) - 0.1
    x_max = max(float(jnp.max(x)), float(jnp.max(x_out)), 2.0) + 0.1
    p_real = to_multiple(points_per_unit * (x_max - x_min), multiplier)

    p_pad = _round_up(p_real, 128)     # lane padding for the grid axis
    m8 = _round_up(M, 8)               # sublane-only padding for the target axis

    x = x.astype(f32)
    y = y.astype(f32)
    x_out = x_out.astype(f32)

    x_grid = jnp.linspace(x_min, x_max, p_real, dtype=f32)             # (P,)
    xg_pad = jnp.pad(x_grid, (0, p_pad - p_real))                      # (Ppad,)
    xg_row = xg_pad[None, :]                                           # (1, Ppad)
    xg_col = xg_pad[:, None]                                           # (Ppad, 1)
    xo_col = jnp.pad(x_out, ((0, 0), (0, m8 - M), (0, 0)))             # (B, m8, 1)
    x_col, x_row = x, jnp.transpose(x, (0, 2, 1))
    y_col, y_row = y, jnp.transpose(y, (0, 2, 1))

    (scal, enc_rows, g_wT, g_cols, rho_wf, rho_b,
     v2_cols) = _prep_params(params, N)

    kernel = functools.partial(_npprov_kernel, n_ctx=N, p_real=p_real,
                               p_pad=p_pad, m8=m8)

    def batch_spec(shape):
        return pl.BlockSpec(shape, lambda b, _s=shape: (b,) + (0,) * (len(_s) - 1))

    def const_spec(shape):
        return pl.BlockSpec(shape, lambda b, _s=shape: (0,) * len(_s))

    mean_o, sigma_o, loss_o = pl.pallas_call(
        kernel,
        out_shape=(
            jax.ShapeDtypeStruct((B, m8, 1), f32),
            jax.ShapeDtypeStruct((B, m8, 1), f32),
            jax.ShapeDtypeStruct((B, 1, 1), f32),
        ),
        grid=(B,),
        in_specs=[
            pl.BlockSpec(memory_space=pltpu.MemorySpace.SMEM),  # packed scalars
            batch_spec((1, N, 1)),                     # x as column
            batch_spec((1, 1, N)),                     # x as row
            batch_spec((1, N, 1)),                     # y as column
            batch_spec((1, 1, N)),                     # y as row
            const_spec((1, p_pad)),                    # x_grid as row (shared)
            const_spec((p_pad, 1)),                    # x_grid as column (shared)
            batch_spec((1, m8, 1)),                    # x_out as column
            const_spec((3, 1, ENC_DIM)),               # encoder rows (b, w0, w1)
            const_spec((ENC_DIM, ENC_DIM)),            # g weight (self block, T)
            const_spec((3, ENC_DIM, 1)),               # g bias/density/norm columns
            const_spec((RHO_OUT, RHO_K * RHO_IN)),     # rho taps, flattened (16,40)
            const_spec((RHO_OUT, 1)),                  # rho bias
            const_spec((2, RHO_OUT, 1)),               # variance-16 linear
        ],
        out_specs=(
            batch_spec((1, m8, 1)),
            batch_spec((1, m8, 1)),
            batch_spec((1, 1, 1)),
        ),
        compiler_params=pltpu.CompilerParams(
            dimension_semantics=("parallel",),
            # small footprint after chunking; safe on v5e/v6e (128 MiB) and
            # within v7x (64 MiB) headroom.
            vmem_limit_bytes=32 * 1024 * 1024),
    )(scal, x_col, x_row, y_col, y_row, xg_row, xg_col, xo_col,
      enc_rows, g_wT, g_cols, rho_wf, rho_b, v2_cols)

    mean = mean_o[:, :M, :]                            # (B, M, 1)
    sigma = sigma_o[:, :M, :]                          # (B, M, 1)
    loss = jnp.sum(loss_o) / float(B * N)              # MSELoss over (B, N, 1)
    return mean, sigma, loss


# ----------------------------- parameter init --------------------------------
def init_params(key, points_per_unit=POINTS_PER_UNIT):
    log_ls = float(np.log(2.0 / points_per_unit))
    keys = jax.random.split(key, 8)

    def lin(k, cin, cout):
        kw, kb = jax.random.split(k)
        return (0.2 * jax.random.normal(kw, (cin, cout), jnp.float32),
                0.05 * jax.random.normal(kb, (1, cout), jnp.float32))

    g_w, g_b = lin(keys[0], CDS_IN + ENC_DIM, RHO_IN)
    enc_w, enc_b = lin(keys[1], CDS_IN, ENC_DIM)
    dec_w, dec_b = lin(keys[2], ENC_DIM, 1)
    encoder = dict(
        g_w=g_w, g_b=g_b, enc_w=enc_w, enc_b=enc_b, dec_w=dec_w, dec_b=dec_b,
        sigma_cross=log_ls * jnp.ones((CDS_IN,), jnp.float32),
        sigma_self_for=log_ls * jnp.ones((CDS_IN,), jnp.float32),
        sigma_self_back=log_ls * jnp.ones((ENC_DIM,), jnp.float32))

    vw1, vb1 = lin(keys[3], 2, 1)
    sigma_x_encoder = dict(g_w=vw1, g_b=vb1,
                           sigma=log_ls * jnp.ones((1,), jnp.float32))
    vw2, vb2 = lin(keys[4], 2, 16)
    sigma_x_out_encoder = dict(g_w=vw2, g_b=vb2,
                               sigma=log_ls * jnp.ones((1,), jnp.float32))
    mw, mb = lin(keys[5], RHO_OUT, 1)
    mean_layer = dict(g_w=mw, g_b=mb,
                      sigma=log_ls * jnp.ones((RHO_OUT,), jnp.float32))
    sw, sb = lin(keys[6], RHO_OUT * 2, 1)
    sigma_layer = dict(g_w=sw, g_b=sb,
                       sigma=log_ls * jnp.ones((RHO_OUT * 2,), jnp.float32))
    krw, krb = jax.random.split(keys[7])
    rho = dict(w=0.2 * jax.random.normal(krw, (RHO_K, RHO_IN, RHO_OUT), jnp.float32),
               b=0.05 * jax.random.normal(krb, (1, RHO_OUT), jnp.float32))

    return dict(encoder=encoder, sigma_x_encoder=sigma_x_encoder,
                sigma_x_out_encoder=sigma_x_out_encoder,
                mean_layer=mean_layer, sigma_layer=sigma_layer, rho=rho)


# ----------------------------------- main -------------------------------------
if __name__ == "__main__":
    key = jax.random.PRNGKey(0)
    kx, ky, kt, kp = jax.random.split(key, 4)
    B, n_ctx, n_tgt = 2, 8, 10
    x = jax.random.uniform(kx, (B, n_ctx, 1), jnp.float32, -2.0, 2.0)
    y = jax.random.normal(ky, (B, n_ctx, 1), jnp.float32)
    x_out = jax.random.uniform(kt, (B, n_tgt, 1), jnp.float32, -2.0, 2.0)

    params = init_params(kp, POINTS_PER_UNIT)
    mean, sigma, loss = npprov_forward(params, x, y, x_out)
    jax.block_until_ready((mean, sigma, loss))

    assert mean.shape == (B, n_tgt, 1)
    assert sigma.shape == (B, n_tgt, 1)
    assert loss.shape == ()
    assert bool(jnp.all(jnp.isfinite(mean)))
    assert bool(jnp.all(jnp.isfinite(sigma)))
    assert bool(jnp.isfinite(loss))
    print("KERNEL_OK")
</pallas_src>

<mosaic_0001>
module attributes {stable_mosaic.version = 11 : i64} {
  func.func @_npprov_kernel(%arg0: i32, %arg1: memref<139xf32, #tpu.memory_space<smem>>, %arg2: memref<1x8x1xf32, #tpu.memory_space<vmem>>, %arg3: memref<1x1x8xf32, #tpu.memory_space<vmem>>, %arg4: memref<1x8x1xf32, #tpu.memory_space<vmem>>, %arg5: memref<1x1x8xf32, #tpu.memory_space<vmem>>, %arg6: memref<1x128xf32, #tpu.memory_space<vmem>>, %arg7: memref<128x1xf32, #tpu.memory_space<vmem>>, %arg8: memref<1x16x1xf32, #tpu.memory_space<vmem>>, %arg9: memref<3x1x8xf32, #tpu.memory_space<vmem>>, %arg10: memref<8x8xf32, #tpu.memory_space<vmem>>, %arg11: memref<3x8x1xf32, #tpu.memory_space<vmem>>, %arg12: memref<16x40xf32, #tpu.memory_space<vmem>>, %arg13: memref<16x1xf32, #tpu.memory_space<vmem>>, %arg14: memref<2x16x1xf32, #tpu.memory_space<vmem>>, %arg15: memref<1x16x1xf32, #tpu.memory_space<vmem>>, %arg16: memref<1x16x1xf32, #tpu.memory_space<vmem>>, %arg17: memref<1x1x1xf32, #tpu.memory_space<vmem>>) attributes {dimension_semantics = [#tpu.dimension_semantics<parallel>], iteration_bounds = array<i64: 2>, scalar_prefetch = 0 : i64, scratch_operands = 0 : i64, tpu.core_type = #tpu.core_type<tc>, window_params = [{transform_indices = @transform_0, window_bounds = array<i64: 139>}, {transform_indices = @transform_1, window_bounds = array<i64: 1, 8, 1>}, {transform_indices = @transform_2, window_bounds = array<i64: 1, 1, 8>}, {transform_indices = @transform_3, window_bounds = array<i64: 1, 8, 1>}, {transform_indices = @transform_4, window_bounds = array<i64: 1, 1, 8>}, {pipeline_mode = #tpu.pipeline_mode<synchronous>, transform_indices = @transform_5, window_bounds = array<i64: 1, 128>}, {pipeline_mode = #tpu.pipeline_mode<synchronous>, transform_indices = @transform_6, window_bounds = array<i64: 128, 1>}, {transform_indices = @transform_7, window_bounds = array<i64: 1, 16, 1>}, {pipeline_mode = #tpu.pipeline_mode<synchronous>, transform_indices = @transform_8, window_bounds = array<i64: 3, 1, 8>}, {pipeline_mode = #tpu.pipeline_mode<synchronous>, transform_indices = @transform_9, window_bounds = array<i64: 8, 8>}, {pipeline_mode = #tpu.pipeline_mode<synchronous>, transform_indices = @transform_10, window_bounds = array<i64: 3, 8, 1>}, {pipeline_mode = #tpu.pipeline_mode<synchronous>, transform_indices = @transform_11, window_bounds = array<i64: 16, 40>}, {pipeline_mode = #tpu.pipeline_mode<synchronous>, transform_indices = @transform_12, window_bounds = array<i64: 16, 1>}, {pipeline_mode = #tpu.pipeline_mode<synchronous>, transform_indices = @transform_13, window_bounds = array<i64: 2, 16, 1>}, {transform_indices = @transform_14, window_bounds = array<i64: 1, 16, 1>}, {transform_indices = @transform_15, window_bounds = array<i64: 1, 16, 1>}, {transform_indices = @transform_16, window_bounds = array<i64: 1, 1, 1>}]} {
    %c0 = arith.constant 0 : index
    %c0_0 = arith.constant 0 : index
    %c0_1 = arith.constant 0 : index
    %0 = vector.load %arg2[%c0, %c0_0, %c0_1] : memref<1x8x1xf32, #tpu.memory_space<vmem>>, vector<1x8x1xf32>
    %1 = vector.shape_cast %0 : vector<1x8x1xf32> to vector<8x1xf32>
    %c0_2 = arith.constant 0 : index
    %c0_3 = arith.constant 0 : index
    %c0_4 = arith.constant 0 : index
    %2 = vector.load %arg3[%c0_2, %c0_3, %c0_4] : memref<1x1x8xf32, #tpu.memory_space<vmem>>, vector<1x1x8xf32>
    %3 = vector.shape_cast %2 : vector<1x1x8xf32> to vector<1x8xf32>
    %c0_5 = arith.constant 0 : index
    %c0_6 = arith.constant 0 : index
    %c0_7 = arith.constant 0 : index
    %4 = vector.load %arg4[%c0_5, %c0_6, %c0_7] : memref<1x8x1xf32, #tpu.memory_space<vmem>>, vector<1x8x1xf32>
    %5 = vector.shape_cast %4 : vector<1x8x1xf32> to vector<8x1xf32>
    %c0_8 = arith.constant 0 : index
    %c0_9 = arith.constant 0 : index
    %c0_10 = arith.constant 0 : index
    %6 = vector.load %arg5[%c0_8, %c0_9, %c0_10] : memref<1x1x8xf32, #tpu.memory_space<vmem>>, vector<1x1x8xf32>
    %7 = vector.shape_cast %6 : vector<1x1x8xf32> to vector<1x8xf32>
    %c0_11 = arith.constant 0 : index
    %c0_12 = arith.constant 0 : index
    %8 = vector.load %arg6[%c0_11, %c0_12] : memref<1x128xf32, #tpu.memory_space<vmem>>, vector<1x128xf32>
    %c0_13 = arith.constant 0 : index
    %c0_14 = arith.constant 0 : index
    %c0_15 = arith.constant 0 : index
    %9 = vector.load %arg8[%c0_13, %c0_14, %c0_15] : memref<1x16x1xf32, #tpu.memory_space<vmem>>, vector<1x16x1xf32>
    %10 = vector.shape_cast %9 : vector<1x16x1xf32> to vector<16x1xf32>
    %11 = tpu.iota {dimensions = array<i32: 1>} : vector<1x128xi32>
    %c68_i32 = arith.constant 68 : i32
    %12 = vector.broadcast %c68_i32 : i32 to vector<1x128xi32>
    %13 = arith.cmpi slt, %11, %12 : vector<1x128xi32>
    %14 = arith.extui %13 : vector<1x128xi1> to vector<1x128xi32>
    %15 = arith.sitofp %14 : vector<1x128xi32> to vector<1x128xf32>
    %16 = vector.broadcast %1 : vector<8x1xf32> to vector<8x128xf32>
    %17 = vector.broadcast %8 : vector<1x128xf32> to vector<8x128xf32>
    %18 = arith.subf %16, %17 : vector<8x128xf32>
    %19 = arith.mulf %18, %18 : vector<8x128xf32>
    %cst = arith.constant 0.000000e+00 : f32
    %20 = vector.broadcast %cst : f32 to vector<8x128xf32>
    %21 = arith.subf %20, %19 : vector<8x128xf32>
    %c0_16 = arith.constant 0 : index
    %22 = memref.load %arg1[%c0_16] : memref<139xf32, #tpu.memory_space<smem>>
    %23 = vector.broadcast %22 : f32 to vector<8x128xf32>
    %24 = arith.mulf %21, %23 : vector<8x128xf32>
    %25 = math.exp %24 : vector<8x128xf32>
    %cst_17 = arith.constant 0.000000e+00 : f32
    %26 = vector.broadcast %cst_17 : f32 to vector<8x128xf32>
    %27 = arith.subf %26, %19 : vector<8x128xf32>
    %c1 = arith.constant 1 : index
    %28 = memref.load %arg1[%c1] : memref<139xf32, #tpu.memory_space<smem>>
    %29 = vector.broadcast %28 : f32 to vector<8x128xf32>
    %30 = arith.mulf %27, %29 : vector<8x128xf32>
    %31 = math.exp %30 : vector<8x128xf32>
    %cst_18 = arith.constant dense<0.000000e+00> : vector<128xf32>
    %32 = vector.multi_reduction <add>, %25, %cst_18 [0] : vector<8x128xf32> to vector<128xf32>
    %33 = vector.shape_cast %32 : vector<128xf32> to vector<1x128xf32>
    %cst_19 = arith.constant 9.99999993E-9 : f32
    %34 = vector.broadcast %cst_19 : f32 to vector<1x128xf32>
    %35 = arith.addf %33, %34 : vector<1x128xf32>
    %36 = tpu.reciprocal %35 {approx = true} : vector<1x128xf32> -> vector<1x128xf32>
    %37 = vector.broadcast %1 : vector<8x1xf32> to vector<8x8xf32>
    %38 = vector.broadcast %3 : vector<1x8xf32> to vector<8x8xf32>
    %39 = arith.subf %37, %38 : vector<8x8xf32>
    %40 = arith.mulf %39, %39 : vector<8x8xf32>
    %cst_20 = arith.constant 0.000000e+00 : f32
    %41 = vector.broadcast %cst_20 : f32 to vector<8x8xf32>
    %42 = arith.subf %41, %40 : vector<8x8xf32>
    %c2 = arith.constant 2 : index
    %43 = memref.load %arg1[%c2] : memref<139xf32, #tpu.memory_space<smem>>
    %44 = vector.broadcast %43 : f32 to vector<8x8xf32>
    %45 = arith.mulf %42, %44 : vector<8x8xf32>
    %46 = math.exp %45 : vector<8x8xf32>
    %cst_21 = arith.constant 0.000000e+00 : f32
    %47 = vector.broadcast %cst_21 : f32 to vector<8x8xf32>
    %48 = arith.subf %47, %40 : vector<8x8xf32>
    %c3 = arith.constant 3 : index
    %49 = memref.load %arg1[%c3] : memref<139xf32, #tpu.memory_space<smem>>
    %50 = vector.broadcast %49 : f32 to vector<8x8xf32>
    %51 = arith.mulf %48, %50 : vector<8x8xf32>
    %52 = math.exp %51 : vector<8x8xf32>
    %cst_22 = arith.constant dense<0.000000e+00> : vector<8xf32>
    %53 = vector.multi_reduction <add>, %46, %cst_22 [1] : vector<8x8xf32> to vector<8xf32>
    %54 = vector.shape_cast %53 : vector<8xf32> to vector<8x1xf32>
    %cst_23 = arith.constant dense<0.000000e+00> : vector<1xf32>
    %55 = vector.multi_reduction <add>, %54, %cst_23 [0] : vector<8x1xf32> to vector<1xf32>
    %56 = vector.shape_cast %55 : vector<1xf32> to vector<1x1xf32>
    %cst_24 = arith.constant 1.562500e-02 : f32
    %57 = vector.broadcast %cst_24 : f32 to vector<1x1xf32>
    %58 = arith.mulf %56, %57 : vector<1x1xf32>
    %cst_25 = arith.constant 0.000000e+00 : f32
    %59 = vector.broadcast %cst_25 : f32 to vector<8x128xf32>
    %60 = arith.subf %59, %19 : vector<8x128xf32>
    %c37 = arith.constant 37 : index
    %61 = memref.load %arg1[%c37] : memref<139xf32, #tpu.memory_space<smem>>
    %62 = vector.broadcast %61 : f32 to vector<8x128xf32>
    %63 = arith.mulf %60, %62 : vector<8x128xf32>
    %64 = math.exp %63 : vector<8x128xf32>
    %65 = vector.broadcast %15 : vector<1x128xf32> to vector<8x128xf32>
    %66 = arith.mulf %64, %65 : vector<8x128xf32>
    %cst_26 = arith.constant dense<0.000000e+00> : vector<8xf32>
    %67 = vector.multi_reduction <add>, %66, %cst_26 [1] : vector<8x128xf32> to vector<8xf32>
    %68 = vector.shape_cast %67 : vector<8xf32> to vector<8x1xf32>
    %cst_27 = arith.constant 0.0147058824 : f32
    %69 = vector.broadcast %cst_27 : f32 to vector<8x1xf32>
    %70 = arith.mulf %68, %69 : vector<8x1xf32>
    %c38 = arith.constant 38 : index
    %71 = memref.load %arg1[%c38] : memref<139xf32, #tpu.memory_space<smem>>
    %c39 = arith.constant 39 : index
    %72 = memref.load %arg1[%c39] : memref<139xf32, #tpu.memory_space<smem>>
    %73 = vector.broadcast %72 : f32 to vector<8x1xf32>
    %74 = arith.mulf %73, %70 : vector<8x1xf32>
    %75 = vector.broadcast %71 : f32 to vector<8x1xf32>
    %76 = arith.addf %75, %74 : vector<8x1xf32>
    %c0_28 = arith.constant 0 : index
    %c0_29 = arith.constant 0 : index
    %c0_30 = arith.constant 0 : index
    %77 = vector.load %arg9[%c0_28, %c0_29, %c0_30] : memref<3x1x8xf32, #tpu.memory_space<vmem>>, vector<1x1x8xf32>
    %78 = vector.shape_cast %77 : vector<1x1x8xf32> to vector<1x8xf32>
    %c1_31 = arith.constant 1 : index
    %c0_32 = arith.constant 0 : index
    %c0_33 = arith.constant 0 : index
    %79 = vector.load %arg9[%c1_31, %c0_32, %c0_33] : memref<3x1x8xf32, #tpu.memory_space<vmem>>, vector<1x1x8xf32>
    %80 = vector.shape_cast %79 : vector<1x1x8xf32> to vector<1x8xf32>
    %c2_34 = arith.constant 2 : index
    %c0_35 = arith.constant 0 : index
    %c0_36 = arith.constant 0 : index
    %81 = vector.load %arg9[%c2_34, %c0_35, %c0_36] : memref<3x1x8xf32, #tpu.memory_space<vmem>>, vector<1x1x8xf32>
    %82 = vector.shape_cast %81 : vector<1x1x8xf32> to vector<1x8xf32>
    %c0_37 = arith.constant 0 : index
    %c0_38 = arith.constant 0 : index
    %c0_39 = arith.constant 0 : index
    %83 = vector.load %arg11[%c0_37, %c0_38, %c0_39] : memref<3x8x1xf32, #tpu.memory_space<vmem>>, vector<1x8x1xf32>
    %84 = vector.shape_cast %83 : vector<1x8x1xf32> to vector<8x1xf32>
    %c1_40 = arith.constant 1 : index
    %c0_41 = arith.constant 0 : index
    %c0_42 = arith.constant 0 : index
    %85 = vector.load %arg11[%c1_40, %c0_41, %c0_42] : memref<3x8x1xf32, #tpu.memory_space<vmem>>, vector<1x8x1xf32>
    %86 = vector.shape_cast %85 : vector<1x8x1xf32> to vector<8x1xf32>
    %c2_43 = arith.constant 2 : index
    %c0_44 = arith.constant 0 : index
    %c0_45 = arith.constant 0 : index
    %87 = vector.load %arg11[%c2_43, %c0_44, %c0_45] : memref<3x8x1xf32, #tpu.memory_space<vmem>>, vector<1x8x1xf32>
    %88 = vector.shape_cast %87 : vector<1x8x1xf32> to vector<8x1xf32>
    %c0_46 = arith.constant 0 : index
    %c0_47 = arith.constant 0 : index
    %89 = vector.load %arg10[%c0_46, %c0_47] : memref<8x8xf32, #tpu.memory_space<vmem>>, vector<8x8xf32>
    %c0_48 = arith.constant 0 : index
    %c0_49 = arith.constant 0 : index
    %90 = vector.load %arg12[%c0_48, %c0_49] : memref<16x40xf32, #tpu.memory_space<vmem>>, vector<16x40xf32>
    %c0_50 = arith.constant 0 : index
    %c0_51 = arith.constant 0 : index
    %91 = vector.load %arg13[%c0_50, %c0_51] : memref<16x1xf32, #tpu.memory_space<vmem>>, vector<16x1xf32>
    %92 = vector.broadcast %5 : vector<8x1xf32> to vector<8x128xf32>
    %93 = arith.mulf %92, %31 : vector<8x128xf32>
    %cst_52 = arith.constant dense<0.000000e+00> : vector<128xf32>
    %94 = vector.multi_reduction <add>, %93, %cst_52 [0] : vector<8x128xf32> to vector<128xf32>
    %95 = vector.shape_cast %94 : vector<128xf32> to vector<1x128xf32>
    %96 = arith.mulf %95, %36 : vector<1x128xf32>
    %97 = vector.broadcast %5 : vector<8x1xf32> to vector<8x8xf32>
    %98 = arith.mulf %97, %52 : vector<8x8xf32>
    %cst_53 = arith.constant dense<0.000000e+00> : vector<8xf32>
    %99 = vector.multi_reduction <add>, %98, %cst_53 [1] : vector<8x8xf32> to vector<8xf32>
    %100 = vector.shape_cast %99 : vector<8xf32> to vector<8x1xf32>
    %cst_54 = arith.constant dense<0.000000e+00> : vector<1xf32>
    %101 = vector.multi_reduction <add>, %100, %cst_54 [0] : vector<8x1xf32> to vector<1xf32>
    %102 = vector.shape_cast %101 : vector<1xf32> to vector<1x1xf32>
    %cst_55 = arith.constant 1.562500e-02 : f32
    %103 = vector.broadcast %cst_55 : f32 to vector<1x1xf32>
    %104 = arith.mulf %102, %103 : vector<1x1xf32>
    %105 = vector.broadcast %58 : vector<1x1xf32> to vector<1x8xf32>
    %106 = arith.mulf %80, %105 : vector<1x8xf32>
    %107 = arith.addf %78, %106 : vector<1x8xf32>
    %108 = vector.broadcast %104 : vector<1x1xf32> to vector<1x8xf32>
    %109 = arith.mulf %82, %108 : vector<1x8xf32>
    %110 = arith.addf %107, %109 : vector<1x8xf32>
    %111 = vector.broadcast %110 : vector<1x8xf32> to vector<8x8xf32>
    %112 = arith.mulf %89, %111 : vector<8x8xf32>
    %cst_56 = arith.constant dense<0.000000e+00> : vector<8xf32>
    %113 = vector.multi_reduction <add>, %112, %cst_56 [1] : vector<8x8xf32> to vector<8xf32>
    %114 = vector.shape_cast %113 : vector<8xf32> to vector<8x1xf32>
    %115 = arith.addf %84, %114 : vector<8x1xf32>
    %116 = vector.broadcast %86 : vector<8x1xf32> to vector<8x128xf32>
    %117 = vector.broadcast %33 : vector<1x128xf32> to vector<8x128xf32>
    %118 = arith.mulf %116, %117 : vector<8x128xf32>
    %119 = vector.broadcast %115 : vector<8x1xf32> to vector<8x128xf32>
    %120 = arith.addf %119, %118 : vector<8x128xf32>
    %121 = vector.broadcast %88 : vector<8x1xf32> to vector<8x128xf32>
    %122 = vector.broadcast %96 : vector<1x128xf32> to vector<8x128xf32>
    %123 = arith.mulf %121, %122 : vector<8x128xf32>
    %124 = arith.addf %120, %123 : vector<8x128xf32>
    %cst_57 = arith.constant 0.000000e+00 : f32
    %125 = vector.broadcast %cst_57 : f32 to vector<8x128xf32>
    %126 = arith.subf %125, %124 : vector<8x128xf32>
    %127 = math.exp %126 : vector<8x128xf32>
    %cst_58 = arith.constant 1.000000e+00 : f32
    %128 = vector.broadcast %cst_58 : f32 to vector<8x128xf32>
    %129 = arith.addf %128, %127 : vector<8x128xf32>
    %130 = tpu.reciprocal %129 {approx = true} : vector<8x128xf32> -> vector<8x128xf32>
    %131 = vector.broadcast %15 : vector<1x128xf32> to vector<8x128xf32>
    %132 = arith.mulf %130, %131 : vector<8x128xf32>
    %c2_i32 = arith.constant 2 : i32
    %133 = tpu.dynamic_rotate %132 by %c2_i32 dim 1 : vector<8x128xf32>, i32 -> vector<8x128xf32>
    %c2_i32_59 = arith.constant 2 : i32
    %134 = vector.broadcast %c2_i32_59 : i32 to vector<1x128xi32>
    %135 = arith.cmpi sge, %11, %134 : vector<1x128xi32>
    %136 = arith.extui %135 : vector<1x128xi1> to vector<1x128xi32>
    %137 = arith.sitofp %136 : vector<1x128xi32> to vector<1x128xf32>
    %138 = vector.broadcast %137 : vector<1x128xf32> to vector<8x128xf32>
    %139 = arith.mulf %133, %138 : vector<8x128xf32>
    %c1_i32 = arith.constant 1 : i32
    %140 = tpu.dynamic_rotate %132 by %c1_i32 dim 1 : vector<8x128xf32>, i32 -> vector<8x128xf32>
    %c1_i32_60 = arith.constant 1 : i32
    %141 = vector.broadcast %c1_i32_60 : i32 to vector<1x128xi32>
    %142 = arith.cmpi sge, %11, %141 : vector<1x128xi32>
    %143 = arith.extui %142 : vector<1x128xi1> to vector<1x128xi32>
    %144 = arith.sitofp %143 : vector<1x128xi32> to vector<1x128xf32>
    %145 = vector.broadcast %144 : vector<1x128xf32> to vector<8x128xf32>
    %146 = arith.mulf %140, %145 : vector<8x128xf32>
    %c127_i32 = arith.constant 127 : i32
    %147 = tpu.dynamic_rotate %132 by %c127_i32 dim 1 : vector<8x128xf32>, i32 -> vector<8x128xf32>
    %c127_i32_61 = arith.constant 127 : i32
    %148 = vector.broadcast %c127_i32_61 : i32 to vector<1x128xi32>
    %149 = arith.cmpi slt, %11, %148 : vector<1x128xi32>
    %150 = arith.extui %149 : vector<1x128xi1> to vector<1x128xi32>
    %151 = arith.sitofp %150 : vector<1x128xi32> to vector<1x128xf32>
    %152 = vector.broadcast %151 : vector<1x128xf32> to vector<8x128xf32>
    %153 = arith.mulf %147, %152 : vector<8x128xf32>
    %c126_i32 = arith.constant 126 : i32
    %154 = tpu.dynamic_rotate %132 by %c126_i32 dim 1 : vector<8x128xf32>, i32 -> vector<8x128xf32>
    %c126_i32_62 = arith.constant 126 : i32
    %155 = vector.broadcast %c126_i32_62 : i32 to vector<1x128xi32>
    %156 = arith.cmpi slt, %11, %155 : vector<1x128xi32>
    %157 = arith.extui %156 : vector<1x128xi1> to vector<1x128xi32>
    %158 = arith.sitofp %157 : vector<1x128xi32> to vector<1x128xf32>
    %159 = vector.broadcast %158 : vector<1x128xf32> to vector<8x128xf32>
    %160 = arith.mulf %154, %159 : vector<8x128xf32>
    %161 = tpu.concatenate %139, %146, %132, %153, %160 in 0 : vector<8x128xf32>, vector<8x128xf32>, vector<8x128xf32>, vector<8x128xf32>, vector<8x128xf32> -> vector<40x128xf32>
    %cst_63 = arith.constant dense<0.000000e+00> : vector<16x128xf32>
    %162 = tpu.matmul %90, %161, %cst_63 {dimension_numbers = #tpu.dot_dimension_numbers<[1], [0], [0], [1], [0, 0, 1, 1], [], []>} : vector<16x40xf32>, vector<40x128xf32>, vector<16x128xf32> -> vector<16x128xf32>
    %163 = vector.broadcast %91 : vector<16x1xf32> to vector<16x128xf32>
    %164 = arith.addf %162, %163 : vector<16x128xf32>
    %cst_64 = arith.constant 0.000000e+00 : f32
    %165 = vector.broadcast %cst_64 : f32 to vector<16x128xf32>
    %166 = arith.maximumf %164, %165 : vector<16x128xf32>
    %167 = vector.broadcast %15 : vector<1x128xf32> to vector<16x128xf32>
    %168 = arith.mulf %166, %167 : vector<16x128xf32>
    %169 = vector.broadcast %76 : vector<8x1xf32> to vector<8x128xf32>
    %170 = arith.mulf %169, %31 : vector<8x128xf32>
    %cst_65 = arith.constant dense<0.000000e+00> : vector<128xf32>
    %171 = vector.multi_reduction <add>, %170, %cst_65 [0] : vector<8x128xf32> to vector<128xf32>
    %172 = vector.shape_cast %171 : vector<128xf32> to vector<1x128xf32>
    %173 = arith.mulf %172, %36 : vector<1x128xf32>
    %174 = vector.broadcast %76 : vector<8x1xf32> to vector<8x8xf32>
    %175 = arith.mulf %174, %52 : vector<8x8xf32>
    %cst_66 = arith.constant dense<0.000000e+00> : vector<8xf32>
    %176 = vector.multi_reduction <add>, %175, %cst_66 [1] : vector<8x8xf32> to vector<8xf32>
    %177 = vector.shape_cast %176 : vector<8xf32> to vector<8x1xf32>
    %cst_67 = arith.constant dense<0.000000e+00> : vector<1xf32>
    %178 = vector.multi_reduction <add>, %177, %cst_67 [0] : vector<8x1xf32> to vector<1xf32>
    %179 = vector.shape_cast %178 : vector<1xf32> to vector<1x1xf32>
    %cst_68 = arith.constant 1.562500e-02 : f32
    %180 = vector.broadcast %cst_68 : f32 to vector<1x1xf32>
    %181 = arith.mulf %179, %180 : vector<1x1xf32>
    %182 = vector.broadcast %58 : vector<1x1xf32> to vector<1x8xf32>
    %183 = arith.mulf %80, %182 : vector<1x8xf32>
    %184 = arith.addf %78, %183 : vector<1x8xf32>
    %185 = vector.broadcast %181 : vector<1x1xf32> to vector<1x8xf32>
    %186 = arith.mulf %82, %185 : vector<1x8xf32>
    %187 = arith.addf %184, %186 : vector<1x8xf32>
    %188 = vector.broadcast %187 : vector<1x8xf32> to vector<8x8xf32>
    %189 = arith.mulf %89, %188 : vector<8x8xf32>
    %cst_69 = arith.constant dense<0.000000e+00> : vector<8xf32>
    %190 = vector.multi_reduction <add>, %189, %cst_69 [1] : vector<8x8xf32> to vector<8xf32>
    %191 = vector.shape_cast %190 : vector<8xf32> to vector<8x1xf32>
    %192 = arith.addf %84, %191 : vector<8x1xf32>
    %193 = vector.broadcast %86 : vector<8x1xf32> to vector<8x128xf32>
    %194 = vector.broadcast %33 : vector<1x128xf32> to vector<8x128xf32>
    %195 = arith.mulf %193, %194 : vector<8x128xf32>
    %196 = vector.broadcast %192 : vector<8x1xf32> to vector<8x128xf32>
    %197 = arith.addf %196, %195 : vector<8x128xf32>
    %198 = vector.broadcast %88 : vector<8x1xf32> to vector<8x128xf32>
    %199 = vector.broadcast %173 : vector<1x128xf32> to vector<8x128xf32>
    %200 = arith.mulf %198, %199 : vector<8x128xf32>
    %201 = arith.addf %197, %200 : vector<8x128xf32>
    %202 = vector.broadcast %15 : vector<1x128xf32> to vector<8x128xf32>
    %203 = arith.mulf %201, %202 : vector<8x128xf32>
    %c2_i32_70 = arith.constant 2 : i32
    %204 = tpu.dynamic_rotate %203 by %c2_i32_70 dim 1 : vector<8x128xf32>, i32 -> vector<8x128xf32>
    %c2_i32_71 = arith.constant 2 : i32
    %205 = vector.broadcast %c2_i32_71 : i32 to vector<1x128xi32>
    %206 = arith.cmpi sge, %11, %205 : vector<1x128xi32>
    %207 = arith.extui %206 : vector<1x128xi1> to vector<1x128xi32>
    %208 = arith.sitofp %207 : vector<1x128xi32> to vector<1x128xf32>
    %209 = vector.broadcast %208 : vector<1x128xf32> to vector<8x128xf32>
    %210 = arith.mulf %204, %209 : vector<8x128xf32>
    %c1_i32_72 = arith.constant 1 : i32
    %211 = tpu.dynamic_rotate %203 by %c1_i32_72 dim 1 : vector<8x128xf32>, i32 -> vector<8x128xf32>
    %c1_i32_73 = arith.constant 1 : i32
    %212 = vector.broadcast %c1_i32_73 : i32 to vector<1x128xi32>
    %213 = arith.cmpi sge, %11, %212 : vector<1x128xi32>
    %214 = arith.extui %213 : vector<1x128xi1> to vector<1x128xi32>
    %215 = arith.sitofp %214 : vector<1x128xi32> to vector<1x128xf32>
    %216 = vector.broadcast %215 : vector<1x128xf32> to vector<8x128xf32>
    %217 = arith.mulf %211, %216 : vector<8x128xf32>
    %c127_i32_74 = arith.constant 127 : i32
    %218 = tpu.dynamic_rotate %203 by %c127_i32_74 dim 1 : vector<8x128xf32>, i32 -> vector<8x128xf32>
    %c127_i32_75 = arith.constant 127 : i32
    %219 = vector.broadcast %c127_i32_75 : i32 to vector<1x128xi32>
    %220 = arith.cmpi slt, %11, %219 : vector<1x128xi32>
    %221 = arith.extui %220 : vector<1x128xi1> to vector<1x128xi32>
    %222 = arith.sitofp %221 : vector<1x128xi32> to vector<1x128xf32>
    %223 = vector.broadcast %222 : vector<1x128xf32> to vector<8x128xf32>
    %224 = arith.mulf %218, %223 : vector<8x128xf32>
    %c126_i32_76 = arith.constant 126 : i32
    %225 = tpu.dynamic_rotate %203 by %c126_i32_76 dim 1 : vector<8x128xf32>, i32 -> vector<8x128xf32>
    %c126_i32_77 = arith.constant 126 : i32
    %226 = vector.broadcast %c126_i32_77 : i32 to vector<1x128xi32>
    %227 = arith.cmpi slt, %11, %226 : vector<1x128xi32>
    %228 = arith.extui %227 : vector<1x128xi1> to vector<1x128xi32>
    %229 = arith.sitofp %228 : vector<1x128xi32> to vector<1x128xf32>
    %230 = vector.broadcast %229 : vector<1x128xf32> to vector<8x128xf32>
    %231 = arith.mulf %225, %230 : vector<8x128xf32>
    %232 = tpu.concatenate %210, %217, %203, %224, %231 in 0 : vector<8x128xf32>, vector<8x128xf32>, vector<8x128xf32>, vector<8x128xf32>, vector<8x128xf32> -> vector<40x128xf32>
    %cst_78 = arith.constant dense<0.000000e+00> : vector<16x128xf32>
    %233 = tpu.matmul %90, %232, %cst_78 {dimension_numbers = #tpu.dot_dimension_numbers<[1], [0], [0], [1], [0, 0, 1, 1], [], []>} : vector<16x40xf32>, vector<40x128xf32>, vector<16x128xf32> -> vector<16x128xf32>
    %234 = vector.broadcast %91 : vector<16x1xf32> to vector<16x128xf32>
    %235 = arith.addf %233, %234 : vector<16x128xf32>
    %cst_79 = arith.constant 0.000000e+00 : f32
    %236 = vector.broadcast %cst_79 : f32 to vector<16x128xf32>
    %237 = arith.maximumf %235, %236 : vector<16x128xf32>
    %238 = vector.broadcast %15 : vector<1x128xf32> to vector<16x128xf32>
    %239 = arith.mulf %237, %238 : vector<16x128xf32>
    %cst_80 = arith.constant 0.000000e+00 : f32
    %240 = vector.broadcast %cst_80 : f32 to vector<1x128xf32>
    %c0_81 = arith.constant 0 : index
    %c0_82 = arith.constant 0 : index
    %241 = vector.load %arg7[%c0_81, %c0_82] : memref<128x1xf32, #tpu.memory_space<vmem>>, vector<128x1xf32>
    %242 = tpu.iota {dimensions = array<i32: 0>} : vector<128x1xi32>
    %c0_i32 = arith.constant 0 : i32
    %243 = vector.broadcast %c0_i32 : i32 to vector<128x1xi32>
    %244 = arith.addi %242, %243 : vector<128x1xi32>
    %c68_i32_83 = arith.constant 68 : i32
    %245 = vector.broadcast %c68_i32_83 : i32 to vector<128x1xi32>
    %246 = arith.cmpi slt, %244, %245 : vector<128x1xi32>
    %247 = arith.extui %246 : vector<128x1xi1> to vector<128x1xi32>
    %248 = arith.sitofp %247 : vector<128x1xi32> to vector<128x1xf32>
    %249 = vector.broadcast %241 : vector<128x1xf32> to vector<128x128xf32>
    %250 = vector.broadcast %8 : vector<1x128xf32> to vector<128x128xf32>
    %251 = arith.subf %249, %250 : vector<128x128xf32>
    %252 = arith.mulf %251, %251 : vector<128x128xf32>
    %cst_84 = arith.constant 0.000000e+00 : f32
    %253 = vector.broadcast %cst_84 : f32 to vector<128x128xf32>
    %254 = arith.subf %253, %252 : vector<128x128xf32>
    %c40 = arith.constant 40 : index
    %255 = memref.load %arg1[%c40] : memref<139xf32, #tpu.memory_space<smem>>
    %256 = vector.broadcast %255 : f32 to vector<128x128xf32>
    %257 = arith.mulf %254, %256 : vector<128x128xf32>
    %258 = math.exp %257 : vector<128x128xf32>
    %259 = vector.broadcast %248 : vector<128x1xf32> to vector<128x128xf32>
    %260 = arith.mulf %258, %259 : vector<128x128xf32>
    %cst_85 = arith.constant dense<0.000000e+00> : vector<128xf32>
    %261 = vector.multi_reduction <add>, %260, %cst_85 [0] : vector<128x128xf32> to vector<128xf32>
    %262 = vector.shape_cast %261 : vector<128xf32> to vector<1x128xf32>
    %263 = arith.addf %240, %262 : vector<1x128xf32>
    %cst_86 = arith.constant 0.0147058824 : f32
    %264 = vector.broadcast %cst_86 : f32 to vector<1x128xf32>
    %265 = arith.mulf %263, %264 : vector<1x128xf32>
    %c0_87 = arith.constant 0 : index
    %c0_88 = arith.constant 0 : index
    %c0_89 = arith.constant 0 : index
    %266 = vector.load %arg14[%c0_87, %c0_88, %c0_89] : memref<2x16x1xf32, #tpu.memory_space<vmem>>, vector<1x16x1xf32>
    %267 = vector.shape_cast %266 : vector<1x16x1xf32> to vector<16x1xf32>
    %c1_90 = arith.constant 1 : index
    %c0_91 = arith.constant 0 : index
    %c0_92 = arith.constant 0 : index
    %268 = vector.load %arg14[%c1_90, %c0_91, %c0_92] : memref<2x16x1xf32, #tpu.memory_space<vmem>>, vector<1x16x1xf32>
    %269 = vector.shape_cast %268 : vector<1x16x1xf32> to vector<16x1xf32>
    %270 = vector.broadcast %269 : vector<16x1xf32> to vector<16x128xf32>
    %271 = vector.broadcast %265 : vector<1x128xf32> to vector<16x128xf32>
    %272 = arith.mulf %270, %271 : vector<16x128xf32>
    %273 = vector.broadcast %267 : vector<16x1xf32> to vector<16x128xf32>
    %274 = arith.addf %273, %272 : vector<16x128xf32>
    %275 = vector.broadcast %15 : vector<1x128xf32> to vector<16x128xf32>
    %276 = arith.mulf %274, %275 : vector<16x128xf32>
    %277 = vector.broadcast %10 : vector<16x1xf32> to vector<16x128xf32>
    %278 = vector.broadcast %8 : vector<1x128xf32> to vector<16x128xf32>
    %279 = arith.subf %277, %278 : vector<16x128xf32>
    %280 = arith.mulf %279, %279 : vector<16x128xf32>
    %c41 = arith.constant 41 : index
    %281 = memref.load %arg1[%c41] : memref<139xf32, #tpu.memory_space<smem>>
    %cst_93 = arith.constant 0.000000e+00 : f32
    %282 = vector.broadcast %cst_93 : f32 to vector<16x1xf32>
    %cst_94 = arith.constant 0.000000e+00 : f32
    %283 = vector.broadcast %cst_94 : f32 to vector<16x128xf32>
    %284 = arith.subf %283, %280 : vector<16x128xf32>
    %c43 = arith.constant 43 : index
    %285 = memref.load %arg1[%c43] : memref<139xf32, #tpu.memory_space<smem>>
    %286 = vector.broadcast %285 : f32 to vector<16x128xf32>
    %287 = arith.mulf %284, %286 : vector<16x128xf32>
    %288 = math.exp %287 : vector<16x128xf32>
    %289 = vector.extract_strided_slice %168 {offsets = [0, 0], sizes = [1, 128], strides = [1, 1]} : vector<16x128xf32> to vector<1x128xf32>
    %290 = vector.broadcast %289 : vector<1x128xf32> to vector<16x128xf32>
    %291 = arith.mulf %290, %288 : vector<16x128xf32>
    %cst_95 = arith.constant dense<0.000000e+00> : vector<16xf32>
    %292 = vector.multi_reduction <add>, %291, %cst_95 [1] : vector<16x128xf32> to vector<16xf32>
    %293 = vector.shape_cast %292 : vector<16xf32> to vector<16x1xf32>
    %c59 = arith.constant 59 : index
    %294 = memref.load %arg1[%c59] : memref<139xf32, #tpu.memory_space<smem>>
    %295 = vector.broadcast %294 : f32 to vector<16x1xf32>
    %296 = arith.mulf %295, %293 : vector<16x1xf32>
    %297 = arith.addf %282, %296 : vector<16x1xf32>
    %cst_96 = arith.constant 0.000000e+00 : f32
    %298 = vector.broadcast %cst_96 : f32 to vector<16x128xf32>
    %299 = arith.subf %298, %280 : vector<16x128xf32>
    %c44 = arith.constant 44 : index
    %300 = memref.load %arg1[%c44] : memref<139xf32, #tpu.memory_space<smem>>
    %301 = vector.broadcast %300 : f32 to vector<16x128xf32>
    %302 = arith.mulf %299, %301 : vector<16x128xf32>
    %303 = math.exp %302 : vector<16x128xf32>
    %304 = vector.extract_strided_slice %168 {offsets = [1, 0], sizes = [1, 128], strides = [1, 1]} : vector<16x128xf32> to vector<1x128xf32>
    %305 = vector.broadcast %304 : vector<1x128xf32> to vector<16x128xf32>
    %306 = arith.mulf %305, %303 : vector<16x128xf32>
    %cst_97 = arith.constant dense<0.000000e+00> : vector<16xf32>
    %307 = vector.multi_reduction <add>, %306, %cst_97 [1] : vector<16x128xf32> to vector<16xf32>
    %308 = vector.shape_cast %307 : vector<16xf32> to vector<16x1xf32>
    %c60 = arith.constant 60 : index
    %309 = memref.load %arg1[%c60] : memref<139xf32, #tpu.memory_space<smem>>
    %310 = vector.broadcast %309 : f32 to vector<16x1xf32>
    %311 = arith.mulf %310, %308 : vector<16x1xf32>
    %312 = arith.addf %297, %311 : vector<16x1xf32>
    %cst_98 = arith.constant 0.000000e+00 : f32
    %313 = vector.broadcast %cst_98 : f32 to vector<16x128xf32>
    %314 = arith.subf %313, %280 : vector<16x128xf32>
    %c45 = arith.constant 45 : index
    %315 = memref.load %arg1[%c45] : memref<139xf32, #tpu.memory_space<smem>>
    %316 = vector.broadcast %315 : f32 to vector<16x128xf32>
    %317 = arith.mulf %314, %316 : vector<16x128xf32>
    %318 = math.exp %317 : vector<16x128xf32>
    %319 = vector.extract_strided_slice %168 {offsets = [2, 0], sizes = [1, 128], strides = [1, 1]} : vector<16x128xf32> to vector<1x128xf32>
    %320 = vector.broadcast %319 : vector<1x128xf32> to vector<16x128xf32>
    %321 = arith.mulf %320, %318 : vector<16x128xf32>
    %cst_99 = arith.constant dense<0.000000e+00> : vector<16xf32>
    %322 = vector.multi_reduction <add>, %321, %cst_99 [1] : vector<16x128xf32> to vector<16xf32>
    %323 = vector.shape_cast %322 : vector<16xf32> to vector<16x1xf32>
    %c61 = arith.constant 61 : index
    %324 = memref.load %arg1[%c61] : memref<139xf32, #tpu.memory_space<smem>>
    %325 = vector.broadcast %324 : f32 to vector<16x1xf32>
    %326 = arith.mulf %325, %323 : vector<16x1xf32>
    %327 = arith.addf %312, %326 : vector<16x1xf32>
    %cst_100 = arith.constant 0.000000e+00 : f32
    %328 = vector.broadcast %cst_100 : f32 to vector<16x128xf32>
    %329 = arith.subf %328, %280 : vector<16x128xf32>
    %c46 = arith.constant 46 : index
    %330 = memref.load %arg1[%c46] : memref<139xf32, #tpu.memory_space<smem>>
    %331 = vector.broadcast %330 : f32 to vector<16x128xf32>
    %332 = arith.mulf %329, %331 : vector<16x128xf32>
    %333 = math.exp %332 : vector<16x128xf32>
    %334 = vector.extract_strided_slice %168 {offsets = [3, 0], sizes = [1, 128], strides = [1, 1]} : vector<16x128xf32> to vector<1x128xf32>
    %335 = vector.broadcast %334 : vector<1x128xf32> to vector<16x128xf32>
    %336 = arith.mulf %335, %333 : vector<16x128xf32>
    %cst_101 = arith.constant dense<0.000000e+00> : vector<16xf32>
    %337 = vector.multi_reduction <add>, %336, %cst_101 [1] : vector<16x128xf32> to vector<16xf32>
    %338 = vector.shape_cast %337 : vector<16xf32> to vector<16x1xf32>
    %c62 = arith.constant 62 : index
    %339 = memref.load %arg1[%c62] : memref<139xf32, #tpu.memory_space<smem>>
    %340 = vector.broadcast %339 : f32 to vector<16x1xf32>
    %341 = arith.mulf %340, %338 : vector<16x1xf32>
    %342 = arith.addf %327, %341 : vector<16x1xf32>
    %cst_102 = arith.constant 0.000000e+00 : f32
    %343 = vector.broadcast %cst_102 : f32 to vector<16x128xf32>
    %344 = arith.subf %343, %280 : vector<16x128xf32>
    %c47 = arith.constant 47 : index
    %345 = memref.load %arg1[%c47] : memref<139xf32, #tpu.memory_space<smem>>
    %346 = vector.broadcast %345 : f32 to vector<16x128xf32>
    %347 = arith.mulf %344, %346 : vector<16x128xf32>
    %348 = math.exp %347 : vector<16x128xf32>
    %349 = vector.extract_strided_slice %168 {offsets = [4, 0], sizes = [1, 128], strides = [1, 1]} : vector<16x128xf32> to vector<1x128xf32>
    %350 = vector.broadcast %349 : vector<1x128xf32> to vector<16x128xf32>
    %351 = arith.mulf %350, %348 : vector<16x128xf32>
    %cst_103 = arith.constant dense<0.000000e+00> : vector<16xf32>
    %352 = vector.multi_reduction <add>, %351, %cst_103 [1] : vector<16x128xf32> to vector<16xf32>
    %353 = vector.shape_cast %352 : vector<16xf32> to vector<16x1xf32>
    %c63 = arith.constant 63 : index
    %354 = memref.load %arg1[%c63] : memref<139xf32, #tpu.memory_space<smem>>
    %355 = vector.broadcast %354 : f32 to vector<16x1xf32>
    %356 = arith.mulf %355, %353 : vector<16x1xf32>
    %357 = arith.addf %342, %356 : vector<16x1xf32>
    %cst_104 = arith.constant 0.000000e+00 : f32
    %358 = vector.broadcast %cst_104 : f32 to vector<16x128xf32>
    %359 = arith.subf %358, %280 : vector<16x128xf32>
    %c48 = arith.constant 48 : index
    %360 = memref.load %arg1[%c48] : memref<139xf32, #tpu.memory_space<smem>>
    %361 = vector.broadcast %360 : f32 to vector<16x128xf32>
    %362 = arith.mulf %359, %361 : vector<16x128xf32>
    %363 = math.exp %362 : vector<16x128xf32>
    %364 = vector.extract_strided_slice %168 {offsets = [5, 0], sizes = [1, 128], strides = [1, 1]} : vector<16x128xf32> to vector<1x128xf32>
    %365 = vector.broadcast %364 : vector<1x128xf32> to vector<16x128xf32>
    %366 = arith.mulf %365, %363 : vector<16x128xf32>
    %cst_105 = arith.constant dense<0.000000e+00> : vector<16xf32>
    %367 = vector.multi_reduction <add>, %366, %cst_105 [1] : vector<16x128xf32> to vector<16xf32>
    %368 = vector.shape_cast %367 : vector<16xf32> to vector<16x1xf32>
    %c64 = arith.constant 64 : index
    %369 = memref.load %arg1[%c64] : memref<139xf32, #tpu.memory_space<smem>>
    %370 = vector.broadcast %369 : f32 to vector<16x1xf32>
    %371 = arith.mulf %370, %368 : vector<16x1xf32>
    %372 = arith.addf %357, %371 : vector<16x1xf32>
    %cst_106 = arith.constant 0.000000e+00 : f32
    %373 = vector.broadcast %cst_106 : f32 to vector<16x128xf32>
    %374 = arith.subf %373, %280 : vector<16x128xf32>
    %c49 = arith.constant 49 : index
    %375 = memref.load %arg1[%c49] : memref<139xf32, #tpu.memory_space<smem>>
    %376 = vector.broadcast %375 : f32 to vector<16x128xf32>
    %377 = arith.mulf %374, %376 : vector<16x128xf32>
    %378 = math.exp %377 : vector<16x128xf32>
    %379 = vector.extract_strided_slice %168 {offsets = [6, 0], sizes = [1, 128], strides = [1, 1]} : vector<16x128xf32> to vector<1x128xf32>
    %380 = vector.broadcast %379 : vector<1x128xf32> to vector<16x128xf32>
    %381 = arith.mulf %380, %378 : vector<16x128xf32>
    %cst_107 = arith.constant dense<0.000000e+00> : vector<16xf32>
    %382 = vector.multi_reduction <add>, %381, %cst_107 [1] : vector<16x128xf32> to vector<16xf32>
    %383 = vector.shape_cast %382 : vector<16xf32> to vector<16x1xf32>
    %c65 = arith.constant 65 : index
    %384 = memref.load %arg1[%c65] : memref<139xf32, #tpu.memory_space<smem>>
    %385 = vector.broadcast %384 : f32 to vector<16x1xf32>
    %386 = arith.mulf %385, %383 : vector<16x1xf32>
    %387 = arith.addf %372, %386 : vector<16x1xf32>
    %cst_108 = arith.constant 0.000000e+00 : f32
    %388 = vector.broadcast %cst_108 : f32 to vector<16x128xf32>
    %389 = arith.subf %388, %280 : vector<16x128xf32>
    %c50 = arith.constant 50 : index
    %390 = memref.load %arg1[%c50] : memref<139xf32, #tpu.memory_space<smem>>
    %391 = vector.broadcast %390 : f32 to vector<16x128xf32>
    %392 = arith.mulf %389, %391 : vector<16x128xf32>
    %393 = math.exp %392 : vector<16x128xf32>
    %394 = vector.extract_strided_slice %168 {offsets = [7, 0], sizes = [1, 128], strides = [1, 1]} : vector<16x128xf32> to vector<1x128xf32>
    %395 = vector.broadcast %394 : vector<1x128xf32> to vector<16x128xf32>
    %396 = arith.mulf %395, %393 : vector<16x128xf32>
    %cst_109 = arith.constant dense<0.000000e+00> : vector<16xf32>
    %397 = vector.multi_reduction <add>, %396, %cst_109 [1] : vector<16x128xf32> to vector<16xf32>
    %398 = vector.shape_cast %397 : vector<16xf32> to vector<16x1xf32>
    %c66 = arith.constant 66 : index
    %399 = memref.load %arg1[%c66] : memref<139xf32, #tpu.memory_space<smem>>
    %400 = vector.broadcast %399 : f32 to vector<16x1xf32>
    %401 = arith.mulf %400, %398 : vector<16x1xf32>
    %402 = arith.addf %387, %401 : vector<16x1xf32>
    %cst_110 = arith.constant 0.000000e+00 : f32
    %403 = vector.broadcast %cst_110 : f32 to vector<16x128xf32>
    %404 = arith.subf %403, %280 : vector<16x128xf32>
    %c51 = arith.constant 51 : index
    %405 = memref.load %arg1[%c51] : memref<139xf32, #tpu.memory_space<smem>>
    %406 = vector.broadcast %405 : f32 to vector<16x128xf32>
    %407 = arith.mulf %404, %406 : vector<16x128xf32>
    %408 = math.exp %407 : vector<16x128xf32>
    %409 = vector.extract_strided_slice %168 {offsets = [8, 0], sizes = [1, 128], strides = [1, 1]} : vector<16x128xf32> to vector<1x128xf32>
    %410 = vector.broadcast %409 : vector<1x128xf32> to vector<16x128xf32>
    %411 = arith.mulf %410, %408 : vector<16x128xf32>
    %cst_111 = arith.constant dense<0.000000e+00> : vector<16xf32>
    %412 = vector.multi_reduction <add>, %411, %cst_111 [1] : vector<16x128xf32> to vector<16xf32>
    %413 = vector.shape_cast %412 : vector<16xf32> to vector<16x1xf32>
    %c67 = arith.constant 67 : index
    %414 = memref.load %arg1[%c67] : memref<139xf32, #tpu.memory_space<smem>>
    %415 = vector.broadcast %414 : f32 to vector<16x1xf32>
    %416 = arith.mulf %415, %413 : vector<16x1xf32>
    %417 = arith.addf %402, %416 : vector<16x1xf32>
    %cst_112 = arith.constant 0.000000e+00 : f32
    %418 = vector.broadcast %cst_112 : f32 to vector<16x128xf32>
    %419 = arith.subf %418, %280 : vector<16x128xf32>
    %c52 = arith.constant 52 : index
    %420 = memref.load %arg1[%c52] : memref<139xf32, #tpu.memory_space<smem>>
    %421 = vector.broadcast %420 : f32 to vector<16x128xf32>
    %422 = arith.mulf %419, %421 : vector<16x128xf32>
    %423 = math.exp %422 : vector<16x128xf32>
    %424 = vector.extract_strided_slice %168 {offsets = [9, 0], sizes = [1, 128], strides = [1, 1]} : vector<16x128xf32> to vector<1x128xf32>
    %425 = vector.broadcast %424 : vector<1x128xf32> to vector<16x128xf32>
    %426 = arith.mulf %425, %423 : vector<16x128xf32>
    %cst_113 = arith.constant dense<0.000000e+00> : vector<16xf32>
    %427 = vector.multi_reduction <add>, %426, %cst_113 [1] : vector<16x128xf32> to vector<16xf32>
    %428 = vector.shape_cast %427 : vector<16xf32> to vector<16x1xf32>
    %c68 = arith.constant 68 : index
    %429 = memref.load %arg1[%c68] : memref<139xf32, #tpu.memory_space<smem>>
    %430 = vector.broadcast %429 : f32 to vector<16x1xf32>
    %431 = arith.mulf %430, %428 : vector<16x1xf32>
    %432 = arith.addf %417, %431 : vector<16x1xf32>
    %cst_114 = arith.constant 0.000000e+00 : f32
    %433 = vector.broadcast %cst_114 : f32 to vector<16x128xf32>
    %434 = arith.subf %433, %280 : vector<16x128xf32>
    %c53 = arith.constant 53 : index
    %435 = memref.load %arg1[%c53] : memref<139xf32, #tpu.memory_space<smem>>
    %436 = vector.broadcast %435 : f32 to vector<16x128xf32>
    %437 = arith.mulf %434, %436 : vector<16x128xf32>
    %438 = math.exp %437 : vector<16x128xf32>
    %439 = vector.extract_strided_slice %168 {offsets = [10, 0], sizes = [1, 128], strides = [1, 1]} : vector<16x128xf32> to vector<1x128xf32>
    %440 = vector.broadcast %439 : vector<1x128xf32> to vector<16x128xf32>
    %441 = arith.mulf %440, %438 : vector<16x128xf32>
    %cst_115 = arith.constant dense<0.000000e+00> : vector<16xf32>
    %442 = vector.multi_reduction <add>, %441, %cst_115 [1] : vector<16x128xf32> to vector<16xf32>
    %443 = vector.shape_cast %442 : vector<16xf32> to vector<16x1xf32>
    %c69 = arith.constant 69 : index
    %444 = memref.load %arg1[%c69] : memref<139xf32, #tpu.memory_space<smem>>
    %445 = vector.broadcast %444 : f32 to vector<16x1xf32>
    %446 = arith.mulf %445, %443 : vector<16x1xf32>
    %447 = arith.addf %432, %446 : vector<16x1xf32>
    %cst_116 = arith.constant 0.000000e+00 : f32
    %448 = vector.broadcast %cst_116 : f32 to vector<16x128xf32>
    %449 = arith.subf %448, %280 : vector<16x128xf32>
    %c54 = arith.constant 54 : index
    %450 = memref.load %arg1[%c54] : memref<139xf32, #tpu.memory_space<smem>>
    %451 = vector.broadcast %450 : f32 to vector<16x128xf32>
    %452 = arith.mulf %449, %451 : vector<16x128xf32>
    %453 = math.exp %452 : vector<16x128xf32>
    %454 = vector.extract_strided_slice %168 {offsets = [11, 0], sizes = [1, 128], strides = [1, 1]} : vector<16x128xf32> to vector<1x128xf32>
    %455 = vector.broadcast %454 : vector<1x128xf32> to vector<16x128xf32>
    %456 = arith.mulf %455, %453 : vector<16x128xf32>
    %cst_117 = arith.constant dense<0.000000e+00> : vector<16xf32>
    %457 = vector.multi_reduction <add>, %456, %cst_117 [1] : vector<16x128xf32> to vector<16xf32>
    %458 = vector.shape_cast %457 : vector<16xf32> to vector<16x1xf32>
    %c70 = arith.constant 70 : index
    %459 = memref.load %arg1[%c70] : memref<139xf32, #tpu.memory_space<smem>>
    %460 = vector.broadcast %459 : f32 to vector<16x1xf32>
    %461 = arith.mulf %460, %458 : vector<16x1xf32>
    %462 = arith.addf %447, %461 : vector<16x1xf32>
    %cst_118 = arith.constant 0.000000e+00 : f32
    %463 = vector.broadcast %cst_118 : f32 to vector<16x128xf32>
    %464 = arith.subf %463, %280 : vector<16x128xf32>
    %c55 = arith.constant 55 : index
    %465 = memref.load %arg1[%c55] : memref<139xf32, #tpu.memory_space<smem>>
    %466 = vector.broadcast %465 : f32 to vector<16x128xf32>
    %467 = arith.mulf %464, %466 : vector<16x128xf32>
    %468 = math.exp %467 : vector<16x128xf32>
    %469 = vector.extract_strided_slice %168 {offsets = [12, 0], sizes = [1, 128], strides = [1, 1]} : vector<16x128xf32> to vector<1x128xf32>
    %470 = vector.broadcast %469 : vector<1x128xf32> to vector<16x128xf32>
    %471 = arith.mulf %470, %468 : vector<16x128xf32>
    %cst_119 = arith.constant dense<0.000000e+00> : vector<16xf32>
    %472 = vector.multi_reduction <add>, %471, %cst_119 [1] : vector<16x128xf32> to vector<16xf32>
    %473 = vector.shape_cast %472 : vector<16xf32> to vector<16x1xf32>
    %c71 = arith.constant 71 : index
    %474 = memref.load %arg1[%c71] : memref<139xf32, #tpu.memory_space<smem>>
    %475 = vector.broadcast %474 : f32 to vector<16x1xf32>
    %476 = arith.mulf %475, %473 : vector<16x1xf32>
    %477 = arith.addf %462, %476 : vector<16x1xf32>
    %cst_120 = arith.constant 0.000000e+00 : f32
    %478 = vector.broadcast %cst_120 : f32 to vector<16x128xf32>
    %479 = arith.subf %478, %280 : vector<16x128xf32>
    %c56 = arith.constant 56 : index
    %480 = memref.load %arg1[%c56] : memref<139xf32, #tpu.memory_space<smem>>
    %481 = vector.broadcast %480 : f32 to vector<16x128xf32>
    %482 = arith.mulf %479, %481 : vector<16x128xf32>
    %483 = math.exp %482 : vector<16x128xf32>
    %484 = vector.extract_strided_slice %168 {offsets = [13, 0], sizes = [1, 128], strides = [1, 1]} : vector<16x128xf32> to vector<1x128xf32>
    %485 = vector.broadcast %484 : vector<1x128xf32> to vector<16x128xf32>
    %486 = arith.mulf %485, %483 : vector<16x128xf32>
    %cst_121 = arith.constant dense<0.000000e+00> : vector<16xf32>
    %487 = vector.multi_reduction <add>, %486, %cst_121 [1] : vector<16x128xf32> to vector<16xf32>
    %488 = vector.shape_cast %487 : vector<16xf32> to vector<16x1xf32>
    %c72 = arith.constant 72 : index
    %489 = memref.load %arg1[%c72] : memref<139xf32, #tpu.memory_space<smem>>
    %490 = vector.broadcast %489 : f32 to vector<16x1xf32>
    %491 = arith.mulf %490, %488 : vector<16x1xf32>
    %492 = arith.addf %477, %491 : vector<16x1xf32>
    %cst_122 = arith.constant 0.000000e+00 : f32
    %493 = vector.broadcast %cst_122 : f32 to vector<16x128xf32>
    %494 = arith.subf %493, %280 : vector<16x128xf32>
    %c57 = arith.constant 57 : index
    %495 = memref.load %arg1[%c57] : memref<139xf32, #tpu.memory_space<smem>>
    %496 = vector.broadcast %495 : f32 to vector<16x128xf32>
    %497 = arith.mulf %494, %496 : vector<16x128xf32>
    %498 = math.exp %497 : vector<16x128xf32>
    %499 = vector.extract_strided_slice %168 {offsets = [14, 0], sizes = [1, 128], strides = [1, 1]} : vector<16x128xf32> to vector<1x128xf32>
    %500 = vector.broadcast %499 : vector<1x128xf32> to vector<16x128xf32>
    %501 = arith.mulf %500, %498 : vector<16x128xf32>
    %cst_123 = arith.constant dense<0.000000e+00> : vector<16xf32>
    %502 = vector.multi_reduction <add>, %501, %cst_123 [1] : vector<16x128xf32> to vector<16xf32>
    %503 = vector.shape_cast %502 : vector<16xf32> to vector<16x1xf32>
    %c73 = arith.constant 73 : index
    %504 = memref.load %arg1[%c73] : memref<139xf32, #tpu.memory_space<smem>>
    %505 = vector.broadcast %504 : f32 to vector<16x1xf32>
    %506 = arith.mulf %505, %503 : vector<16x1xf32>
    %507 = arith.addf %492, %506 : vector<16x1xf32>
    %cst_124 = arith.constant 0.000000e+00 : f32
    %508 = vector.broadcast %cst_124 : f32 to vector<16x128xf32>
    %509 = arith.subf %508, %280 : vector<16x128xf32>
    %c58 = arith.constant 58 : index
    %510 = memref.load %arg1[%c58] : memref<139xf32, #tpu.memory_space<smem>>
    %511 = vector.broadcast %510 : f32 to vector<16x128xf32>
    %512 = arith.mulf %509, %511 : vector<16x128xf32>
    %513 = math.exp %512 : vector<16x128xf32>
    %514 = vector.extract_strided_slice %168 {offsets = [15, 0], sizes = [1, 128], strides = [1, 1]} : vector<16x128xf32> to vector<1x128xf32>
    %515 = vector.broadcast %514 : vector<1x128xf32> to vector<16x128xf32>
    %516 = arith.mulf %515, %513 : vector<16x128xf32>
    %cst_125 = arith.constant dense<0.000000e+00> : vector<16xf32>
    %517 = vector.multi_reduction <add>, %516, %cst_125 [1] : vector<16x128xf32> to vector<16xf32>
    %518 = vector.shape_cast %517 : vector<16xf32> to vector<16x1xf32>
    %c74 = arith.constant 74 : index
    %519 = memref.load %arg1[%c74] : memref<139xf32, #tpu.memory_space<smem>>
    %520 = vector.broadcast %519 : f32 to vector<16x1xf32>
    %521 = arith.mulf %520, %518 : vector<16x1xf32>
    %522 = arith.addf %507, %521 : vector<16x1xf32>
    %523 = vector.broadcast %281 : f32 to vector<16x1xf32>
    %524 = arith.addf %523, %522 : vector<16x1xf32>
    %c42 = arith.constant 42 : index
    %525 = memref.load %arg1[%c42] : memref<139xf32, #tpu.memory_space<smem>>
    %cst_126 = arith.constant 0.000000e+00 : f32
    %526 = vector.broadcast %cst_126 : f32 to vector<16x1xf32>
    %cst_127 = arith.constant 0.000000e+00 : f32
    %527 = vector.broadcast %cst_127 : f32 to vector<16x128xf32>
    %528 = arith.subf %527, %280 : vector<16x128xf32>
    %c75 = arith.constant 75 : index
    %529 = memref.load %arg1[%c75] : memref<139xf32, #tpu.memory_space<smem>>
    %530 = vector.broadcast %529 : f32 to vector<16x128xf32>
    %531 = arith.mulf %528, %530 : vector<16x128xf32>
    %532 = math.exp %531 : vector<16x128xf32>
    %533 = vector.extract_strided_slice %239 {offsets = [0, 0], sizes = [1, 128], strides = [1, 1]} : vector<16x128xf32> to vector<1x128xf32>
    %534 = vector.broadcast %533 : vector<1x128xf32> to vector<16x128xf32>
    %535 = arith.mulf %534, %532 : vector<16x128xf32>
    %cst_128 = arith.constant dense<0.000000e+00> : vector<16xf32>
    %536 = vector.multi_reduction <add>, %535, %cst_128 [1] : vector<16x128xf32> to vector<16xf32>
    %537 = vector.shape_cast %536 : vector<16xf32> to vector<16x1xf32>
    %c107 = arith.constant 107 : index
    %538 = memref.load %arg1[%c107] : memref<139xf32, #tpu.memory_space<smem>>
    %539 = vector.broadcast %538 : f32 to vector<16x1xf32>
    %540 = arith.mulf %539, %537 : vector<16x1xf32>
    %541 = arith.addf %526, %540 : vector<16x1xf32>
    %cst_129 = arith.constant 0.000000e+00 : f32
    %542 = vector.broadcast %cst_129 : f32 to vector<16x128xf32>
    %543 = arith.subf %542, %280 : vector<16x128xf32>
    %c76 = arith.constant 76 : index
    %544 = memref.load %arg1[%c76] : memref<139xf32, #tpu.memory_space<smem>>
    %545 = vector.broadcast %544 : f32 to vector<16x128xf32>
    %546 = arith.mulf %543, %545 : vector<16x128xf32>
    %547 = math.exp %546 : vector<16x128xf32>
    %548 = vector.extract_strided_slice %239 {offsets = [1, 0], sizes = [1, 128], strides = [1, 1]} : vector<16x128xf32> to vector<1x128xf32>
    %549 = vector.broadcast %548 : vector<1x128xf32> to vector<16x128xf32>
    %550 = arith.mulf %549, %547 : vector<16x128xf32>
    %cst_130 = arith.constant dense<0.000000e+00> : vector<16xf32>
    %551 = vector.multi_reduction <add>, %550, %cst_130 [1] : vector<16x128xf32> to vector<16xf32>
    %552 = vector.shape_cast %551 : vector<16xf32> to vector<16x1xf32>
    %c108 = arith.constant 108 : index
    %553 = memref.load %arg1[%c108] : memref<139xf32, #tpu.memory_space<smem>>
    %554 = vector.broadcast %553 : f32 to vector<16x1xf32>
    %555 = arith.mulf %554, %552 : vector<16x1xf32>
    %556 = arith.addf %541, %555 : vector<16x1xf32>
    %cst_131 = arith.constant 0.000000e+00 : f32
    %557 = vector.broadcast %cst_131 : f32 to vector<16x128xf32>
    %558 = arith.subf %557, %280 : vector<16x128xf32>
    %c77 = arith.constant 77 : index
    %559 = memref.load %arg1[%c77] : memref<139xf32, #tpu.memory_space<smem>>
    %560 = vector.broadcast %559 : f32 to vector<16x128xf32>
    %561 = arith.mulf %558, %560 : vector<16x128xf32>
    %562 = math.exp %561 : vector<16x128xf32>
    %563 = vector.extract_strided_slice %239 {offsets = [2, 0], sizes = [1, 128], strides = [1, 1]} : vector<16x128xf32> to vector<1x128xf32>
    %564 = vector.broadcast %563 : vector<1x128xf32> to vector<16x128xf32>
    %565 = arith.mulf %564, %562 : vector<16x128xf32>
    %cst_132 = arith.constant dense<0.000000e+00> : vector<16xf32>
    %566 = vector.multi_reduction <add>, %565, %cst_132 [1] : vector<16x128xf32> to vector<16xf32>
    %567 = vector.shape_cast %566 : vector<16xf32> to vector<16x1xf32>
    %c109 = arith.constant 109 : index
    %568 = memref.load %arg1[%c109] : memref<139xf32, #tpu.memory_space<smem>>
    %569 = vector.broadcast %568 : f32 to vector<16x1xf32>
    %570 = arith.mulf %569, %567 : vector<16x1xf32>
    %571 = arith.addf %556, %570 : vector<16x1xf32>
    %cst_133 = arith.constant 0.000000e+00 : f32
    %572 = vector.broadcast %cst_133 : f32 to vector<16x128xf32>
    %573 = arith.subf %572, %280 : vector<16x128xf32>
    %c78 = arith.constant 78 : index
    %574 = memref.load %arg1[%c78] : memref<139xf32, #tpu.memory_space<smem>>
    %575 = vector.broadcast %574 : f32 to vector<16x128xf32>
    %576 = arith.mulf %573, %575 : vector<16x128xf32>
    %577 = math.exp %576 : vector<16x128xf32>
    %578 = vector.extract_strided_slice %239 {offsets = [3, 0], sizes = [1, 128], strides = [1, 1]} : vector<16x128xf32> to vector<1x128xf32>
    %579 = vector.broadcast %578 : vector<1x128xf32> to vector<16x128xf32>
    %580 = arith.mulf %579, %577 : vector<16x128xf32>
    %cst_134 = arith.constant dense<0.000000e+00> : vector<16xf32>
    %581 = vector.multi_reduction <add>, %580, %cst_134 [1] : vector<16x128xf32> to vector<16xf32>
    %582 = vector.shape_cast %581 : vector<16xf32> to vector<16x1xf32>
    %c110 = arith.constant 110 : index
    %583 = memref.load %arg1[%c110] : memref<139xf32, #tpu.memory_space<smem>>
    %584 = vector.broadcast %583 : f32 to vector<16x1xf32>
    %585 = arith.mulf %584, %582 : vector<16x1xf32>
    %586 = arith.addf %571, %585 : vector<16x1xf32>
    %cst_135 = arith.constant 0.000000e+00 : f32
    %587 = vector.broadcast %cst_135 : f32 to vector<16x128xf32>
    %588 = arith.subf %587, %280 : vector<16x128xf32>
    %c79 = arith.constant 79 : index
    %589 = memref.load %arg1[%c79] : memref<139xf32, #tpu.memory_space<smem>>
    %590 = vector.broadcast %589 : f32 to vector<16x128xf32>
    %591 = arith.mulf %588, %590 : vector<16x128xf32>
    %592 = math.exp %591 : vector<16x128xf32>
    %593 = vector.extract_strided_slice %239 {offsets = [4, 0], sizes = [1, 128], strides = [1, 1]} : vector<16x128xf32> to vector<1x128xf32>
    %594 = vector.broadcast %593 : vector<1x128xf32> to vector<16x128xf32>
    %595 = arith.mulf %594, %592 : vector<16x128xf32>
    %cst_136 = arith.constant dense<0.000000e+00> : vector<16xf32>
    %596 = vector.multi_reduction <add>, %595, %cst_136 [1] : vector<16x128xf32> to vector<16xf32>
    %597 = vector.shape_cast %596 : vector<16xf32> to vector<16x1xf32>
    %c111 = arith.constant 111 : index
    %598 = memref.load %arg1[%c111] : memref<139xf32, #tpu.memory_space<smem>>
    %599 = vector.broadcast %598 : f32 to vector<16x1xf32>
    %600 = arith.mulf %599, %597 : vector<16x1xf32>
    %601 = arith.addf %586, %600 : vector<16x1xf32>
    %cst_137 = arith.constant 0.000000e+00 : f32
    %602 = vector.broadcast %cst_137 : f32 to vector<16x128xf32>
    %603 = arith.subf %602, %280 : vector<16x128xf32>
    %c80 = arith.constant 80 : index
    %604 = memref.load %arg1[%c80] : memref<139xf32, #tpu.memory_space<smem>>
    %605 = vector.broadcast %604 : f32 to vector<16x128xf32>
    %606 = arith.mulf %603, %605 : vector<16x128xf32>
    %607 = math.exp %606 : vector<16x128xf32>
    %608 = vector.extract_strided_slice %239 {offsets = [5, 0], sizes = [1, 128], strides = [1, 1]} : vector<16x128xf32> to vector<1x128xf32>
    %609 = vector.broadcast %608 : vector<1x128xf32> to vector<16x128xf32>
    %610 = arith.mulf %609, %607 : vector<16x128xf32>
    %cst_138 = arith.constant dense<0.000000e+00> : vector<16xf32>
    %611 = vector.multi_reduction <add>, %610, %cst_138 [1] : vector<16x128xf32> to vector<16xf32>
    %612 = vector.shape_cast %611 : vector<16xf32> to vector<16x1xf32>
    %c112 = arith.constant 112 : index
    %613 = memref.load %arg1[%c112] : memref<139xf32, #tpu.memory_space<smem>>
    %614 = vector.broadcast %613 : f32 to vector<16x1xf32>
    %615 = arith.mulf %614, %612 : vector<16x1xf32>
    %616 = arith.addf %601, %615 : vector<16x1xf32>
    %cst_139 = arith.constant 0.000000e+00 : f32
    %617 = vector.broadcast %cst_139 : f32 to vector<16x128xf32>
    %618 = arith.subf %617, %280 : vector<16x128xf32>
    %c81 = arith.constant 81 : index
    %619 = memref.load %arg1[%c81] : memref<139xf32, #tpu.memory_space<smem>>
    %620 = vector.broadcast %619 : f32 to vector<16x128xf32>
    %621 = arith.mulf %618, %620 : vector<16x128xf32>
    %622 = math.exp %621 : vector<16x128xf32>
    %623 = vector.extract_strided_slice %239 {offsets = [6, 0], sizes = [1, 128], strides = [1, 1]} : vector<16x128xf32> to vector<1x128xf32>
    %624 = vector.broadcast %623 : vector<1x128xf32> to vector<16x128xf32>
    %625 = arith.mulf %624, %622 : vector<16x128xf32>
    %cst_140 = arith.constant dense<0.000000e+00> : vector<16xf32>
    %626 = vector.multi_reduction <add>, %625, %cst_140 [1] : vector<16x128xf32> to vector<16xf32>
    %627 = vector.shape_cast %626 : vector<16xf32> to vector<16x1xf32>
    %c113 = arith.constant 113 : index
    %628 = memref.load %arg1[%c113] : memref<139xf32, #tpu.memory_space<smem>>
    %629 = vector.broadcast %628 : f32 to vector<16x1xf32>
    %630 = arith.mulf %629, %627 : vector<16x1xf32>
    %631 = arith.addf %616, %630 : vector<16x1xf32>
    %cst_141 = arith.constant 0.000000e+00 : f32
    %632 = vector.broadcast %cst_141 : f32 to vector<16x128xf32>
    %633 = arith.subf %632, %280 : vector<16x128xf32>
    %c82 = arith.constant 82 : index
    %634 = memref.load %arg1[%c82] : memref<139xf32, #tpu.memory_space<smem>>
    %635 = vector.broadcast %634 : f32 to vector<16x128xf32>
    %636 = arith.mulf %633, %635 : vector<16x128xf32>
    %637 = math.exp %636 : vector<16x128xf32>
    %638 = vector.extract_strided_slice %239 {offsets = [7, 0], sizes = [1, 128], strides = [1, 1]} : vector<16x128xf32> to vector<1x128xf32>
    %639 = vector.broadcast %638 : vector<1x128xf32> to vector<16x128xf32>
    %640 = arith.mulf %639, %637 : vector<16x128xf32>
    %cst_142 = arith.constant dense<0.000000e+00> : vector<16xf32>
    %641 = vector.multi_reduction <add>, %640, %cst_142 [1] : vector<16x128xf32> to vector<16xf32>
    %642 = vector.shape_cast %641 : vector<16xf32> to vector<16x1xf32>
    %c114 = arith.constant 114 : index
    %643 = memref.load %arg1[%c114] : memref<139xf32, #tpu.memory_space<smem>>
    %644 = vector.broadcast %643 : f32 to vector<16x1xf32>
    %645 = arith.mulf %644, %642 : vector<16x1xf32>
    %646 = arith.addf %631, %645 : vector<16x1xf32>
    %cst_143 = arith.constant 0.000000e+00 : f32
    %647 = vector.broadcast %cst_143 : f32 to vector<16x128xf32>
    %648 = arith.subf %647, %280 : vector<16x128xf32>
    %c83 = arith.constant 83 : index
    %649 = memref.load %arg1[%c83] : memref<139xf32, #tpu.memory_space<smem>>
    %650 = vector.broadcast %649 : f32 to vector<16x128xf32>
    %651 = arith.mulf %648, %650 : vector<16x128xf32>
    %652 = math.exp %651 : vector<16x128xf32>
    %653 = vector.extract_strided_slice %239 {offsets = [8, 0], sizes = [1, 128], strides = [1, 1]} : vector<16x128xf32> to vector<1x128xf32>
    %654 = vector.broadcast %653 : vector<1x128xf32> to vector<16x128xf32>
    %655 = arith.mulf %654, %652 : vector<16x128xf32>
    %cst_144 = arith.constant dense<0.000000e+00> : vector<16xf32>
    %656 = vector.multi_reduction <add>, %655, %cst_144 [1] : vector<16x128xf32> to vector<16xf32>
    %657 = vector.shape_cast %656 : vector<16xf32> to vector<16x1xf32>
    %c115 = arith.constant 115 : index
    %658 = memref.load %arg1[%c115] : memref<139xf32, #tpu.memory_space<smem>>
    %659 = vector.broadcast %658 : f32 to vector<16x1xf32>
    %660 = arith.mulf %659, %657 : vector<16x1xf32>
    %661 = arith.addf %646, %660 : vector<16x1xf32>
    %cst_145 = arith.constant 0.000000e+00 : f32
    %662 = vector.broadcast %cst_145 : f32 to vector<16x128xf32>
    %663 = arith.subf %662, %280 : vector<16x128xf32>
    %c84 = arith.constant 84 : index
    %664 = memref.load %arg1[%c84] : memref<139xf32, #tpu.memory_space<smem>>
    %665 = vector.broadcast %664 : f32 to vector<16x128xf32>
    %666 = arith.mulf %663, %665 : vector<16x128xf32>
    %667 = math.exp %666 : vector<16x128xf32>
    %668 = vector.extract_strided_slice %239 {offsets = [9, 0], sizes = [1, 128], strides = [1, 1]} : vector<16x128xf32> to vector<1x128xf32>
    %669 = vector.broadcast %668 : vector<1x128xf32> to vector<16x128xf32>
    %670 = arith.mulf %669, %667 : vector<16x128xf32>
    %cst_146 = arith.constant dense<0.000000e+00> : vector<16xf32>
    %671 = vector.multi_reduction <add>, %670, %cst_146 [1] : vector<16x128xf32> to vector<16xf32>
    %672 = vector.shape_cast %671 : vector<16xf32> to vector<16x1xf32>
    %c116 = arith.constant 116 : index
    %673 = memref.load %arg1[%c116] : memref<139xf32, #tpu.memory_space<smem>>
    %674 = vector.broadcast %673 : f32 to vector<16x1xf32>
    %675 = arith.mulf %674, %672 : vector<16x1xf32>
    %676 = arith.addf %661, %675 : vector<16x1xf32>
    %cst_147 = arith.constant 0.000000e+00 : f32
    %677 = vector.broadcast %cst_147 : f32 to vector<16x128xf32>
    %678 = arith.subf %677, %280 : vector<16x128xf32>
    %c85 = arith.constant 85 : index
    %679 = memref.load %arg1[%c85] : memref<139xf32, #tpu.memory_space<smem>>
    %680 = vector.broadcast %679 : f32 to vector<16x128xf32>
    %681 = arith.mulf %678, %680 : vector<16x128xf32>
    %682 = math.exp %681 : vector<16x128xf32>
    %683 = vector.extract_strided_slice %239 {offsets = [10, 0], sizes = [1, 128], strides = [1, 1]} : vector<16x128xf32> to vector<1x128xf32>
    %684 = vector.broadcast %683 : vector<1x128xf32> to vector<16x128xf32>
    %685 = arith.mulf %684, %682 : vector<16x128xf32>
    %cst_148 = arith.constant dense<0.000000e+00> : vector<16xf32>
    %686 = vector.multi_reduction <add>, %685, %cst_148 [1] : vector<16x128xf32> to vector<16xf32>
    %687 = vector.shape_cast %686 : vector<16xf32> to vector<16x1xf32>
    %c117 = arith.constant 117 : index
    %688 = memref.load %arg1[%c117] : memref<139xf32, #tpu.memory_space<smem>>
    %689 = vector.broadcast %688 : f32 to vector<16x1xf32>
    %690 = arith.mulf %689, %687 : vector<16x1xf32>
    %691 = arith.addf %676, %690 : vector<16x1xf32>
    %cst_149 = arith.constant 0.000000e+00 : f32
    %692 = vector.broadcast %cst_149 : f32 to vector<16x128xf32>
    %693 = arith.subf %692, %280 : vector<16x128xf32>
    %c86 = arith.constant 86 : index
    %694 = memref.load %arg1[%c86] : memref<139xf32, #tpu.memory_space<smem>>
    %695 = vector.broadcast %694 : f32 to vector<16x128xf32>
    %696 = arith.mulf %693, %695 : vector<16x128xf32>
    %697 = math.exp %696 : vector<16x128xf32>
    %698 = vector.extract_strided_slice %239 {offsets = [11, 0], sizes = [1, 128], strides = [1, 1]} : vector<16x128xf32> to vector<1x128xf32>
    %699 = vector.broadcast %698 : vector<1x128xf32> to vector<16x128xf32>
    %700 = arith.mulf %699, %697 : vector<16x128xf32>
    %cst_150 = arith.constant dense<0.000000e+00> : vector<16xf32>
    %701 = vector.multi_reduction <add>, %700, %cst_150 [1] : vector<16x128xf32> to vector<16xf32>
    %702 = vector.shape_cast %701 : vector<16xf32> to vector<16x1xf32>
    %c118 = arith.constant 118 : index
    %703 = memref.load %arg1[%c118] : memref<139xf32, #tpu.memory_space<smem>>
    %704 = vector.broadcast %703 : f32 to vector<16x1xf32>
    %705 = arith.mulf %704, %702 : vector<16x1xf32>
    %706 = arith.addf %691, %705 : vector<16x1xf32>
    %cst_151 = arith.constant 0.000000e+00 : f32
    %707 = vector.broadcast %cst_151 : f32 to vector<16x128xf32>
    %708 = arith.subf %707, %280 : vector<16x128xf32>
    %c87 = arith.constant 87 : index
    %709 = memref.load %arg1[%c87] : memref<139xf32, #tpu.memory_space<smem>>
    %710 = vector.broadcast %709 : f32 to vector<16x128xf32>
    %711 = arith.mulf %708, %710 : vector<16x128xf32>
    %712 = math.exp %711 : vector<16x128xf32>
    %713 = vector.extract_strided_slice %239 {offsets = [12, 0], sizes = [1, 128], strides = [1, 1]} : vector<16x128xf32> to vector<1x128xf32>
    %714 = vector.broadcast %713 : vector<1x128xf32> to vector<16x128xf32>
    %715 = arith.mulf %714, %712 : vector<16x128xf32>
    %cst_152 = arith.constant dense<0.000000e+00> : vector<16xf32>
    %716 = vector.multi_reduction <add>, %715, %cst_152 [1] : vector<16x128xf32> to vector<16xf32>
    %717 = vector.shape_cast %716 : vector<16xf32> to vector<16x1xf32>
    %c119 = arith.constant 119 : index
    %718 = memref.load %arg1[%c119] : memref<139xf32, #tpu.memory_space<smem>>
    %719 = vector.broadcast %718 : f32 to vector<16x1xf32>
    %720 = arith.mulf %719, %717 : vector<16x1xf32>
    %721 = arith.addf %706, %720 : vector<16x1xf32>
    %cst_153 = arith.constant 0.000000e+00 : f32
    %722 = vector.broadcast %cst_153 : f32 to vector<16x128xf32>
    %723 = arith.subf %722, %280 : vector<16x128xf32>
    %c88 = arith.constant 88 : index
    %724 = memref.load %arg1[%c88] : memref<139xf32, #tpu.memory_space<smem>>
    %725 = vector.broadcast %724 : f32 to vector<16x128xf32>
    %726 = arith.mulf %723, %725 : vector<16x128xf32>
    %727 = math.exp %726 : vector<16x128xf32>
    %728 = vector.extract_strided_slice %239 {offsets = [13, 0], sizes = [1, 128], strides = [1, 1]} : vector<16x128xf32> to vector<1x128xf32>
    %729 = vector.broadcast %728 : vector<1x128xf32> to vector<16x128xf32>
    %730 = arith.mulf %729, %727 : vector<16x128xf32>
    %cst_154 = arith.constant dense<0.000000e+00> : vector<16xf32>
    %731 = vector.multi_reduction <add>, %730, %cst_154 [1] : vector<16x128xf32> to vector<16xf32>
    %732 = vector.shape_cast %731 : vector<16xf32> to vector<16x1xf32>
    %c120 = arith.constant 120 : index
    %733 = memref.load %arg1[%c120] : memref<139xf32, #tpu.memory_space<smem>>
    %734 = vector.broadcast %733 : f32 to vector<16x1xf32>
    %735 = arith.mulf %734, %732 : vector<16x1xf32>
    %736 = arith.addf %721, %735 : vector<16x1xf32>
    %cst_155 = arith.constant 0.000000e+00 : f32
    %737 = vector.broadcast %cst_155 : f32 to vector<16x128xf32>
    %738 = arith.subf %737, %280 : vector<16x128xf32>
    %c89 = arith.constant 89 : index
    %739 = memref.load %arg1[%c89] : memref<139xf32, #tpu.memory_space<smem>>
    %740 = vector.broadcast %739 : f32 to vector<16x128xf32>
    %741 = arith.mulf %738, %740 : vector<16x128xf32>
    %742 = math.exp %741 : vector<16x128xf32>
    %743 = vector.extract_strided_slice %239 {offsets = [14, 0], sizes = [1, 128], strides = [1, 1]} : vector<16x128xf32> to vector<1x128xf32>
    %744 = vector.broadcast %743 : vector<1x128xf32> to vector<16x128xf32>
    %745 = arith.mulf %744, %742 : vector<16x128xf32>
    %cst_156 = arith.constant dense<0.000000e+00> : vector<16xf32>
    %746 = vector.multi_reduction <add>, %745, %cst_156 [1] : vector<16x128xf32> to vector<16xf32>
    %747 = vector.shape_cast %746 : vector<16xf32> to vector<16x1xf32>
    %c121 = arith.constant 121 : index
    %748 = memref.load %arg1[%c121] : memref<139xf32, #tpu.memory_space<smem>>
    %749 = vector.broadcast %748 : f32 to vector<16x1xf32>
    %750 = arith.mulf %749, %747 : vector<16x1xf32>
    %751 = arith.addf %736, %750 : vector<16x1xf32>
    %cst_157 = arith.constant 0.000000e+00 : f32
    %752 = vector.broadcast %cst_157 : f32 to vector<16x128xf32>
    %753 = arith.subf %752, %280 : vector<16x128xf32>
    %c90 = arith.constant 90 : index
    %754 = memref.load %arg1[%c90] : memref<139xf32, #tpu.memory_space<smem>>
    %755 = vector.broadcast %754 : f32 to vector<16x128xf32>
    %756 = arith.mulf %753, %755 : vector<16x128xf32>
    %757 = math.exp %756 : vector<16x128xf32>
    %758 = vector.extract_strided_slice %239 {offsets = [15, 0], sizes = [1, 128], strides = [1, 1]} : vector<16x128xf32> to vector<1x128xf32>
    %759 = vector.broadcast %758 : vector<1x128xf32> to vector<16x128xf32>
    %760 = arith.mulf %759, %757 : vector<16x128xf32>
    %cst_158 = arith.constant dense<0.000000e+00> : vector<16xf32>
    %761 = vector.multi_reduction <add>, %760, %cst_158 [1] : vector<16x128xf32> to vector<16xf32>
    %762 = vector.shape_cast %761 : vector<16xf32> to vector<16x1xf32>
    %c122 = arith.constant 122 : index
    %763 = memref.load %arg1[%c122] : memref<139xf32, #tpu.memory_space<smem>>
    %764 = vector.broadcast %763 : f32 to vector<16x1xf32>
    %765 = arith.mulf %764, %762 : vector<16x1xf32>
    %766 = arith.addf %751, %765 : vector<16x1xf32>
    %767 = vector.broadcast %525 : f32 to vector<16x1xf32>
    %768 = arith.addf %767, %766 : vector<16x1xf32>
    %cst_159 = arith.constant 0.000000e+00 : f32
    %769 = vector.broadcast %cst_159 : f32 to vector<16x1xf32>
    %cst_160 = arith.constant 0.000000e+00 : f32
    %770 = vector.broadcast %cst_160 : f32 to vector<16x128xf32>
    %771 = arith.subf %770, %280 : vector<16x128xf32>
    %c91 = arith.constant 91 : index
    %772 = memref.load %arg1[%c91] : memref<139xf32, #tpu.memory_space<smem>>
    %773 = vector.broadcast %772 : f32 to vector<16x128xf32>
    %774 = arith.mulf %771, %773 : vector<16x128xf32>
    %775 = math.exp %774 : vector<16x128xf32>
    %776 = vector.extract_strided_slice %276 {offsets = [0, 0], sizes = [1, 128], strides = [1, 1]} : vector<16x128xf32> to vector<1x128xf32>
    %777 = vector.broadcast %776 : vector<1x128xf32> to vector<16x128xf32>
    %778 = arith.mulf %777, %775 : vector<16x128xf32>
    %cst_161 = arith.constant dense<0.000000e+00> : vector<16xf32>
    %779 = vector.multi_reduction <add>, %778, %cst_161 [1] : vector<16x128xf32> to vector<16xf32>
    %780 = vector.shape_cast %779 : vector<16xf32> to vector<16x1xf32>
    %c123 = arith.constant 123 : index
    %781 = memref.load %arg1[%c123] : memref<139xf32, #tpu.memory_space<smem>>
    %782 = vector.broadcast %781 : f32 to vector<16x1xf32>
    %783 = arith.mulf %782, %780 : vector<16x1xf32>
    %784 = arith.addf %769, %783 : vector<16x1xf32>
    %cst_162 = arith.constant 0.000000e+00 : f32
    %785 = vector.broadcast %cst_162 : f32 to vector<16x128xf32>
    %786 = arith.subf %785, %280 : vector<16x128xf32>
    %c92 = arith.constant 92 : index
    %787 = memref.load %arg1[%c92] : memref<139xf32, #tpu.memory_space<smem>>
    %788 = vector.broadcast %787 : f32 to vector<16x128xf32>
    %789 = arith.mulf %786, %788 : vector<16x128xf32>
    %790 = math.exp %789 : vector<16x128xf32>
    %791 = vector.extract_strided_slice %276 {offsets = [1, 0], sizes = [1, 128], strides = [1, 1]} : vector<16x128xf32> to vector<1x128xf32>
    %792 = vector.broadcast %791 : vector<1x128xf32> to vector<16x128xf32>
    %793 = arith.mulf %792, %790 : vector<16x128xf32>
    %cst_163 = arith.constant dense<0.000000e+00> : vector<16xf32>
    %794 = vector.multi_reduction <add>, %793, %cst_163 [1] : vector<16x128xf32> to vector<16xf32>
    %795 = vector.shape_cast %794 : vector<16xf32> to vector<16x1xf32>
    %c124 = arith.constant 124 : index
    %796 = memref.load %arg1[%c124] : memref<139xf32, #tpu.memory_space<smem>>
    %797 = vector.broadcast %796 : f32 to vector<16x1xf32>
    %798 = arith.mulf %797, %795 : vector<16x1xf32>
    %799 = arith.addf %784, %798 : vector<16x1xf32>
    %cst_164 = arith.constant 0.000000e+00 : f32
    %800 = vector.broadcast %cst_164 : f32 to vector<16x128xf32>
    %801 = arith.subf %800, %280 : vector<16x128xf32>
    %c93 = arith.constant 93 : index
    %802 = memref.load %arg1[%c93] : memref<139xf32, #tpu.memory_space<smem>>
    %803 = vector.broadcast %802 : f32 to vector<16x128xf32>
    %804 = arith.mulf %801, %803 : vector<16x128xf32>
    %805 = math.exp %804 : vector<16x128xf32>
    %806 = vector.extract_strided_slice %276 {offsets = [2, 0], sizes = [1, 128], strides = [1, 1]} : vector<16x128xf32> to vector<1x128xf32>
    %807 = vector.broadcast %806 : vector<1x128xf32> to vector<16x128xf32>
    %808 = arith.mulf %807, %805 : vector<16x128xf32>
    %cst_165 = arith.constant dense<0.000000e+00> : vector<16xf32>
    %809 = vector.multi_reduction <add>, %808, %cst_165 [1] : vector<16x128xf32> to vector<16xf32>
    %810 = vector.shape_cast %809 : vector<16xf32> to vector<16x1xf32>
    %c125 = arith.constant 125 : index
    %811 = memref.load %arg1[%c125] : memref<139xf32, #tpu.memory_space<smem>>
    %812 = vector.broadcast %811 : f32 to vector<16x1xf32>
    %813 = arith.mulf %812, %810 : vector<16x1xf32>
    %814 = arith.addf %799, %813 : vector<16x1xf32>
    %cst_166 = arith.constant 0.000000e+00 : f32
    %815 = vector.broadcast %cst_166 : f32 to vector<16x128xf32>
    %816 = arith.subf %815, %280 : vector<16x128xf32>
    %c94 = arith.constant 94 : index
    %817 = memref.load %arg1[%c94] : memref<139xf32, #tpu.memory_space<smem>>
    %818 = vector.broadcast %817 : f32 to vector<16x128xf32>
    %819 = arith.mulf %816, %818 : vector<16x128xf32>
    %820 = math.exp %819 : vector<16x128xf32>
    %821 = vector.extract_strided_slice %276 {offsets = [3, 0], sizes = [1, 128], strides = [1, 1]} : vector<16x128xf32> to vector<1x128xf32>
    %822 = vector.broadcast %821 : vector<1x128xf32> to vector<16x128xf32>
    %823 = arith.mulf %822, %820 : vector<16x128xf32>
    %cst_167 = arith.constant dense<0.000000e+00> : vector<16xf32>
    %824 = vector.multi_reduction <add>, %823, %cst_167 [1] : vector<16x128xf32> to vector<16xf32>
    %825 = vector.shape_cast %824 : vector<16xf32> to vector<16x1xf32>
    %c126 = arith.constant 126 : index
    %826 = memref.load %arg1[%c126] : memref<139xf32, #tpu.memory_space<smem>>
    %827 = vector.broadcast %826 : f32 to vector<16x1xf32>
    %828 = arith.mulf %827, %825 : vector<16x1xf32>
    %829 = arith.addf %814, %828 : vector<16x1xf32>
    %cst_168 = arith.constant 0.000000e+00 : f32
    %830 = vector.broadcast %cst_168 : f32 to vector<16x128xf32>
    %831 = arith.subf %830, %280 : vector<16x128xf32>
    %c95 = arith.constant 95 : index
    %832 = memref.load %arg1[%c95] : memref<139xf32, #tpu.memory_space<smem>>
    %833 = vector.broadcast %832 : f32 to vector<16x128xf32>
    %834 = arith.mulf %831, %833 : vector<16x128xf32>
    %835 = math.exp %834 : vector<16x128xf32>
    %836 = vector.extract_strided_slice %276 {offsets = [4, 0], sizes = [1, 128], strides = [1, 1]} : vector<16x128xf32> to vector<1x128xf32>
    %837 = vector.broadcast %836 : vector<1x128xf32> to vector<16x128xf32>
    %838 = arith.mulf %837, %835 : vector<16x128xf32>
    %cst_169 = arith.constant dense<0.000000e+00> : vector<16xf32>
    %839 = vector.multi_reduction <add>, %838, %cst_169 [1] : vector<16x128xf32> to vector<16xf32>
    %840 = vector.shape_cast %839 : vector<16xf32> to vector<16x1xf32>
    %c127 = arith.constant 127 : index
    %841 = memref.load %arg1[%c127] : memref<139xf32, #tpu.memory_space<smem>>
    %842 = vector.broadcast %841 : f32 to vector<16x1xf32>
    %843 = arith.mulf %842, %840 : vector<16x1xf32>
    %844 = arith.addf %829, %843 : vector<16x1xf32>
    %cst_170 = arith.constant 0.000000e+00 : f32
    %845 = vector.broadcast %cst_170 : f32 to vector<16x128xf32>
    %846 = arith.subf %845, %280 : vector<16x128xf32>
    %c96 = arith.constant 96 : index
    %847 = memref.load %arg1[%c96] : memref<139xf32, #tpu.memory_space<smem>>
    %848 = vector.broadcast %847 : f32 to vector<16x128xf32>
    %849 = arith.mulf %846, %848 : vector<16x128xf32>
    %850 = math.exp %849 : vector<16x128xf32>
    %851 = vector.extract_strided_slice %276 {offsets = [5, 0], sizes = [1, 128], strides = [1, 1]} : vector<16x128xf32> to vector<1x128xf32>
    %852 = vector.broadcast %851 : vector<1x128xf32> to vector<16x128xf32>
    %853 = arith.mulf %852, %850 : vector<16x128xf32>
    %cst_171 = arith.constant dense<0.000000e+00> : vector<16xf32>
    %854 = vector.multi_reduction <add>, %853, %cst_171 [1] : vector<16x128xf32> to vector<16xf32>
    %855 = vector.shape_cast %854 : vector<16xf32> to vector<16x1xf32>
    %c128 = arith.constant 128 : index
    %856 = memref.load %arg1[%c128] : memref<139xf32, #tpu.memory_space<smem>>
    %857 = vector.broadcast %856 : f32 to vector<16x1xf32>
    %858 = arith.mulf %857, %855 : vector<16x1xf32>
    %859 = arith.addf %844, %858 : vector<16x1xf32>
    %cst_172 = arith.constant 0.000000e+00 : f32
    %860 = vector.broadcast %cst_172 : f32 to vector<16x128xf32>
    %861 = arith.subf %860, %280 : vector<16x128xf32>
    %c97 = arith.constant 97 : index
    %862 = memref.load %arg1[%c97] : memref<139xf32, #tpu.memory_space<smem>>
    %863 = vector.broadcast %862 : f32 to vector<16x128xf32>
    %864 = arith.mulf %861, %863 : vector<16x128xf32>
    %865 = math.exp %864 : vector<16x128xf32>
    %866 = vector.extract_strided_slice %276 {offsets = [6, 0], sizes = [1, 128], strides = [1, 1]} : vector<16x128xf32> to vector<1x128xf32>
    %867 = vector.broadcast %866 : vector<1x128xf32> to vector<16x128xf32>
    %868 = arith.mulf %867, %865 : vector<16x128xf32>
    %cst_173 = arith.constant dense<0.000000e+00> : vector<16xf32>
    %869 = vector.multi_reduction <add>, %868, %cst_173 [1] : vector<16x128xf32> to vector<16xf32>
    %870 = vector.shape_cast %869 : vector<16xf32> to vector<16x1xf32>
    %c129 = arith.constant 129 : index
    %871 = memref.load %arg1[%c129] : memref<139xf32, #tpu.memory_space<smem>>
    %872 = vector.broadcast %871 : f32 to vector<16x1xf32>
    %873 = arith.mulf %872, %870 : vector<16x1xf32>
    %874 = arith.addf %859, %873 : vector<16x1xf32>
    %cst_174 = arith.constant 0.000000e+00 : f32
    %875 = vector.broadcast %cst_174 : f32 to vector<16x128xf32>
    %876 = arith.subf %875, %280 : vector<16x128xf32>
    %c98 = arith.constant 98 : index
    %877 = memref.load %arg1[%c98] : memref<139xf32, #tpu.memory_space<smem>>
    %878 = vector.broadcast %877 : f32 to vector<16x128xf32>
    %879 = arith.mulf %876, %878 : vector<16x128xf32>
    %880 = math.exp %879 : vector<16x128xf32>
    %881 = vector.extract_strided_slice %276 {offsets = [7, 0], sizes = [1, 128], strides = [1, 1]} : vector<16x128xf32> to vector<1x128xf32>
    %882 = vector.broadcast %881 : vector<1x128xf32> to vector<16x128xf32>
    %883 = arith.mulf %882, %880 : vector<16x128xf32>
    %cst_175 = arith.constant dense<0.000000e+00> : vector<16xf32>
    %884 = vector.multi_reduction <add>, %883, %cst_175 [1] : vector<16x128xf32> to vector<16xf32>
    %885 = vector.shape_cast %884 : vector<16xf32> to vector<16x1xf32>
    %c130 = arith.constant 130 : index
    %886 = memref.load %arg1[%c130] : memref<139xf32, #tpu.memory_space<smem>>
    %887 = vector.broadcast %886 : f32 to vector<16x1xf32>
    %888 = arith.mulf %887, %885 : vector<16x1xf32>
    %889 = arith.addf %874, %888 : vector<16x1xf32>
    %cst_176 = arith.constant 0.000000e+00 : f32
    %890 = vector.broadcast %cst_176 : f32 to vector<16x128xf32>
    %891 = arith.subf %890, %280 : vector<16x128xf32>
    %c99 = arith.constant 99 : index
    %892 = memref.load %arg1[%c99] : memref<139xf32, #tpu.memory_space<smem>>
    %893 = vector.broadcast %892 : f32 to vector<16x128xf32>
    %894 = arith.mulf %891, %893 : vector<16x128xf32>
    %895 = math.exp %894 : vector<16x128xf32>
    %896 = vector.extract_strided_slice %276 {offsets = [8, 0], sizes = [1, 128], strides = [1, 1]} : vector<16x128xf32> to vector<1x128xf32>
    %897 = vector.broadcast %896 : vector<1x128xf32> to vector<16x128xf32>
    %898 = arith.mulf %897, %895 : vector<16x128xf32>
    %cst_177 = arith.constant dense<0.000000e+00> : vector<16xf32>
    %899 = vector.multi_reduction <add>, %898, %cst_177 [1] : vector<16x128xf32> to vector<16xf32>
    %900 = vector.shape_cast %899 : vector<16xf32> to vector<16x1xf32>
    %c131 = arith.constant 131 : index
    %901 = memref.load %arg1[%c131] : memref<139xf32, #tpu.memory_space<smem>>
    %902 = vector.broadcast %901 : f32 to vector<16x1xf32>
    %903 = arith.mulf %902, %900 : vector<16x1xf32>
    %904 = arith.addf %889, %903 : vector<16x1xf32>
    %cst_178 = arith.constant 0.000000e+00 : f32
    %905 = vector.broadcast %cst_178 : f32 to vector<16x128xf32>
    %906 = arith.subf %905, %280 : vector<16x128xf32>
    %c100 = arith.constant 100 : index
    %907 = memref.load %arg1[%c100] : memref<139xf32, #tpu.memory_space<smem>>
    %908 = vector.broadcast %907 : f32 to vector<16x128xf32>
    %909 = arith.mulf %906, %908 : vector<16x128xf32>
    %910 = math.exp %909 : vector<16x128xf32>
    %911 = vector.extract_strided_slice %276 {offsets = [9, 0], sizes = [1, 128], strides = [1, 1]} : vector<16x128xf32> to vector<1x128xf32>
    %912 = vector.broadcast %911 : vector<1x128xf32> to vector<16x128xf32>
    %913 = arith.mulf %912, %910 : vector<16x128xf32>
    %cst_179 = arith.constant dense<0.000000e+00> : vector<16xf32>
    %914 = vector.multi_reduction <add>, %913, %cst_179 [1] : vector<16x128xf32> to vector<16xf32>
    %915 = vector.shape_cast %914 : vector<16xf32> to vector<16x1xf32>
    %c132 = arith.constant 132 : index
    %916 = memref.load %arg1[%c132] : memref<139xf32, #tpu.memory_space<smem>>
    %917 = vector.broadcast %916 : f32 to vector<16x1xf32>
    %918 = arith.mulf %917, %915 : vector<16x1xf32>
    %919 = arith.addf %904, %918 : vector<16x1xf32>
    %cst_180 = arith.constant 0.000000e+00 : f32
    %920 = vector.broadcast %cst_180 : f32 to vector<16x128xf32>
    %921 = arith.subf %920, %280 : vector<16x128xf32>
    %c101 = arith.constant 101 : index
    %922 = memref.load %arg1[%c101] : memref<139xf32, #tpu.memory_space<smem>>
    %923 = vector.broadcast %922 : f32 to vector<16x128xf32>
    %924 = arith.mulf %921, %923 : vector<16x128xf32>
    %925 = math.exp %924 : vector<16x128xf32>
    %926 = vector.extract_strided_slice %276 {offsets = [10, 0], sizes = [1, 128], strides = [1, 1]} : vector<16x128xf32> to vector<1x128xf32>
    %927 = vector.broadcast %926 : vector<1x128xf32> to vector<16x128xf32>
    %928 = arith.mulf %927, %925 : vector<16x128xf32>
    %cst_181 = arith.constant dense<0.000000e+00> : vector<16xf32>
    %929 = vector.multi_reduction <add>, %928, %cst_181 [1] : vector<16x128xf32> to vector<16xf32>
    %930 = vector.shape_cast %929 : vector<16xf32> to vector<16x1xf32>
    %c133 = arith.constant 133 : index
    %931 = memref.load %arg1[%c133] : memref<139xf32, #tpu.memory_space<smem>>
    %932 = vector.broadcast %931 : f32 to vector<16x1xf32>
    %933 = arith.mulf %932, %930 : vector<16x1xf32>
    %934 = arith.addf %919, %933 : vector<16x1xf32>
    %cst_182 = arith.constant 0.000000e+00 : f32
    %935 = vector.broadcast %cst_182 : f32 to vector<16x128xf32>
    %936 = arith.subf %935, %280 : vector<16x128xf32>
    %c102 = arith.constant 102 : index
    %937 = memref.load %arg1[%c102] : memref<139xf32, #tpu.memory_space<smem>>
    %938 = vector.broadcast %937 : f32 to vector<16x128xf32>
    %939 = arith.mulf %936, %938 : vector<16x128xf32>
    %940 = math.exp %939 : vector<16x128xf32>
    %941 = vector.extract_strided_slice %276 {offsets = [11, 0], sizes = [1, 128], strides = [1, 1]} : vector<16x128xf32> to vector<1x128xf32>
    %942 = vector.broadcast %941 : vector<1x128xf32> to vector<16x128xf32>
    %943 = arith.mulf %942, %940 : vector<16x128xf32>
    %cst_183 = arith.constant dense<0.000000e+00> : vector<16xf32>
    %944 = vector.multi_reduction <add>, %943, %cst_183 [1] : vector<16x128xf32> to vector<16xf32>
    %945 = vector.shape_cast %944 : vector<16xf32> to vector<16x1xf32>
    %c134 = arith.constant 134 : index
    %946 = memref.load %arg1[%c134] : memref<139xf32, #tpu.memory_space<smem>>
    %947 = vector.broadcast %946 : f32 to vector<16x1xf32>
    %948 = arith.mulf %947, %945 : vector<16x1xf32>
    %949 = arith.addf %934, %948 : vector<16x1xf32>
    %cst_184 = arith.constant 0.000000e+00 : f32
    %950 = vector.broadcast %cst_184 : f32 to vector<16x128xf32>
    %951 = arith.subf %950, %280 : vector<16x128xf32>
    %c103 = arith.constant 103 : index
    %952 = memref.load %arg1[%c103] : memref<139xf32, #tpu.memory_space<smem>>
    %953 = vector.broadcast %952 : f32 to vector<16x128xf32>
    %954 = arith.mulf %951, %953 : vector<16x128xf32>
    %955 = math.exp %954 : vector<16x128xf32>
    %956 = vector.extract_strided_slice %276 {offsets = [12, 0], sizes = [1, 128], strides = [1, 1]} : vector<16x128xf32> to vector<1x128xf32>
    %957 = vector.broadcast %956 : vector<1x128xf32> to vector<16x128xf32>
    %958 = arith.mulf %957, %955 : vector<16x128xf32>
    %cst_185 = arith.constant dense<0.000000e+00> : vector<16xf32>
    %959 = vector.multi_reduction <add>, %958, %cst_185 [1] : vector<16x128xf32> to vector<16xf32>
    %960 = vector.shape_cast %959 : vector<16xf32> to vector<16x1xf32>
    %c135 = arith.constant 135 : index
    %961 = memref.load %arg1[%c135] : memref<139xf32, #tpu.memory_space<smem>>
    %962 = vector.broadcast %961 : f32 to vector<16x1xf32>
    %963 = arith.mulf %962, %960 : vector<16x1xf32>
    %964 = arith.addf %949, %963 : vector<16x1xf32>
    %cst_186 = arith.constant 0.000000e+00 : f32
    %965 = vector.broadcast %cst_186 : f32 to vector<16x128xf32>
    %966 = arith.subf %965, %280 : vector<16x128xf32>
    %c104 = arith.constant 104 : index
    %967 = memref.load %arg1[%c104] : memref<139xf32, #tpu.memory_space<smem>>
    %968 = vector.broadcast %967 : f32 to vector<16x128xf32>
    %969 = arith.mulf %966, %968 : vector<16x128xf32>
    %970 = math.exp %969 : vector<16x128xf32>
    %971 = vector.extract_strided_slice %276 {offsets = [13, 0], sizes = [1, 128], strides = [1, 1]} : vector<16x128xf32> to vector<1x128xf32>
    %972 = vector.broadcast %971 : vector<1x128xf32> to vector<16x128xf32>
    %973 = arith.mulf %972, %970 : vector<16x128xf32>
    %cst_187 = arith.constant dense<0.000000e+00> : vector<16xf32>
    %974 = vector.multi_reduction <add>, %973, %cst_187 [1] : vector<16x128xf32> to vector<16xf32>
    %975 = vector.shape_cast %974 : vector<16xf32> to vector<16x1xf32>
    %c136 = arith.constant 136 : index
    %976 = memref.load %arg1[%c136] : memref<139xf32, #tpu.memory_space<smem>>
    %977 = vector.broadcast %976 : f32 to vector<16x1xf32>
    %978 = arith.mulf %977, %975 : vector<16x1xf32>
    %979 = arith.addf %964, %978 : vector<16x1xf32>
    %cst_188 = arith.constant 0.000000e+00 : f32
    %980 = vector.broadcast %cst_188 : f32 to vector<16x128xf32>
    %981 = arith.subf %980, %280 : vector<16x128xf32>
    %c105 = arith.constant 105 : index
    %982 = memref.load %arg1[%c105] : memref<139xf32, #tpu.memory_space<smem>>
    %983 = vector.broadcast %982 : f32 to vector<16x128xf32>
    %984 = arith.mulf %981, %983 : vector<16x128xf32>
    %985 = math.exp %984 : vector<16x128xf32>
    %986 = vector.extract_strided_slice %276 {offsets = [14, 0], sizes = [1, 128], strides = [1, 1]} : vector<16x128xf32> to vector<1x128xf32>
    %987 = vector.broadcast %986 : vector<1x128xf32> to vector<16x128xf32>
    %988 = arith.mulf %987, %985 : vector<16x128xf32>
    %cst_189 = arith.constant dense<0.000000e+00> : vector<16xf32>
    %989 = vector.multi_reduction <add>, %988, %cst_189 [1] : vector<16x128xf32> to vector<16xf32>
    %990 = vector.shape_cast %989 : vector<16xf32> to vector<16x1xf32>
    %c137 = arith.constant 137 : index
    %991 = memref.load %arg1[%c137] : memref<139xf32, #tpu.memory_space<smem>>
    %992 = vector.broadcast %991 : f32 to vector<16x1xf32>
    %993 = arith.mulf %992, %990 : vector<16x1xf32>
    %994 = arith.addf %979, %993 : vector<16x1xf32>
    %cst_190 = arith.constant 0.000000e+00 : f32
    %995 = vector.broadcast %cst_190 : f32 to vector<16x128xf32>
    %996 = arith.subf %995, %280 : vector<16x128xf32>
    %c106 = arith.constant 106 : index
    %997 = memref.load %arg1[%c106] : memref<139xf32, #tpu.memory_space<smem>>
    %998 = vector.broadcast %997 : f32 to vector<16x128xf32>
    %999 = arith.mulf %996, %998 : vector<16x128xf32>
    %1000 = math.exp %999 : vector<16x128xf32>
    %1001 = vector.extract_strided_slice %276 {offsets = [15, 0], sizes = [1, 128], strides = [1, 1]} : vector<16x128xf32> to vector<1x128xf32>
    %1002 = vector.broadcast %1001 : vector<1x128xf32> to vector<16x128xf32>
    %1003 = arith.mulf %1002, %1000 : vector<16x128xf32>
    %cst_191 = arith.constant dense<0.000000e+00> : vector<16xf32>
    %1004 = vector.multi_reduction <add>, %1003, %cst_191 [1] : vector<16x128xf32> to vector<16xf32>
    %1005 = vector.shape_cast %1004 : vector<16xf32> to vector<16x1xf32>
    %c138 = arith.constant 138 : index
    %1006 = memref.load %arg1[%c138] : memref<139xf32, #tpu.memory_space<smem>>
    %1007 = vector.broadcast %1006 : f32 to vector<16x1xf32>
    %1008 = arith.mulf %1007, %1005 : vector<16x1xf32>
    %1009 = arith.addf %994, %1008 : vector<16x1xf32>
    %1010 = arith.addf %768, %1009 : vector<16x1xf32>
    %cst_192 = arith.constant 0.000000e+00 : f32
    %1011 = vector.broadcast %cst_192 : f32 to vector<16x1xf32>
    %1012 = arith.maximumf %1010, %1011 : vector<16x1xf32>
    %1013 = math.absf %1010 : vector<16x1xf32>
    %cst_193 = arith.constant 0.000000e+00 : f32
    %1014 = vector.broadcast %cst_193 : f32 to vector<16x1xf32>
    %1015 = arith.subf %1014, %1013 : vector<16x1xf32>
    %1016 = math.exp %1015 : vector<16x1xf32>
    %cst_194 = arith.constant 1.000000e+00 : f32
    %1017 = vector.broadcast %cst_194 : f32 to vector<16x1xf32>
    %1018 = arith.addf %1017, %1016 : vector<16x1xf32>
    %1019 = math.log %1018 : vector<16x1xf32>
    %1020 = arith.addf %1012, %1019 : vector<16x1xf32>
    %1021 = vector.shape_cast %524 : vector<16x1xf32> to vector<1x16x1xf32>
    %c0_195 = arith.constant 0 : index
    %c0_196 = arith.constant 0 : index
    %c0_197 = arith.constant 0 : index
    %1022 = vector.load %arg15[%c0_195, %c0_196, %c0_197] : memref<1x16x1xf32, #tpu.memory_space<vmem>>, vector<1x16x1xf32>
    tpu.vector_store %arg15[%c0_195, %c0_196, %c0_197], %1021 {strides = array<i32>} : memref<1x16x1xf32, #tpu.memory_space<vmem>>, vector<1x16x1xf32>,
    %1023 = vector.shape_cast %1020 : vector<16x1xf32> to vector<1x16x1xf32>
    %c0_198 = arith.constant 0 : index
    %c0_199 = arith.constant 0 : index
    %c0_200 = arith.constant 0 : index
    %1024 = vector.load %arg16[%c0_198, %c0_199, %c0_200] : memref<1x16x1xf32, #tpu.memory_space<vmem>>, vector<1x16x1xf32>
    tpu.vector_store %arg16[%c0_198, %c0_199, %c0_200], %1023 {strides = array<i32>} : memref<1x16x1xf32, #tpu.memory_space<vmem>>, vector<1x16x1xf32>,
    %1025 = vector.broadcast %5 : vector<8x1xf32> to vector<8x8xf32>
    %1026 = arith.mulf %1025, %52 : vector<8x8xf32>
    %cst_201 = arith.constant 0.000000e+00 : f32
    %1027 = vector.broadcast %cst_201 : f32 to vector<1x8xf32>
    %c36 = arith.constant 36 : index
    %1028 = memref.load %arg1[%c36] : memref<139xf32, #tpu.memory_space<smem>>
    %1029 = vector.broadcast %1028 : f32 to vector<1x8xf32>
    %1030 = arith.addf %1027, %1029 : vector<1x8xf32>
    %cst_202 = arith.constant 0.000000e+00 : f32
    %1031 = vector.broadcast %cst_202 : f32 to vector<8x8xf32>
    %1032 = arith.subf %1031, %40 : vector<8x8xf32>
    %c4 = arith.constant 4 : index
    %1033 = memref.load %arg1[%c4] : memref<139xf32, #tpu.memory_space<smem>>
    %1034 = vector.broadcast %1033 : f32 to vector<8x8xf32>
    %1035 = arith.mulf %1032, %1034 : vector<8x8xf32>
    %1036 = math.exp %1035 : vector<8x8xf32>
    %c12 = arith.constant 12 : index
    %1037 = memref.load %arg1[%c12] : memref<139xf32, #tpu.memory_space<smem>>
    %c20 = arith.constant 20 : index
    %1038 = memref.load %arg1[%c20] : memref<139xf32, #tpu.memory_space<smem>>
    %1039 = vector.broadcast %1038 : f32 to vector<8x8xf32>
    %1040 = arith.mulf %1039, %46 : vector<8x8xf32>
    %1041 = vector.broadcast %1037 : f32 to vector<8x8xf32>
    %1042 = arith.addf %1041, %1040 : vector<8x8xf32>
    %c28 = arith.constant 28 : index
    %1043 = memref.load %arg1[%c28] : memref<139xf32, #tpu.memory_space<smem>>
    %1044 = vector.broadcast %1043 : f32 to vector<8x8xf32>
    %1045 = arith.mulf %1044, %1026 : vector<8x8xf32>
    %1046 = arith.addf %1042, %1045 : vector<8x8xf32>
    %1047 = arith.mulf %1036, %1046 : vector<8x8xf32>
    %cst_203 = arith.constant dense<0.000000e+00> : vector<8xf32>
    %1048 = vector.multi_reduction <add>, %1047, %cst_203 [0] : vector<8x8xf32> to vector<8xf32>
    %1049 = vector.shape_cast %1048 : vector<8xf32> to vector<1x8xf32>
    %1050 = arith.addf %1030, %1049 : vector<1x8xf32>
    %cst_204 = arith.constant 0.000000e+00 : f32
    %1051 = vector.broadcast %cst_204 : f32 to vector<8x8xf32>
    %1052 = arith.subf %1051, %40 : vector<8x8xf32>
    %c5 = arith.constant 5 : index
    %1053 = memref.load %arg1[%c5] : memref<139xf32, #tpu.memory_space<smem>>
    %1054 = vector.broadcast %1053 : f32 to vector<8x8xf32>
    %1055 = arith.mulf %1052, %1054 : vector<8x8xf32>
    %1056 = math.exp %1055 : vector<8x8xf32>
    %c13 = arith.constant 13 : index
    %1057 = memref.load %arg1[%c13] : memref<139xf32, #tpu.memory_space<smem>>
    %c21 = arith.constant 21 : index
    %1058 = memref.load %arg1[%c21] : memref<139xf32, #tpu.memory_space<smem>>
    %1059 = vector.broadcast %1058 : f32 to vector<8x8xf32>
    %1060 = arith.mulf %1059, %46 : vector<8x8xf32>
    %1061 = vector.broadcast %1057 : f32 to vector<8x8xf32>
    %1062 = arith.addf %1061, %1060 : vector<8x8xf32>
    %c29 = arith.constant 29 : index
    %1063 = memref.load %arg1[%c29] : memref<139xf32, #tpu.memory_space<smem>>
    %1064 = vector.broadcast %1063 : f32 to vector<8x8xf32>
    %1065 = arith.mulf %1064, %1026 : vector<8x8xf32>
    %1066 = arith.addf %1062, %1065 : vector<8x8xf32>
    %1067 = arith.mulf %1056, %1066 : vector<8x8xf32>
    %cst_205 = arith.constant dense<0.000000e+00> : vector<8xf32>
    %1068 = vector.multi_reduction <add>, %1067, %cst_205 [0] : vector<8x8xf32> to vector<8xf32>
    %1069 = vector.shape_cast %1068 : vector<8xf32> to vector<1x8xf32>
    %1070 = arith.addf %1050, %1069 : vector<1x8xf32>
    %cst_206 = arith.constant 0.000000e+00 : f32
    %1071 = vector.broadcast %cst_206 : f32 to vector<8x8xf32>
    %1072 = arith.subf %1071, %40 : vector<8x8xf32>
    %c6 = arith.constant 6 : index
    %1073 = memref.load %arg1[%c6] : memref<139xf32, #tpu.memory_space<smem>>
    %1074 = vector.broadcast %1073 : f32 to vector<8x8xf32>
    %1075 = arith.mulf %1072, %1074 : vector<8x8xf32>
    %1076 = math.exp %1075 : vector<8x8xf32>
    %c14 = arith.constant 14 : index
    %1077 = memref.load %arg1[%c14] : memref<139xf32, #tpu.memory_space<smem>>
    %c22 = arith.constant 22 : index
    %1078 = memref.load %arg1[%c22] : memref<139xf32, #tpu.memory_space<smem>>
    %1079 = vector.broadcast %1078 : f32 to vector<8x8xf32>
    %1080 = arith.mulf %1079, %46 : vector<8x8xf32>
    %1081 = vector.broadcast %1077 : f32 to vector<8x8xf32>
    %1082 = arith.addf %1081, %1080 : vector<8x8xf32>
    %c30 = arith.constant 30 : index
    %1083 = memref.load %arg1[%c30] : memref<139xf32, #tpu.memory_space<smem>>
    %1084 = vector.broadcast %1083 : f32 to vector<8x8xf32>
    %1085 = arith.mulf %1084, %1026 : vector<8x8xf32>
    %1086 = arith.addf %1082, %1085 : vector<8x8xf32>
    %1087 = arith.mulf %1076, %1086 : vector<8x8xf32>
    %cst_207 = arith.constant dense<0.000000e+00> : vector<8xf32>
    %1088 = vector.multi_reduction <add>, %1087, %cst_207 [0] : vector<8x8xf32> to vector<8xf32>
    %1089 = vector.shape_cast %1088 : vector<8xf32> to vector<1x8xf32>
    %1090 = arith.addf %1070, %1089 : vector<1x8xf32>
    %cst_208 = arith.constant 0.000000e+00 : f32
    %1091 = vector.broadcast %cst_208 : f32 to vector<8x8xf32>
    %1092 = arith.subf %1091, %40 : vector<8x8xf32>
    %c7 = arith.constant 7 : index
    %1093 = memref.load %arg1[%c7] : memref<139xf32, #tpu.memory_space<smem>>
    %1094 = vector.broadcast %1093 : f32 to vector<8x8xf32>
    %1095 = arith.mulf %1092, %1094 : vector<8x8xf32>
    %1096 = math.exp %1095 : vector<8x8xf32>
    %c15 = arith.constant 15 : index
    %1097 = memref.load %arg1[%c15] : memref<139xf32, #tpu.memory_space<smem>>
    %c23 = arith.constant 23 : index
    %1098 = memref.load %arg1[%c23] : memref<139xf32, #tpu.memory_space<smem>>
    %1099 = vector.broadcast %1098 : f32 to vector<8x8xf32>
    %1100 = arith.mulf %1099, %46 : vector<8x8xf32>
    %1101 = vector.broadcast %1097 : f32 to vector<8x8xf32>
    %1102 = arith.addf %1101, %1100 : vector<8x8xf32>
    %c31 = arith.constant 31 : index
    %1103 = memref.load %arg1[%c31] : memref<139xf32, #tpu.memory_space<smem>>
    %1104 = vector.broadcast %1103 : f32 to vector<8x8xf32>
    %1105 = arith.mulf %1104, %1026 : vector<8x8xf32>
    %1106 = arith.addf %1102, %1105 : vector<8x8xf32>
    %1107 = arith.mulf %1096, %1106 : vector<8x8xf32>
    %cst_209 = arith.constant dense<0.000000e+00> : vector<8xf32>
    %1108 = vector.multi_reduction <add>, %1107, %cst_209 [0] : vector<8x8xf32> to vector<8xf32>
    %1109 = vector.shape_cast %1108 : vector<8xf32> to vector<1x8xf32>
    %1110 = arith.addf %1090, %1109 : vector<1x8xf32>
    %cst_210 = arith.constant 0.000000e+00 : f32
    %1111 = vector.broadcast %cst_210 : f32 to vector<8x8xf32>
    %1112 = arith.subf %1111, %40 : vector<8x8xf32>
    %c8 = arith.constant 8 : index
    %1113 = memref.load %arg1[%c8] : memref<139xf32, #tpu.memory_space<smem>>
    %1114 = vector.broadcast %1113 : f32 to vector<8x8xf32>
    %1115 = arith.mulf %1112, %1114 : vector<8x8xf32>
    %1116 = math.exp %1115 : vector<8x8xf32>
    %c16 = arith.constant 16 : index
    %1117 = memref.load %arg1[%c16] : memref<139xf32, #tpu.memory_space<smem>>
    %c24 = arith.constant 24 : index
    %1118 = memref.load %arg1[%c24] : memref<139xf32, #tpu.memory_space<smem>>
    %1119 = vector.broadcast %1118 : f32 to vector<8x8xf32>
    %1120 = arith.mulf %1119, %46 : vector<8x8xf32>
    %1121 = vector.broadcast %1117 : f32 to vector<8x8xf32>
    %1122 = arith.addf %1121, %1120 : vector<8x8xf32>
    %c32 = arith.constant 32 : index
    %1123 = memref.load %arg1[%c32] : memref<139xf32, #tpu.memory_space<smem>>
    %1124 = vector.broadcast %1123 : f32 to vector<8x8xf32>
    %1125 = arith.mulf %1124, %1026 : vector<8x8xf32>
    %1126 = arith.addf %1122, %1125 : vector<8x8xf32>
    %1127 = arith.mulf %1116, %1126 : vector<8x8xf32>
    %cst_211 = arith.constant dense<0.000000e+00> : vector<8xf32>
    %1128 = vector.multi_reduction <add>, %1127, %cst_211 [0] : vector<8x8xf32> to vector<8xf32>
    %1129 = vector.shape_cast %1128 : vector<8xf32> to vector<1x8xf32>
    %1130 = arith.addf %1110, %1129 : vector<1x8xf32>
    %cst_212 = arith.constant 0.000000e+00 : f32
    %1131 = vector.broadcast %cst_212 : f32 to vector<8x8xf32>
    %1132 = arith.subf %1131, %40 : vector<8x8xf32>
    %c9 = arith.constant 9 : index
    %1133 = memref.load %arg1[%c9] : memref<139xf32, #tpu.memory_space<smem>>
    %1134 = vector.broadcast %1133 : f32 to vector<8x8xf32>
    %1135 = arith.mulf %1132, %1134 : vector<8x8xf32>
    %1136 = math.exp %1135 : vector<8x8xf32>
    %c17 = arith.constant 17 : index
    %1137 = memref.load %arg1[%c17] : memref<139xf32, #tpu.memory_space<smem>>
    %c25 = arith.constant 25 : index
    %1138 = memref.load %arg1[%c25] : memref<139xf32, #tpu.memory_space<smem>>
    %1139 = vector.broadcast %1138 : f32 to vector<8x8xf32>
    %1140 = arith.mulf %1139, %46 : vector<8x8xf32>
    %1141 = vector.broadcast %1137 : f32 to vector<8x8xf32>
    %1142 = arith.addf %1141, %1140 : vector<8x8xf32>
    %c33 = arith.constant 33 : index
    %1143 = memref.load %arg1[%c33] : memref<139xf32, #tpu.memory_space<smem>>
    %1144 = vector.broadcast %1143 : f32 to vector<8x8xf32>
    %1145 = arith.mulf %1144, %1026 : vector<8x8xf32>
    %1146 = arith.addf %1142, %1145 : vector<8x8xf32>
    %1147 = arith.mulf %1136, %1146 : vector<8x8xf32>
    %cst_213 = arith.constant dense<0.000000e+00> : vector<8xf32>
    %1148 = vector.multi_reduction <add>, %1147, %cst_213 [0] : vector<8x8xf32> to vector<8xf32>
    %1149 = vector.shape_cast %1148 : vector<8xf32> to vector<1x8xf32>
    %1150 = arith.addf %1130, %1149 : vector<1x8xf32>
    %cst_214 = arith.constant 0.000000e+00 : f32
    %1151 = vector.broadcast %cst_214 : f32 to vector<8x8xf32>
    %1152 = arith.subf %1151, %40 : vector<8x8xf32>
    %c10 = arith.constant 10 : index
    %1153 = memref.load %arg1[%c10] : memref<139xf32, #tpu.memory_space<smem>>
    %1154 = vector.broadcast %1153 : f32 to vector<8x8xf32>
    %1155 = arith.mulf %1152, %1154 : vector<8x8xf32>
    %1156 = math.exp %1155 : vector<8x8xf32>
    %c18 = arith.constant 18 : index
    %1157 = memref.load %arg1[%c18] : memref<139xf32, #tpu.memory_space<smem>>
    %c26 = arith.constant 26 : index
    %1158 = memref.load %arg1[%c26] : memref<139xf32, #tpu.memory_space<smem>>
    %1159 = vector.broadcast %1158 : f32 to vector<8x8xf32>
    %1160 = arith.mulf %1159, %46 : vector<8x8xf32>
    %1161 = vector.broadcast %1157 : f32 to vector<8x8xf32>
    %1162 = arith.addf %1161, %1160 : vector<8x8xf32>
    %c34 = arith.constant 34 : index
    %1163 = memref.load %arg1[%c34] : memref<139xf32, #tpu.memory_space<smem>>
    %1164 = vector.broadcast %1163 : f32 to vector<8x8xf32>
    %1165 = arith.mulf %1164, %1026 : vector<8x8xf32>
    %1166 = arith.addf %1162, %1165 : vector<8x8xf32>
    %1167 = arith.mulf %1156, %1166 : vector<8x8xf32>
    %cst_215 = arith.constant dense<0.000000e+00> : vector<8xf32>
    %1168 = vector.multi_reduction <add>, %1167, %cst_215 [0] : vector<8x8xf32> to vector<8xf32>
    %1169 = vector.shape_cast %1168 : vector<8xf32> to vector<1x8xf32>
    %1170 = arith.addf %1150, %1169 : vector<1x8xf32>
    %cst_216 = arith.constant 0.000000e+00 : f32
    %1171 = vector.broadcast %cst_216 : f32 to vector<8x8xf32>
    %1172 = arith.subf %1171, %40 : vector<8x8xf32>
    %c11 = arith.constant 11 : index
    %1173 = memref.load %arg1[%c11] : memref<139xf32, #tpu.memory_space<smem>>
    %1174 = vector.broadcast %1173 : f32 to vector<8x8xf32>
    %1175 = arith.mulf %1172, %1174 : vector<8x8xf32>
    %1176 = math.exp %1175 : vector<8x8xf32>
    %c19 = arith.constant 19 : index
    %1177 = memref.load %arg1[%c19] : memref<139xf32, #tpu.memory_space<smem>>
    %c27 = arith.constant 27 : index
    %1178 = memref.load %arg1[%c27] : memref<139xf32, #tpu.memory_space<smem>>
    %1179 = vector.broadcast %1178 : f32 to vector<8x8xf32>
    %1180 = arith.mulf %1179, %46 : vector<8x8xf32>
    %1181 = vector.broadcast %1177 : f32 to vector<8x8xf32>
    %1182 = arith.addf %1181, %1180 : vector<8x8xf32>
    %c35 = arith.constant 35 : index
    %1183 = memref.load %arg1[%c35] : memref<139xf32, #tpu.memory_space<smem>>
    %1184 = vector.broadcast %1183 : f32 to vector<8x8xf32>
    %1185 = arith.mulf %1184, %1026 : vector<8x8xf32>
    %1186 = arith.addf %1182, %1185 : vector<8x8xf32>
    %1187 = arith.mulf %1176, %1186 : vector<8x8xf32>
    %cst_217 = arith.constant dense<0.000000e+00> : vector<8xf32>
    %1188 = vector.multi_reduction <add>, %1187, %cst_217 [0] : vector<8x8xf32> to vector<8xf32>
    %1189 = vector.shape_cast %1188 : vector<8xf32> to vector<1x8xf32>
    %1190 = arith.addf %1170, %1189 : vector<1x8xf32>
    %1191 = arith.subf %1190, %7 : vector<1x8xf32>
    %1192 = arith.mulf %1191, %1191 : vector<1x8xf32>
    %cst_218 = arith.constant dense<0.000000e+00> : vector<1xf32>
    %1193 = vector.multi_reduction <add>, %1192, %cst_218 [1] : vector<1x8xf32> to vector<1xf32>
    %1194 = vector.shape_cast %1193 : vector<1xf32> to vector<1x1xf32>
    %cst_219 = arith.constant dense<0.000000e+00> : vector<1xf32>
    %1195 = vector.multi_reduction <add>, %1194, %cst_219 [0] : vector<1x1xf32> to vector<1xf32>
    %1196 = vector.shape_cast %1195 : vector<1xf32> to vector<1x1xf32>
    %1197 = vector.shape_cast %1196 : vector<1x1xf32> to vector<1x1x1xf32>
    %c0_220 = arith.constant 0 : index
    %c0_221 = arith.constant 0 : index
    %c0_222 = arith.constant 0 : index
    %1198 = vector.load %arg17[%c0_220, %c0_221, %c0_222] : memref<1x1x1xf32, #tpu.memory_space<vmem>>, vector<1x1x1xf32>
    tpu.vector_store %arg17[%c0_220, %c0_221, %c0_222], %1197 {strides = array<i32>} : memref<1x1x1xf32, #tpu.memory_space<vmem>>, vector<1x1x1xf32>,
    return
  }
  func.func @transform_0(%arg0: i32) -> i32 {
    %c0_i32 = arith.constant 0 : i32
    %c0_i32_0 = arith.constant 0 : i32
    return %c0_i32 : i32
  }
  func.func @transform_1(%arg0: i32) -> (i32, i32, i32) {
    %c0_i32 = arith.constant 0 : i32
    %c0_i32_0 = arith.constant 0 : i32
    %c0_i32_1 = arith.constant 0 : i32
    return %arg0, %c0_i32, %c0_i32_0 : i32, i32, i32
  }
  func.func @transform_2(%arg0: i32) -> (i32, i32, i32) {
    %c0_i32 = arith.constant 0 : i32
    %c0_i32_0 = arith.constant 0 : i32
    %c0_i32_1 = arith.constant 0 : i32
    return %arg0, %c0_i32, %c0_i32_0 : i32, i32, i32
  }
  func.func @transform_3(%arg0: i32) -> (i32, i32, i32) {
    %c0_i32 = arith.constant 0 : i32
    %c0_i32_0 = arith.constant 0 : i32
    %c0_i32_1 = arith.constant 0 : i32
    return %arg0, %c0_i32, %c0_i32_0 : i32, i32, i32
  }
  func.func @transform_4(%arg0: i32) -> (i32, i32, i32) {
    %c0_i32 = arith.constant 0 : i32
    %c0_i32_0 = arith.constant 0 : i32
    %c0_i32_1 = arith.constant 0 : i32
    return %arg0, %c0_i32, %c0_i32_0 : i32, i32, i32
  }
  func.func @transform_5(%arg0: i32) -> (i32, i32) {
    %c0_i32 = arith.constant 0 : i32
    %c0_i32_0 = arith.constant 0 : i32
    %c0_i32_1 = arith.constant 0 : i32
    return %c0_i32, %c0_i32_0 : i32, i32
  }
  func.func @transform_6(%arg0: i32) -> (i32, i32) {
    %c0_i32 = arith.constant 0 : i32
    %c0_i32_0 = arith.constant 0 : i32
    %c0_i32_1 = arith.constant 0 : i32
    return %c0_i32, %c0_i32_0 : i32, i32
  }
  func.func @transform_7(%arg0: i32) -> (i32, i32, i32) {
    %c0_i32 = arith.constant 0 : i32
    %c0_i32_0 = arith.constant 0 : i32
    %c0_i32_1 = arith.constant 0 : i32
    return %arg0, %c0_i32, %c0_i32_0 : i32, i32, i32
  }
  func.func @transform_8(%arg0: i32) -> (i32, i32, i32) {
    %c0_i32 = arith.constant 0 : i32
    %c0_i32_0 = arith.constant 0 : i32
    %c0_i32_1 = arith.constant 0 : i32
    %c0_i32_2 = arith.constant 0 : i32
    return %c0_i32, %c0_i32_0, %c0_i32_1 : i32, i32, i32
  }
  func.func @transform_9(%arg0: i32) -> (i32, i32) {
    %c0_i32 = arith.constant 0 : i32
    %c0_i32_0 = arith.constant 0 : i32
    %c0_i32_1 = arith.constant 0 : i32
    return %c0_i32, %c0_i32_0 : i32, i32
  }
  func.func @transform_10(%arg0: i32) -> (i32, i32, i32) {
    %c0_i32 = arith.constant 0 : i32
    %c0_i32_0 = arith.constant 0 : i32
    %c0_i32_1 = arith.constant 0 : i32
    %c0_i32_2 = arith.constant 0 : i32
    return %c0_i32, %c0_i32_0, %c0_i32_1 : i32, i32, i32
  }
  func.func @transform_11(%arg0: i32) -> (i32, i32) {
    %c0_i32 = arith.constant 0 : i32
    %c0_i32_0 = arith.constant 0 : i32
    %c0_i32_1 = arith.constant 0 : i32
    return %c0_i32, %c0_i32_0 : i32, i32
  }
  func.func @transform_12(%arg0: i32) -> (i32, i32) {
    %c0_i32 = arith.constant 0 : i32
    %c0_i32_0 = arith.constant 0 : i32
    %c0_i32_1 = arith.constant 0 : i32
    return %c0_i32, %c0_i32_0 : i32, i32
  }
  func.func @transform_13(%arg0: i32) -> (i32, i32, i32) {
    %c0_i32 = arith.constant 0 : i32
    %c0_i32_0 = arith.constant 0 : i32
    %c0_i32_1 = arith.constant 0 : i32
    %c0_i32_2 = arith.constant 0 : i32
    return %c0_i32, %c0_i32_0, %c0_i32_1 : i32, i32, i32
  }
  func.func @transform_14(%arg0: i32) -> (i32, i32, i32) {
    %c0_i32 = arith.constant 0 : i32
    %c0_i32_0 = arith.constant 0 : i32
    %c0_i32_1 = arith.constant 0 : i32
    return %arg0, %c0_i32, %c0_i32_0 : i32, i32, i32
  }
  func.func @transform_15(%arg0: i32) -> (i32, i32, i32) {
    %c0_i32 = arith.constant 0 : i32
    %c0_i32_0 = arith.constant 0 : i32
    %c0_i32_1 = arith.constant 0 : i32
    return %arg0, %c0_i32, %c0_i32_0 : i32, i32, i32
  }
  func.func @transform_16(%arg0: i32) -> (i32, i32, i32) {
    %c0_i32 = arith.constant 0 : i32
    %c0_i32_0 = arith.constant 0 : i32
    %c0_i32_1 = arith.constant 0 : i32
    return %arg0, %c0_i32, %c0_i32_0 : i32, i32, i32
  }
}

</mosaic_0001>

<llo_original>
// kernel: tpu_custom_call.1
$region0: #{tpu_custom_call.1}
  #allocation0 [shape = 'u32[]', space=smem, size = 0x4, offset = 0x4, fixed_abs, tag = 'smem constant byte address 0x4 - core index']
  #allocation1 [shape = 'u32[144,128]{1,0:T(1,128)}', space=vmem, size = 0x12000, scoped, tag = 'internal scratch']
  %s0 = inlined_call_operand.vmem [shape: f32[139], index: 0, kind: input, shape index: {}]
  %s1 = inlined_call_operand.vmem [shape: f32[2,8,1], index: 1, kind: input, shape index: {}]
  %s2 = inlined_call_operand.vmem [shape: f32[2,1,8], index: 2, kind: input, shape index: {}]
  %s3 = inlined_call_operand.vmem [shape: f32[2,8,1], index: 3, kind: input, shape index: {}]
  %s4 = inlined_call_operand.vmem [shape: f32[2,1,8], index: 4, kind: input, shape index: {}]
  %s5 = inlined_call_operand.vmem [shape: f32[1,128], index: 5, kind: input, shape index: {}]
  %s6 = inlined_call_operand.vmem [shape: f32[128,1], index: 6, kind: input, shape index: {}]
  %s7 = inlined_call_operand.vmem [shape: f32[2,16,1], index: 7, kind: input, shape index: {}]
  %s8 = inlined_call_operand.vmem [shape: f32[3,1,8], index: 8, kind: input, shape index: {}]
  %s9 = inlined_call_operand.vmem [shape: f32[8,8], index: 9, kind: input, shape index: {}]
  %s10 = inlined_call_operand.vmem [shape: f32[3,8,1], index: 10, kind: input, shape index: {}]
  %s11 = inlined_call_operand.vmem [shape: f32[16,40], index: 11, kind: input, shape index: {}]
  %s12 = inlined_call_operand.vmem [shape: f32[16,1], index: 12, kind: input, shape index: {}]
  %s13 = inlined_call_operand.vmem [shape: f32[2,16,1], index: 13, kind: input, shape index: {}]
  %s14 = inlined_call_operand.vmem [shape: f32[2,16,1], index: 14, kind: output, shape index: {0}]
  %s15 = inlined_call_operand.vmem [shape: f32[2,16,1], index: 15, kind: output, shape index: {1}]
  %s16 = inlined_call_operand.vmem [shape: f32[2,1,1], index: 16, kind: output, shape index: {2}]
  %17 = xla_tuple %s14, %s15, %s16
  %s18 = sld [smem:[#allocation0]]
  $region109: #{tpu_custom_call.1} parent=0
    _
  %s20 = ssub.s32 1, %s18
  %s21 = scalar_select 0, %s20, %s18
  $region1: #{tpu_custom_call.1} parent=0
    #allocation2 [shape = 'u8[1024]{0}', space=smem, size = 0x400, scoped, tag = 'input window, operand 0, single buffered']
    #allocation3 [shape = 's32[2]{0}', space=sflag, size = 0x8, scoped, tag = 'scoped memory for tpu_custom_call.1']
    %22 = vsyncpa [#allocation3], 0
    loop: start=0, step=1, limit=4
    $region2: #{tpu_custom_call.1} parent=1 // loop_pre_header
      _
    $region3: #{tpu_custom_call.1} parent=1 // loop_header
      %s24 = sphi 0, %s28
      %p25 = scmp.ge.s32.totalorder %s24, 4
      %s32 = sphi 0, %s32
      %s34 = sphi 0, %s32
      %s35 = sphi 0, %s34
      %s49 = sphi 0, %s35
      %s55 = sphi 0, %s57
      %s58 = sphi 0, %s55
      %s59 = sphi 0, %s58
      %s75 = sphi 0, %s59
      %s81 = sphi 0, %s83
      %s84 = sphi 0, %s81
      %s85 = sphi 0, %s84
      %s101 = sphi 0, %s85
      %s107 = sphi 0, %s109
      %s110 = sphi 0, %s107
      %s111 = sphi 0, %s110
      %s127 = sphi 0, %s111
      %s133 = sphi 0, %s135
      %s136 = sphi 0, %s133
      %s137 = sphi 0, %s136
      %s153 = sphi 0, %s137
      %s157 = sphi 0, %s157
      %s159 = sphi 0, %s157
      %s160 = sphi 0, %s159
      %s174 = sphi 0, %s160
      %s178 = sphi 0, %s178
      %s180 = sphi 0, %s178
      %s181 = sphi 0, %s180
      %s195 = sphi 0, %s181
      %s201 = sphi 0, %s203
      %s204 = sphi 0, %s201
      %s205 = sphi 0, %s204
      %s221 = sphi 0, %s205
      %s225 = sphi 0, %s225
      %s227 = sphi 0, %s225
      %s228 = sphi 0, %s227
      %s242 = sphi 0, %s228
      %s246 = sphi 0, %s246
      %s248 = sphi 0, %s246
      %s249 = sphi 0, %s248
      %s263 = sphi 0, %s249
      %s267 = sphi 0, %s267
      %s269 = sphi 0, %s267
      %s270 = sphi 0, %s269
      %s284 = sphi 0, %s270
      %s288 = sphi 0, %s288
      %s290 = sphi 0, %s288
      %s291 = sphi 0, %s290
      %s305 = sphi 0, %s291
      %s309 = sphi 0, %s309
      %s311 = sphi 0, %s309
      %s312 = sphi 0, %s311
      %s326 = sphi 0, %s312
      %s330 = sphi 0, %s330
      %s332 = sphi 0, %s330
      %s333 = sphi 0, %s332
      %s347 = sphi 0, %s333
      %s353 = sphi 0, %s355
      %s356 = sphi 0, %s353
      %s357 = sphi 0, %s356
      %s373 = sphi 0, %s357
      %s379 = sphi 0, %s381
      %s382 = sphi 0, %s379
      %s383 = sphi 0, %s382
      %s399 = sphi 0, %s383
      %s405 = sphi 0, %s407
      %s408 = sphi 0, %s405
      %s409 = sphi 0, %s408
      %s425 = sphi 0, %s409
    $region4: #{tpu_custom_call.1} parent=1 // loop_header_branch
      %27 = sbr.rel (%p25) target = $region8
    $region5: #{tpu_custom_call.1} parent=1 // loop_body
      %s29 = ssub.s32 %s24, 1
      %s30 = ssub.s32 %s24, 2
      %s31 = sadd.s32 %s24, 1
      %s33 = sadd.s32 %s32, 1
      %p36 = scmp.eq.s32.totalorder %s24, 1
      %p37 = scmp.ne.s32.totalorder %s32, %s34
      %p38 = scmp.eq.s32.totalorder %s24, 0
      %p39 = por %p37, %p38
      %p40 = scmp.ne.s32.totalorder %s32, %s34
      %p41 = scmp.eq.s32.totalorder %s29, 1
      %p42 = por %p40, %p41
      %p43 = scmp.ne.s32.totalorder %s34, %s35
      %p44 = scmp.eq.s32.totalorder %s29, 0
      %p45 = por %p43, %p44
      %p46 = scmp.ne.s32.totalorder %s34, %s35
      %p47 = scmp.eq.s32.totalorder %s30, 1
      %p48 = por %p46, %p47
      %p50 = scmp.ne.s32.totalorder %s35, %s49
      %p51 = scmp.eq.s32.totalorder %s30, 0
      %p52 = por %p50, %p51
      %s53 = ssub.s32 %s24, %s31
      %p54 = scmp.eq.s32.totalorder %s53, 0
      %s56 = sadd.s32 %s55, 1
      %s57 = scalar_select %p54, %s55, %s56
      %p60 = pneg %p54
      %p61 = scmp.eq.s32.totalorder %s24, 1
      %p62 = por %p60, %p61
      %p63 = scmp.ne.s32.totalorder %s55, %s58
      %p64 = scmp.eq.s32.totalorder %s24, 0
      %p65 = por %p63, %p64
      %p66 = scmp.ne.s32.totalorder %s55, %s58
      %p67 = scmp.eq.s32.totalorder %s29, 1
      %p68 = por %p66, %p67
      %p69 = scmp.ne.s32.totalorder %s58, %s59
      %p70 = scmp.eq.s32.totalorder %s29, 0
      %p71 = por %p69, %p70
      %p72 = scmp.ne.s32.totalorder %s58, %s59
      %p73 = scmp.eq.s32.totalorder %s30, 1
      %p74 = por %p72, %p73
      %p76 = scmp.ne.s32.totalorder %s59, %s75
      %p77 = scmp.eq.s32.totalorder %s30, 0
      %p78 = por %p76, %p77
      %s79 = ssub.s32 %s24, %s31
      %p80 = scmp.eq.s32.totalorder %s79, 0
      %s82 = sadd.s32 %s81, 1
      %s83 = scalar_select %p80, %s81, %s82
      %p86 = pneg %p80
      %p87 = scmp.eq.s32.totalorder %s24, 1
      %p88 = por %p86, %p87
      %p89 = scmp.ne.s32.totalorder %s81, %s84
      %p90 = scmp.eq.s32.totalorder %s24, 0
      %p91 = por %p89, %p90
      %p92 = scmp.ne.s32.totalorder %s81, %s84
      %p93 = scmp.eq.s32.totalorder %s29, 1
      %p94 = por %p92, %p93
      %p95 = scmp.ne.s32.totalorder %s84, %s85
      %p96 = scmp.eq.s32.totalorder %s29, 0
      %p97 = por %p95, %p96
      %p98 = scmp.ne.s32.totalorder %s84, %s85
      %p99 = scmp.eq.s32.totalorder %s30, 1
      %p100 = por %p98, %p99
      %p102 = scmp.ne.s32.totalorder %s85, %s101
      %p103 = scmp.eq.s32.totalorder %s30, 0
      %p104 = por %p102, %p103
      %s105 = ssub.s32 %s24, %s31
      %p106 = scmp.eq.s32.totalorder %s105, 0
      %s108 = sadd.s32 %s107, 1
      %s109 = scalar_select %p106, %s107, %s108
      %p112 = pneg %p106
      %p113 = scmp.eq.s32.totalorder %s24, 1
      %p114 = por %p112, %p113
      %p115 = scmp.ne.s32.totalorder %s107, %s110
      %p116 = scmp.eq.s32.totalorder %s24, 0
      %p117 = por %p115, %p116
      %p118 = scmp.ne.s32.totalorder %s107, %s110
      %p119 = scmp.eq.s32.totalorder %s29, 1
      %p120 = por %p118, %p119
      %p121 = scmp.ne.s32.totalorder %s110, %s111
      %p122 = scmp.eq.s32.totalorder %s29, 0
      %p123 = por %p121, %p122
      %p124 = scmp.ne.s32.totalorder %s110, %s111
      %p125 = scmp.eq.s32.totalorder %s30, 1
      %p126 = por %p124, %p125
      %p128 = scmp.ne.s32.totalorder %s111, %s127
      %p129 = scmp.eq.s32.totalorder %s30, 0
      %p130 = por %p128, %p129
      %s131 = ssub.s32 %s24, %s31
      %p132 = scmp.eq.s32.totalorder %s131, 0
      %s134 = sadd.s32 %s133, 1
      %s135 = scalar_select %p132, %s133, %s134
      %p138 = pneg %p132
      %p139 = scmp.eq.s32.totalorder %s24, 1
      %p140 = por %p138, %p139
      %p141 = scmp.ne.s32.totalorder %s133, %s136
      %p142 = scmp.eq.s32.totalorder %s24, 0
      %p143 = por %p141, %p142
      %p144 = scmp.ne.s32.totalorder %s133, %s136
      %p145 = scmp.eq.s32.totalorder %s29, 1
      %p146 = por %p144, %p145
      %p147 = scmp.ne.s32.totalorder %s136, %s137
      %p148 = scmp.eq.s32.totalorder %s29, 0
      %p149 = por %p147, %p148
      %p150 = scmp.ne.s32.totalorder %s136, %s137
      %p151 = scmp.eq.s32.totalorder %s30, 1
      %p152 = por %p150, %p151
      %p154 = scmp.ne.s32.totalorder %s137, %s153
      %p155 = scmp.eq.s32.totalorder %s30, 0
      %p156 = por %p154, %p155
      %s158 = sadd.s32 %s157, 1
      %p161 = scmp.eq.s32.totalorder %s24, 1
      %p162 = scmp.ne.s32.totalorder %s157, %s159
      %p163 = scmp.eq.s32.totalorder %s24, 0
      %p164 = por %p162, %p163
      %p165 = scmp.ne.s32.totalorder %s157, %s159
      %p166 = scmp.eq.s32.totalorder %s29, 1
      %p167 = por %p165, %p166
      %p168 = scmp.ne.s32.totalorder %s159, %s160
      %p169 = scmp.eq.s32.totalorder %s29, 0
      %p170 = por %p168, %p169
      %p171 = scmp.ne.s32.totalorder %s159, %s160
      %p172 = scmp.eq.s32.totalorder %s30, 1
      %p173 = por %p171, %p172
      %p175 = scmp.ne.s32.totalorder %s160, %s174
      %p176 = scmp.eq.s32.totalorder %s30, 0
      %p177 = por %p175, %p176
      %s179 = sadd.s32 %s178, 1
      %p182 = scmp.eq.s32.totalorder %s24, 1
      %p183 = scmp.ne.s32.totalorder %s178, %s180
      %p184 = scmp.eq.s32.totalorder %s24, 0
      %p185 = por %p183, %p184
      %p186 = scmp.ne.s32.totalorder %s178, %s180
      %p187 = scmp.eq.s32.totalorder %s29, 1
      %p188 = por %p186, %p187
      %p189 = scmp.ne.s32.totalorder %s180, %s181
      %p190 = scmp.eq.s32.totalorder %s29, 0
      %p191 = por %p189, %p190
      %p192 = scmp.ne.s32.totalorder %s180, %s181
      %p193 = scmp.eq.s32.totalorder %s30, 1
      %p194 = por %p192, %p193
      %p196 = scmp.ne.s32.totalorder %s181, %s195
      %p197 = scmp.eq.s32.totalorder %s30, 0
      %p198 = por %p196, %p197
      %s199 = ssub.s32 %s24, %s31
      %p200 = scmp.eq.s32.totalorder %s199, 0
      %s202 = sadd.s32 %s201, 1
      %s203 = scalar_select %p200, %s201, %s202
      %p206 = pneg %p200
      %p207 = scmp.eq.s32.totalorder %s24, 1
      %p208 = por %p206, %p207
      %p209 = scmp.ne.s32.totalorder %s201, %s204
      %p210 = scmp.eq.s32.totalorder %s24, 0
      %p211 = por %p209, %p210
      %p212 = scmp.ne.s32.totalorder %s201, %s204
      %p213 = scmp.eq.s32.totalorder %s29, 1
      %p214 = por %p212, %p213
      %p215 = scmp.ne.s32.totalorder %s204, %s205
      %p216 = scmp.eq.s32.totalorder %s29, 0
      %p217 = por %p215, %p216
      %p218 = scmp.ne.s32.totalorder %s204, %s205
      %p219 = scmp.eq.s32.totalorder %s30, 1
      %p220 = por %p218, %p219
      %p222 = scmp.ne.s32.totalorder %s205, %s221
      %p223 = scmp.eq.s32.totalorder %s30, 0
      %p224 = por %p222, %p223
      %s226 = sadd.s32 %s225, 1
      %p229 = scmp.eq.s32.totalorder %s24, 1
      %p230 = scmp.ne.s32.totalorder %s225, %s227
      %p231 = scmp.eq.s32.totalorder %s24, 0
      %p232 = por %p230, %p231
      %p233 = scmp.ne.s32.totalorder %s225, %s227
      %p234 = scmp.eq.s32.totalorder %s29, 1
      %p235 = por %p233, %p234
      %p236 = scmp.ne.s32.totalorder %s227, %s228
      %p237 = scmp.eq.s32.totalorder %s29, 0
      %p238 = por %p236, %p237
      %p239 = scmp.ne.s32.totalorder %s227, %s228
      %p240 = scmp.eq.s32.totalorder %s30, 1
      %p241 = por %p239, %p240
      %p243 = scmp.ne.s32.totalorder %s228, %s242
      %p244 = scmp.eq.s32.totalorder %s30, 0
      %p245 = por %p243, %p244
      %s247 = sadd.s32 %s246, 1
      %p250 = scmp.eq.s32.totalorder %s24, 1
      %p251 = scmp.ne.s32.totalorder %s246, %s248
      %p252 = scmp.eq.s32.totalorder %s24, 0
      %p253 = por %p251, %p252
      %p254 = scmp.ne.s32.totalorder %s246, %s248
      %p255 = scmp.eq.s32.totalorder %s29, 1
      %p256 = por %p254, %p255
      %p257 = scmp.ne.s32.totalorder %s248, %s249
      %p258 = scmp.eq.s32.totalorder %s29, 0
      %p259 = por %p257, %p258
      %p260 = scmp.ne.s32.totalorder %s248, %s249
      %p261 = scmp.eq.s32.totalorder %s30, 1
      %p262 = por %p260, %p261
      %p264 = scmp.ne.s32.totalorder %s249, %s263
      %p265 = scmp.eq.s32.totalorder %s30, 0
      %p266 = por %p264, %p265
      %s268 = sadd.s32 %s267, 1
      %p271 = scmp.eq.s32.totalorder %s24, 1
      %p272 = scmp.ne.s32.totalorder %s267, %s269
      %p273 = scmp.eq.s32.totalorder %s24, 0
      %p274 = por %p272, %p273
      %p275 = scmp.ne.s32.totalorder %s267, %s269
      %p276 = scmp.eq.s32.totalorder %s29, 1
      %p277 = por %p275, %p276
      %p278 = scmp.ne.s32.totalorder %s269, %s270
      %p279 = scmp.eq.s32.totalorder %s29, 0
      %p280 = por %p278, %p279
      %p281 = scmp.ne.s32.totalorder %s269, %s270
      %p282 = scmp.eq.s32.totalorder %s30, 1
      %p283 = por %p281, %p282
      %p285 = scmp.ne.s32.totalorder %s270, %s284
      %p286 = scmp.eq.s32.totalorder %s30, 0
      %p287 = por %p285, %p286
      %s289 = sadd.s32 %s288, 1
      %p292 = scmp.eq.s32.totalorder %s24, 1
      %p293 = scmp.ne.s32.totalorder %s288, %s290
      %p294 = scmp.eq.s32.totalorder %s24, 0
      %p295 = por %p293, %p294
      %p296 = scmp.ne.s32.totalorder %s288, %s290
      %p297 = scmp.eq.s32.totalorder %s29, 1
      %p298 = por %p296, %p297
      %p299 = scmp.ne.s32.totalorder %s290, %s291
      %p300 = scmp.eq.s32.totalorder %s29, 0
      %p301 = por %p299, %p300
      %p302 = scmp.ne.s32.totalorder %s290, %s291
      %p303 = scmp.eq.s32.totalorder %s30, 1
      %p304 = por %p302, %p303
      %p306 = scmp.ne.s32.totalorder %s291, %s305
      %p307 = scmp.eq.s32.totalorder %s30, 0
      %p308 = por %p306, %p307
      %s310 = sadd.s32 %s309, 1
      %p313 = scmp.eq.s32.totalorder %s24, 1
      %p314 = scmp.ne.s32.totalorder %s309, %s311
      %p315 = scmp.eq.s32.totalorder %s24, 0
      %p316 = por %p314, %p315
      %p317 = scmp.ne.s32.totalorder %s309, %s311
      %p318 = scmp.eq.s32.totalorder %s29, 1
      %p319 = por %p317, %p318
      %p320 = scmp.ne.s32.totalorder %s311, %s312
      %p321 = scmp.eq.s32.totalorder %s29, 0
      %p322 = por %p320, %p321
      %p323 = scmp.ne.s32.totalorder %s311, %s312
      %p324 = scmp.eq.s32.totalorder %s30, 1
      %p325 = por %p323, %p324
      %p327 = scmp.ne.s32.totalorder %s312, %s326
      %p328 = scmp.eq.s32.totalorder %s30, 0
      %p329 = por %p327, %p328
      %s331 = sadd.s32 %s330, 1
      %p334 = scmp.eq.s32.totalorder %s24, 1
      %p335 = scmp.ne.s32.totalorder %s330, %s332
      %p336 = scmp.eq.s32.totalorder %s24, 0
      %p337 = por %p335, %p336
      %p338 = scmp.ne.s32.totalorder %s330, %s332
      %p339 = scmp.eq.s32.totalorder %s29, 1
      %p340 = por %p338, %p339
      %p341 = scmp.ne.s32.totalorder %s332, %s333
      %p342 = scmp.eq.s32.totalorder %s29, 0
      %p343 = por %p341, %p342
      %p344 = scmp.ne.s32.totalorder %s332, %s333
      %p345 = scmp.eq.s32.totalorder %s30, 1
      %p346 = por %p344, %p345
      %p348 = scmp.ne.s32.totalorder %s333, %s347
      %p349 = scmp.eq.s32.totalorder %s30, 0
      %p350 = por %p348, %p349
      %s351 = ssub.s32 %s24, %s31
      %p352 = scmp.eq.s32.totalorder %s351, 0
      %s354 = sadd.s32 %s353, 1
      %s355 = scalar_select %p352, %s353, %s354
      %p358 = pneg %p352
      %p359 = scmp.eq.s32.totalorder %s24, 1
      %p360 = por %p358, %p359
      %p361 = scmp.ne.s32.totalorder %s353, %s356
      %p362 = scmp.eq.s32.totalorder %s24, 0
      %p363 = por %p361, %p362
      %p364 = scmp.ne.s32.totalorder %s353, %s356
      %p365 = scmp.eq.s32.totalorder %s29, 1
      %p366 = por %p364, %p365
      %p367 = scmp.ne.s32.totalorder %s356, %s357
      %p368 = scmp.eq.s32.totalorder %s29, 0
      %p369 = por %p367, %p368
      %p370 = scmp.ne.s32.totalorder %s356, %s357
      %p371 = scmp.eq.s32.totalorder %s30, 1
      %p372 = por %p370, %p371
      %p374 = scmp.ne.s32.totalorder %s357, %s373
      %p375 = scmp.eq.s32.totalorder %s30, 0
      %p376 = por %p374, %p375
      %s377 = ssub.s32 %s24, %s31
      %p378 = scmp.eq.s32.totalorder %s377, 0
      %s380 = sadd.s32 %s379, 1
      %s381 = scalar_select %p378, %s379, %s380
      %p384 = pneg %p378
      %p385 = scmp.eq.s32.totalorder %s24, 1
      %p386 = por %p384, %p385
      %p387 = scmp.ne.s32.totalorder %s379, %s382
      %p388 = scmp.eq.s32.totalorder %s24, 0
      %p389 = por %p387, %p388
      %p390 = scmp.ne.s32.totalorder %s379, %s382
      %p391 = scmp.eq.s32.totalorder %s29, 1
      %p392 = por %p390, %p391
      %p393 = scmp.ne.s32.totalorder %s382, %s383
      %p394 = scmp.eq.s32.totalorder %s29, 0
      %p395 = por %p393, %p394
      %p396 = scmp.ne.s32.totalorder %s382, %s383
      %p397 = scmp.eq.s32.totalorder %s30, 1
      %p398 = por %p396, %p397
      %p400 = scmp.ne.s32.totalorder %s383, %s399
      %p401 = scmp.eq.s32.totalorder %s30, 0
      %p402 = por %p400, %p401
      %s403 = ssub.s32 %s24, %s31
      %p404 = scmp.eq.s32.totalorder %s403, 0
      %s406 = sadd.s32 %s405, 1
      %s407 = scalar_select %p404, %s405, %s406
      %p410 = pneg %p404
      %p411 = scmp.eq.s32.totalorder %s24, 1
      %p412 = por %p410, %p411
      %p413 = scmp.ne.s32.totalorder %s405, %s408
      %p414 = scmp.eq.s32.totalorder %s24, 0
      %p415 = por %p413, %p414
      %p416 = scmp.ne.s32.totalorder %s405, %s408
      %p417 = scmp.eq.s32.totalorder %s29, 1
      %p418 = por %p416, %p417
      %p419 = scmp.ne.s32.totalorder %s408, %s409
      %p420 = scmp.eq.s32.totalorder %s29, 0
      %p421 = por %p419, %p420
      %p422 = scmp.ne.s32.totalorder %s408, %s409
      %p423 = scmp.eq.s32.totalorder %s30, 1
      %p424 = por %p422, %p423
      %p426 = scmp.ne.s32.totalorder %s409, %s425
      %p427 = scmp.eq.s32.totalorder %s30, 0
      %p428 = por %p426, %p427
      %p429 = scmp.le.s32.totalorder 1, %s24
      %p430 = scmp.lt.s32.totalorder %s24, 3
      %p431 = pnand %p429, %p430
      %p432 = pneg %p431
      // Predicated region
      $region9: #{tpu_custom_call.1} parent=5 // pred_check
        _
      $region10: #{tpu_custom_call.1} parent=5 // pred_check_branch
        %434 = sbr.rel (%p431) target = $region12
      $region11: #{tpu_custom_call.1} parent=5 // pred_region
        %s435 = ssub.s32 %s24, 1
        // Predicated region
        $region13: #{tpu_custom_call.1} parent=11 // pred_check
          %p436 = pneg %p45
        $region14: #{tpu_custom_call.1} parent=11 // pred_check_branch
          %438 = sbr.rel (%p436) target = $region16
        $region15: #{tpu_custom_call.1} parent=11 // pred_region
          %s440 = ssub.s32 32, 32
          %441 = vsyncadd [#allocation3], %s440
          %s443 = sshll.u32 %s0, 4
          %s444 = int_to_ptr.vmem [resolvable:$true] %s443
          %446 = dma.vmem_to_smem %s444, 32, [#allocation2], [#allocation3]
        $region16: #{tpu_custom_call.1} parent=11 // pred_fallthru
          _
        // Predicated region
        $region17: #{tpu_custom_call.1} parent=11 // pred_check
          %p447 = pneg %p170
        $region18: #{tpu_custom_call.1} parent=11 // pred_check_branch
          %449 = sbr.rel (%p447) target = $region20
        $region19: #{tpu_custom_call.1} parent=11 // pred_region
          _
        $region20: #{tpu_custom_call.1} parent=11 // pred_fallthru
          _
        // Predicated region
        $region21: #{tpu_custom_call.1} parent=11 // pred_check
          %p450 = pneg %p191
        $region22: #{tpu_custom_call.1} parent=11 // pred_check_branch
          %452 = sbr.rel (%p450) target = $region24
        $region23: #{tpu_custom_call.1} parent=11 // pred_region
          _
        $region24: #{tpu_custom_call.1} parent=11 // pred_fallthru
          _
        // Predicated region
        $region25: #{tpu_custom_call.1} parent=11 // pred_check
          %p453 = pneg %p238
        $region26: #{tpu_custom_call.1} parent=11 // pred_check_branch
          %455 = sbr.rel (%p453) target = $region28
        $region27: #{tpu_custom_call.1} parent=11 // pred_region
          _
        $region28: #{tpu_custom_call.1} parent=11 // pred_fallthru
          _
        // Predicated region
        $region29: #{tpu_custom_call.1} parent=11 // pred_check
          %p456 = pneg %p259
        $region30: #{tpu_custom_call.1} parent=11 // pred_check_branch
          %458 = sbr.rel (%p456) target = $region32
        $region31: #{tpu_custom_call.1} parent=11 // pred_region
          _
        $region32: #{tpu_custom_call.1} parent=11 // pred_fallthru
          _
        // Predicated region
        $region33: #{tpu_custom_call.1} parent=11 // pred_check
          %p459 = pneg %p280
        $region34: #{tpu_custom_call.1} parent=11 // pred_check_branch
          %461 = sbr.rel (%p459) target = $region36
        $region35: #{tpu_custom_call.1} parent=11 // pred_region
          _
        $region36: #{tpu_custom_call.1} parent=11 // pred_fallthru
          _
        // Predicated region
        $region37: #{tpu_custom_call.1} parent=11 // pred_check
          %p462 = pneg %p301
        $region38: #{tpu_custom_call.1} parent=11 // pred_check_branch
          %464 = sbr.rel (%p462) target = $region40
        $region39: #{tpu_custom_call.1} parent=11 // pred_region
          _
        $region40: #{tpu_custom_call.1} parent=11 // pred_fallthru
          _
        // Predicated region
        $region41: #{tpu_custom_call.1} parent=11 // pred_check
          %p465 = pneg %p322
        $region42: #{tpu_custom_call.1} parent=11 // pred_check_branch
          %467 = sbr.rel (%p465) target = $region44
        $region43: #{tpu_custom_call.1} parent=11 // pred_region
          _
        $region44: #{tpu_custom_call.1} parent=11 // pred_fallthru
          _
        // Predicated region
        $region45: #{tpu_custom_call.1} parent=11 // pred_check
          %p468 = pneg %p343
        $region46: #{tpu_custom_call.1} parent=11 // pred_check_branch
          %470 = sbr.rel (%p468) target = $region48
        $region47: #{tpu_custom_call.1} parent=11 // pred_region
          _
        $region48: #{tpu_custom_call.1} parent=11 // pred_fallthru
          _
      $region12: #{tpu_custom_call.1} parent=5 // pred_fallthru
        _
      %p471 = scmp.lt.s32.totalorder %s24, 2
      // Predicated region
      $region49: #{tpu_custom_call.1} parent=5 // pred_check
        %p472 = pneg %p471
      $region50: #{tpu_custom_call.1} parent=5 // pred_check_branch
        %474 = sbr.rel (%p472) target = $region52
      $region51: #{tpu_custom_call.1} parent=5 // pred_region
        // Predicated region
        $region53: #{tpu_custom_call.1} parent=51 // pred_check
          %p475 = pneg %p65
        $region54: #{tpu_custom_call.1} parent=51 // pred_check_branch
          %477 = sbr.rel (%p475) target = $region56
        $region55: #{tpu_custom_call.1} parent=51 // pred_region
          %p478 = scmp.lt.s32.totalorder %s24, 1
          %s479 = scalar_select %p478, %s24, 1
          %s480 = smul.addr %s479, 8
          %s481 = scalar_lea.vmem %s1, %s480
        $region56: #{tpu_custom_call.1} parent=51 // pred_fallthru
          _
        // Predicated region
        $region57: #{tpu_custom_call.1} parent=51 // pred_check
          %p482 = pneg %p91
        $region58: #{tpu_custom_call.1} parent=51 // pred_check_branch
          %484 = sbr.rel (%p482) target = $region60
        $region59: #{tpu_custom_call.1} parent=51 // pred_region
          %p485 = scmp.lt.s32.totalorder %s24, 1
          %s486 = scalar_select %p485, %s24, 1
          %s487 = scalar_lea.vmem %s2, %s486
        $region60: #{tpu_custom_call.1} parent=51 // pred_fallthru
          _
        // Predicated region
        $region61: #{tpu_custom_call.1} parent=51 // pred_check
          %p488 = pneg %p117
        $region62: #{tpu_custom_call.1} parent=51 // pred_check_branch
          %490 = sbr.rel (%p488) target = $region64
        $region63: #{tpu_custom_call.1} parent=51 // pred_region
          %p491 = scmp.lt.s32.totalorder %s24, 1
          %s492 = scalar_select %p491, %s24, 1
          %s493 = smul.addr %s492, 8
          %s494 = scalar_lea.vmem %s3, %s493
        $region64: #{tpu_custom_call.1} parent=51 // pred_fallthru
          _
        // Predicated region
        $region65: #{tpu_custom_call.1} parent=51 // pred_check
          %p495 = pneg %p143
        $region66: #{tpu_custom_call.1} parent=51 // pred_check_branch
          %497 = sbr.rel (%p495) target = $region68
        $region67: #{tpu_custom_call.1} parent=51 // pred_region
          %p498 = scmp.lt.s32.totalorder %s24, 1
          %s499 = scalar_select %p498, %s24, 1
          %s500 = scalar_lea.vmem %s4, %s499
        $region68: #{tpu_custom_call.1} parent=51 // pred_fallthru
          _
        // Predicated region
        $region69: #{tpu_custom_call.1} parent=51 // pred_check
          %p501 = pneg %p211
        $region70: #{tpu_custom_call.1} parent=51 // pred_check_branch
          %503 = sbr.rel (%p501) target = $region72
        $region71: #{tpu_custom_call.1} parent=51 // pred_region
          %p504 = scmp.lt.s32.totalorder %s24, 1
          %s505 = scalar_select %p504, %s24, 1
          %s506 = smul.addr %s505, 2
          %s507 = smul.addr %s506, 8
          %s508 = scalar_lea.vmem %s7, %s507
        $region72: #{tpu_custom_call.1} parent=51 // pred_fallthru
          _
      $region52: #{tpu_custom_call.1} parent=5 // pred_fallthru
        _
      %p509 = scmp.le.s32.totalorder 1, %s24
      %p510 = scmp.lt.s32.totalorder %s24, 3
      %p511 = pnand %p509, %p510
      %p512 = pneg %p511
      // Predicated region
      $region73: #{tpu_custom_call.1} parent=5 // pred_check
        _
      $region74: #{tpu_custom_call.1} parent=5 // pred_check_branch
        %514 = sbr.rel (%p511) target = $region76
      $region75: #{tpu_custom_call.1} parent=5 // pred_region
        %s515 = ssub.s32 %s24, 1
        // Predicated region
        $region77: #{tpu_custom_call.1} parent=75 // pred_check
          %p516 = pneg %p45
        $region78: #{tpu_custom_call.1} parent=75 // pred_check_branch
          %518 = sbr.rel (%p516) target = $region80
        $region79: #{tpu_custom_call.1} parent=75 // pred_region
          %519 = dma.done [#allocation3], 32
        $region80: #{tpu_custom_call.1} parent=75 // pred_fallthru
          _
        %520 = sfence
        %p521 = pneg %p45
        %p522 = pneg %p42
        %p523 = scmp.lt.s32.totalorder %s29, 1
        %s524 = scalar_select %p523, %s29, 1
        %s525 = smul.addr %s524, 8
        %s526 = scalar_lea.vmem %s1, %s525
        %p527 = pneg %p71
        %p528 = pneg %p68
        %p529 = scmp.lt.s32.totalorder %s29, 1
        %s530 = scalar_select %p529, %s29, 1
        %s531 = scalar_lea.vmem %s2, %s530
        %p532 = pneg %p97
        %p533 = pneg %p94
        %p534 = scmp.lt.s32.totalorder %s29, 1
        %s535 = scalar_select %p534, %s29, 1
        %s536 = smul.addr %s535, 8
        %s537 = scalar_lea.vmem %s3, %s536
        %p538 = pneg %p123
        %p539 = pneg %p120
        %p540 = scmp.lt.s32.totalorder %s29, 1
        %s541 = scalar_select %p540, %s29, 1
        %s542 = scalar_lea.vmem %s4, %s541
        %p543 = pneg %p149
        %p544 = pneg %p146
        %p545 = pneg %p170
        %p546 = pneg %p167
        %p547 = pneg %p191
        %p548 = pneg %p188
        %p549 = scmp.lt.s32.totalorder %s29, 1
        %s550 = scalar_select %p549, %s29, 1
        %s551 = smul.addr %s550, 2
        %s552 = smul.addr %s551, 8
        %s553 = scalar_lea.vmem %s7, %s552
        %p554 = pneg %p217
        %p555 = pneg %p214
        %p556 = pneg %p238
        %p557 = pneg %p235
        %p558 = pneg %p259
        %p559 = pneg %p256
        %p560 = pneg %p280
        %p561 = pneg %p277
        %p562 = pneg %p301
        %p563 = pneg %p298
        %p564 = pneg %p322
        %p565 = pneg %p319
        %p566 = pneg %p343
        %p567 = pneg %p340
        %p568 = pneg %p369
        %p569 = pneg %p366
        %p570 = scmp.lt.s32.totalorder %s29, 1
        %s571 = scalar_select %p570, %s29, 1
        %s572 = smul.addr %s571, 2
        %s573 = smul.addr %s572, 8
        %s574 = scalar_lea.vmem %s14, %s573
        %p575 = pneg %p395
        %p576 = pneg %p392
        %p577 = scmp.lt.s32.totalorder %s29, 1
        %s578 = scalar_select %p577, %s29, 1
        %s579 = smul.addr %s578, 2
        %s580 = smul.addr %s579, 8
        %s581 = scalar_lea.vmem %s15, %s580
        %p582 = pneg %p421
        %p583 = pneg %p418
        %p584 = scmp.lt.s32.totalorder %s29, 1
        %s585 = scalar_select %p584, %s29, 1
        %s586 = scalar_lea.vmem %s16, %s585
        %p587 = scmp.lt.s32.totalorder %s29, 1
        %s588 = scalar_select %p587, %s29, 1
        %s589 = smul.addr %s588, 8
        %s590 = scalar_lea.vmem %s1, %s589
        %p591 = scmp.lt.s32.totalorder %s29, 1
        %s592 = scalar_select %p591, %s29, 1
        %s593 = scalar_lea.vmem %s2, %s592
        %p594 = scmp.lt.s32.totalorder %s29, 1
        %s595 = scalar_select %p594, %s29, 1
        %s596 = smul.addr %s595, 8
        %s597 = scalar_lea.vmem %s3, %s596
        %p598 = scmp.lt.s32.totalorder %s29, 1
        %s599 = scalar_select %p598, %s29, 1
        %s600 = scalar_lea.vmem %s4, %s599
        %p601 = scmp.lt.s32.totalorder %s29, 1
        %s602 = scalar_select %p601, %s29, 1
        %s603 = smul.addr %s602, 2
        %s604 = smul.addr %s603, 8
        %s605 = scalar_lea.vmem %s7, %s604
        %p606 = scmp.lt.s32.totalorder %s29, 1
        %s607 = scalar_select %p606, %s29, 1
        %s608 = smul.addr %s607, 2
        %s609 = smul.addr %s608, 8
        %s610 = scalar_lea.vmem %s14, %s609
        %p611 = scmp.lt.s32.totalorder %s29, 1
        %s612 = scalar_select %p611, %s29, 1
        %s613 = smul.addr %s612, 2
        %s614 = smul.addr %s613, 8
        %s615 = scalar_lea.vmem %s15, %s614
        %p616 = scmp.lt.s32.totalorder %s29, 1
        %s617 = scalar_select %p616, %s29, 1
        %s618 = scalar_lea.vmem %s16, %s617
        %v619 = vld [vmem:[%s590] sm:$0xff]
        %v620 = vld [vmem:[%s593] sm:$0x1]
        %v621 = vld [vmem:[%s597] sm:$0xff]
        %v622 = vld [vmem:[%s600] sm:$0x1]
        %v623 = vld [vmem:[%s5] sm:$0x1]
        %v624 = vld [vmem:[%s605] sm:$0xff]
        %v625 = vld [vmem:[%s605 + $0x8] sm:$0xff]
        %v626 = vlaneseq
        %v627 = vand.u32 %v626, 127
        %vm628 = vcmp.lt.s32.totalorder %v627, 68
        %v629 = vsel %vm628, 1, 0
        %v630 = vcvt.s32.f32 %v629
        %632 = vset.pattern.permute.xlu0 0
        %633 = vperm.xlu0 %632, %v619
        %v634 = vpop.permute.xlu0 %633
        %v637 = vlaneseq
        %v638 = vshrl.u32 %v637, 7
        %v639 = vsub.s32 0, %v638
        %v640 = vrot.slane %v623, %v639
        %v642 = vsub.f32 %v634, %v640
        %v643 = vmul.f32 %v642, %v642
        %v644 = vsub.f32 0.0, %v643
        %s645 = sld [smem:[#allocation2]]
        %v646 = vstv %s645
        %v647 = vmul.f32 %v644, %v646
        %v648 = vmul.f32 %v647, 1.442695
        %v649 = vpow.pop %v648
        %s650 = sld [smem:[#allocation2 + $0x1]]
        %v651 = vstv %s650
        %v652 = vmul.f32 %v644, %v651
        %v653 = vmul.f32 %v652, 1.442695
        %v654 = vpow.pop %v653
        %v655 = vrot.slane %v649, 4
        %v656 = vadd.f32 %v649, %v655
        %v657 = vrot.slane %v656, 2
        %v658 = vadd.f32 %v656, %v657
        %v659 = vrot.slane %v658, 1
        %v660 = vadd.f32 %v658, %v659
        %v661 = vadd.f32 %v660, 1e-08
        %v662 = vrcp.pop %v661
        %v664 = vlaneseq
        %v665 = vshrl.u32 %v664, 7
        %v666 = vsub.s32 0, %v665
        %v667 = vrot.slane %v620, %v666
        %v669 = vsub.f32 %v634, %v667
        %v670 = vmul.f32 %v669, %v669
        %v671 = vsub.f32 0.0, %v670
        %s672 = sld [smem:[#allocation2 + $0x2]]
        %v673 = vstv %s672
        %v674 = vmul.f32 %v671, %v673
        %v675 = vmul.f32 %v674, 1.442695
        %v676 = vpow.pop %v675
        %s677 = sld [smem:[#allocation2 + $0x3]]
        %v678 = vstv %s677
        %v679 = vmul.f32 %v671, %v678
        %v680 = vmul.f32 %v679, 1.442695
        %v681 = vpow.pop %v680
        %vm682 = vcmask 64512
        %v683 = vsel %vm682, %v676, 0.0
        %684 = vadd.xlane.f32.xlu0 %v683
        %v685 = vpop.xlane.xlu0 %684
        %v686 = vrot.slane %v685, 4
        %v687 = vadd.f32 %v685, %v686
        %v688 = vrot.slane %v687, 2
        %v689 = vadd.f32 %v687, %v688
        %v690 = vrot.slane %v689, 1
        %v691 = vadd.f32 %v689, %v690
        %v692 = vmul.f32 %v691, 0.015625
        %s693 = sld [smem:[#allocation2 + $0x25]]
        %v694 = vstv %s693
        %v695 = vmul.f32 %v644, %v694
        %v696 = vmul.f32 %v695, 1.442695
        %v697 = vpow.pop %v696
        %v698 = vmul.f32 %v697, %v630
        %699 = vadd.xlane.f32.xlu0 %v698
        %v700 = vpop.xlane.xlu0 %699
        %v701 = vmul.f32 %v700, 0.014705882
        %s702 = sld [smem:[#allocation2 + $0x26]]
        %s703 = sld [smem:[#allocation2 + $0x27]]
        %v704 = vstv %s703
        %v705 = vmul.f32 %v704, %v701
        %v706 = vstv %s702
        %v707 = vadd.f32 %v706, %v705
        %v708 = vld [vmem:[%s8] sm:$0x1]
        %s709 = scalar_lea.vmem %s8, 1
        %v710 = vld [vmem:[%s709] sm:$0x1]
        %s711 = scalar_lea.vmem %s8, 2
        %v712 = vld [vmem:[%s711] sm:$0x1]
        %v713 = vld [vmem:[%s10] sm:$0xff]
        %s714 = scalar_lea.vmem %s10, 8
        %v715 = vld [vmem:[%s714] sm:$0xff]
        %s716 = scalar_lea.vmem %s10, 16
        %v717 = vld [vmem:[%s716] sm:$0xff]
        %v718 = vld [vmem:[%s9] sm:$0xff]
        %v719 = vld [vmem:[%s11] sm:$0xff]
        %v720 = vld [vmem:[%s11 + $0x8] sm:$0xff]
        %v721 = vld [vmem:[%s12] sm:$0xff]
        %v722 = vld [vmem:[%s12 + $0x8] sm:$0xff]
        %724 = vset.pattern.permute.xlu0 0
        %725 = vperm.xlu0 %724, %v621
        %v726 = vpop.permute.xlu0 %725
        %v728 = vmul.f32 %v726, %v654
        %v729 = vrot.slane %v728, 4
        %v730 = vadd.f32 %v728, %v729
        %v731 = vrot.slane %v730, 2
        %v732 = vadd.f32 %v730, %v731
        %v733 = vrot.slane %v732, 1
        %v734 = vadd.f32 %v732, %v733
        %v735 = vmul.f32 %v734, %v662
        %v736 = vmul.f32 %v726, %v681
        %v737 = vsel %vm682, %v736, 0.0
        %738 = vadd.xlane.f32.xlu0 %v737
        %v739 = vpop.xlane.xlu0 %738
        %v740 = vrot.slane %v739, 4
        %v741 = vadd.f32 %v739, %v740
        %v742 = vrot.slane %v741, 2
        %v743 = vadd.f32 %v741, %v742
        %v744 = vrot.slane %v743, 1
        %v745 = vadd.f32 %v743, %v744
        %v746 = vmul.f32 %v745, 0.015625
        %v747 = vmul.f32 %v710, %v692
        %v748 = vadd.f32 %v708, %v747
        %v749 = vmul.f32 %v712, %v746
        %v750 = vadd.f32 %v748, %v749
        %v752 = vlaneseq
        %v753 = vshrl.u32 %v752, 7
        %v754 = vsub.s32 0, %v753
        %v755 = vrot.slane %v750, %v754
        %v757 = vmul.f32 %v718, %v755
        %v758 = vsel %vm682, %v757, 0.0
        %759 = vadd.xlane.f32.xlu0 %v758
        %v760 = vpop.xlane.xlu0 %759
        %v761 = vadd.f32 %v713, %v760
        %763 = vset.pattern.permute.xlu0 0
        %764 = vperm.xlu0 %763, %v715
        %v765 = vpop.permute.xlu0 %764
        %v767 = vmul.f32 %v765, %v660
        %769 = vset.pattern.permute.xlu0 0
        %770 = vperm.xlu0 %769, %v761
        %v771 = vpop.permute.xlu0 %770
        %v773 = vadd.f32 %v771, %v767
        %775 = vset.pattern.permute.xlu0 0
        %776 = vperm.xlu0 %775, %v717
        %v777 = vpop.permute.xlu0 %776
        %v779 = vmul.f32 %v777, %v735
        %v780 = vadd.f32 %v773, %v779
        %v781 = vsub.f32 0.0, %v780
        %v782 = vmul.f32 %v781, 1.442695
        %v783 = vpow.pop %v782
        %v784 = vadd.f32 %v783, 1.0
        %v785 = vrcp.pop %v784
        %v786 = vmul.f32 %v785, %v630
        %787 = vrot.lane.b32.xlu0 %v786, 2
        %v788 = vpop.permute.xlu0 %787
        %vm789 = vcmp.ge.s32.totalorder %v627, 2
        %v790 = vsel %vm789, 1, 0
        %v791 = vcvt.s32.f32 %v790
        %v792 = vmul.f32 %v788, %v791
        %793 = vrot.lane.b32.xlu0 %v786, 1
        %v794 = vpop.permute.xlu0 %793
        %vm795 = vcmp.ge.s32.totalorder %v627, 1
        %v796 = vsel %vm795, 1, 0
        %v797 = vcvt.s32.f32 %v796
        %v798 = vmul.f32 %v794, %v797
        %799 = vrot.lane.b32.xlu0 %v786, 127
        %v800 = vpop.permute.xlu0 %799
        %vm801 = vcmp.lt.s32.totalorder %v627, 127
        %v802 = vsel %vm801, 1, 0
        %v803 = vcvt.s32.f32 %v802
        %v804 = vmul.f32 %v800, %v803
        %805 = vrot.lane.b32.xlu0 %v786, 126
        %v806 = vpop.permute.xlu0 %805
        %vm807 = vcmp.lt.s32.totalorder %v627, 126
        %v808 = vsel %vm807, 1, 0
        %v809 = vcvt.s32.f32 %v808
        %v810 = vmul.f32 %v806, %v809
        %812 = vset.pattern.permute.xlu0 0
        %813 = vperm.xlu0 %812, %v721
        %v814 = vpop.permute.xlu0 %813
        %817 = vset.pattern.permute.xlu0 0
        %818 = vperm.xlu0 %817, %v722
        %v819 = vpop.permute.xlu0 %818
        %vm821 = vcmask 326656
        %v823 = vsel %vm821, %v719, 0
        %v826 = vsel %vm821, %v720, 0
        %828 = vmatprep.subr.mxu0 0.0
        %829 = vmatpush1.msra.mxu0 0.0
        %830 = vmatprep.subr.mxu0 0.0
        %831 = vmatpush1.msra.mxu0 0.0
        %832 = vmatprep.subr.mxu0 0.0
        %833 = vmatpush1.msra.mxu0 0.0
        %834 = vmatprep.subr.mxu0 0.0
        %835 = vmatpush1.msra.mxu0 0.0
        %836 = vmatprep.subr.mxu0 0.0
        %837 = vmatpush1.msra.mxu0 0.0
        %838 = vmatprep.subr.mxu0 0.0
        %839 = vmatpush1.msra.mxu0 0.0
        %840 = vmatprep.subr.mxu0 0.0
        %841 = vmatpush1.msra.mxu0 0.0
        %842 = vmatprep.subr.mxu0 0.0
        %843 = vmatpush1.msra.mxu0 0.0
        %844 = vmatprep.subr.mxu0 0.0
        %845 = vmatpush1.msra.mxu0 0.0
        %846 = vmatprep.subr.mxu0 0.0
        %847 = vmatpush1.msra.mxu0 0.0
        %848 = vmatprep.subr.mxu0 0.0
        %849 = vmatpush1.msra.mxu0 0.0
        %850 = vmatprep.subr.mxu0 0.0
        %851 = vmatpush1.msra.mxu0 %v810
        %852 = vmatprep.subr.mxu0 0.0
        %853 = vmatpush1.msra.mxu0 %v804
        %854 = vmatprep.subr.mxu0 0.0
        %855 = vmatpush1.msra.mxu0 %v786
        %856 = vmatprep.subr.mxu0 0.0
        %857 = vmatpush1.msra.mxu0 %v798
        %858 = vmatprep.subr.mxu0 0.0
        %859 = vmatpush1.msra.mxu0 %v792
        %860 = vmatprep.subr.mxu0 0.0
        %861 = vmatpush2.msra.mxu0 0.0
        %862 = vmatprep.subr.mxu0 0.0
        %863 = vmatpush2.msra.mxu0 0.0
        %864 = vmatprep.subr.mxu0 0.0
        %865 = vmatpush2.msra.mxu0 0.0
        %866 = vmatprep.subr.mxu0 0.0
        %867 = vmatpush2.msra.mxu0 0.0
        %868 = vmatprep.subr.mxu0 0.0
        %869 = vmatpush2.msra.mxu0 0.0
        %870 = vmatprep.subr.mxu0 0.0
        %871 = vmatpush2.msra.mxu0 0.0
        %872 = vmatprep.subr.mxu0 0.0
        %873 = vmatpush2.msra.mxu0 0.0
        %874 = vmatprep.subr.mxu0 0.0
        %875 = vmatpush2.msra.mxu0 0.0
        %876 = vmatprep.subr.mxu0 0.0
        %877 = vmatpush2.msra.mxu0 0.0
        %878 = vmatprep.subr.mxu0 0.0
        %879 = vmatpush2.msra.mxu0 0.0
        %880 = vmatprep.subr.mxu0 0.0
        %881 = vmatpush2.msra.mxu0 0.0
        %882 = vmatprep.subr.mxu0 0.0
        %883 = vmatpush2.msra.mxu0 0.0
        %884 = vmatprep.subr.mxu0 0.0
        %885 = vmatpush2.msra.mxu0 0.0
        %886 = vmatprep.subr.mxu0 0.0
        %887 = vmatpush2.msra.mxu0 0.0
        %888 = vmatprep.subr.mxu0 0.0
        %889 = vmatpush2.msra.mxu0 0.0
        %890 = vmatprep.subr.mxu0 0.0
        %891 = vmatpush2.msra.mxu0 0.0
        %892 = vmatprep.mubr.f32.mxu0 0.0
        %893 = vmatmul.mubr.f32.gmra.mxu0 %v823
        %v894 = vpop.f32.mrf.mxu0
        %v895 = vadd.f32 %v814, %v894
        %v896 = vpop.f32.mrf.mxu0
        %897 = vmatprep.mubr.f32.mxu0 0.0
        %898 = vmatmul.mubr.f32.gmra.mxu0 %v826
        %v899 = vpop.f32.mrf.mxu0
        %v900 = vadd.f32 %v819, %v899
        %v901 = vpop.f32.mrf.mxu0
        %902 = vdwg.mxu0
        %v903 = vmax.f32 %v895, 0.0
        %v904 = vmax.f32 %v900, 0.0
        %v905 = vmul.f32 %v903, %v630
        %v906 = vmul.f32 %v904, %v630
        %v907 = vmul.f32 %v707, %v654
        %v908 = vrot.slane %v907, 4
        %v909 = vadd.f32 %v907, %v908
        %v910 = vrot.slane %v909, 2
        %v911 = vadd.f32 %v909, %v910
        %v912 = vrot.slane %v911, 1
        %v913 = vadd.f32 %v911, %v912
        %v914 = vmul.f32 %v913, %v662
        %v915 = vmul.f32 %v707, %v681
        %v916 = vsel %vm682, %v915, 0.0
        %917 = vadd.xlane.f32.xlu0 %v916
        %v918 = vpop.xlane.xlu0 %917
        %v919 = vrot.slane %v918, 4
        %v920 = vadd.f32 %v918, %v919
        %v921 = vrot.slane %v920, 2
        %v922 = vadd.f32 %v920, %v921
        %v923 = vrot.slane %v922, 1
        %v924 = vadd.f32 %v922, %v923
        %v925 = vmul.f32 %v924, 0.015625
        %v926 = vmul.f32 %v712, %v925
        %v927 = vadd.f32 %v748, %v926
        %v929 = vlaneseq
        %v930 = vshrl.u32 %v929, 7
        %v931 = vsub.s32 0, %v930
        %v932 = vrot.slane %v927, %v931
        %v934 = vmul.f32 %v718, %v932
        %v935 = vsel %vm682, %v934, 0.0
        %936 = vadd.xlane.f32.xlu0 %v935
        %v937 = vpop.xlane.xlu0 %936
        %v938 = vadd.f32 %v713, %v937
        %940 = vset.pattern.permute.xlu0 0
        %941 = vperm.xlu0 %940, %v938
        %v942 = vpop.permute.xlu0 %941
        %v944 = vadd.f32 %v942, %v767
        %v945 = vmul.f32 %v777, %v914
        %v946 = vadd.f32 %v944, %v945
        %v947 = vmul.f32 %v946, %v630
        %948 = vrot.lane.b32.xlu0 %v947, 2
        %v949 = vpop.permute.xlu0 %948
        %v950 = vmul.f32 %v949, %v791
        %951 = vrot.lane.b32.xlu0 %v947, 1
        %v952 = vpop.permute.xlu0 %951
        %v953 = vmul.f32 %v952, %v797
        %954 = vrot.lane.b32.xlu0 %v947, 127
        %v955 = vpop.permute.xlu0 %954
        %v956 = vmul.f32 %v955, %v803
        %957 = vrot.lane.b32.xlu0 %v947, 126
        %v958 = vpop.permute.xlu0 %957
        %v959 = vmul.f32 %v958, %v809
        %960 = vmatprep.subr.mxu0 0.0
        %961 = vmatpush1.msra.mxu0 0.0
        %962 = vmatprep.subr.mxu0 0.0
        %963 = vmatpush1.msra.mxu0 0.0
        %964 = vmatprep.subr.mxu0 0.0
        %965 = vmatpush1.msra.mxu0 0.0
        %966 = vmatprep.subr.mxu0 0.0
        %967 = vmatpush1.msra.mxu0 0.0
        %968 = vmatprep.subr.mxu0 0.0
        %969 = vmatpush1.msra.mxu0 0.0
        %970 = vmatprep.subr.mxu0 0.0
        %971 = vmatpush1.msra.mxu0 0.0
        %972 = vmatprep.subr.mxu0 0.0
        %973 = vmatpush1.msra.mxu0 0.0
        %974 = vmatprep.subr.mxu0 0.0
        %975 = vmatpush1.msra.mxu0 0.0
        %976 = vmatprep.subr.mxu0 0.0
        %977 = vmatpush1.msra.mxu0 0.0
        %978 = vmatprep.subr.mxu0 0.0
        %979 = vmatpush1.msra.mxu0 0.0
        %980 = vmatprep.subr.mxu0 0.0
        %981 = vmatpush1.msra.mxu0 0.0
        %982 = vmatprep.subr.mxu0 0.0
        %983 = vmatpush1.msra.mxu0 %v959
        %984 = vmatprep.subr.mxu0 0.0
        %985 = vmatpush1.msra.mxu0 %v956
        %986 = vmatprep.subr.mxu0 0.0
        %987 = vmatpush1.msra.mxu0 %v947
        %988 = vmatprep.subr.mxu0 0.0
        %989 = vmatpush1.msra.mxu0 %v953
        %990 = vmatprep.subr.mxu0 0.0
        %991 = vmatpush1.msra.mxu0 %v950
        %992 = vmatprep.subr.mxu0 0.0
        %993 = vmatpush2.msra.mxu0 0.0
        %994 = vmatprep.subr.mxu0 0.0
        %995 = vmatpush2.msra.mxu0 0.0
        %996 = vmatprep.subr.mxu0 0.0
        %997 = vmatpush2.msra.mxu0 0.0
        %998 = vmatprep.subr.mxu0 0.0
        %999 = vmatpush2.msra.mxu0 0.0
        %1000 = vmatprep.subr.mxu0 0.0
        %1001 = vmatpush2.msra.mxu0 0.0
        %1002 = vmatprep.subr.mxu0 0.0
        %1003 = vmatpush2.msra.mxu0 0.0
        %1004 = vmatprep.subr.mxu0 0.0
        %1005 = vmatpush2.msra.mxu0 0.0
        %1006 = vmatprep.subr.mxu0 0.0
        %1007 = vmatpush2.msra.mxu0 0.0
        %1008 = vmatprep.subr.mxu0 0.0
        %1009 = vmatpush2.msra.mxu0 0.0
        %1010 = vmatprep.subr.mxu0 0.0
        %1011 = vmatpush2.msra.mxu0 0.0
        %1012 = vmatprep.subr.mxu0 0.0
        %1013 = vmatpush2.msra.mxu0 0.0
        %1014 = vmatprep.subr.mxu0 0.0
        %1015 = vmatpush2.msra.mxu0 0.0
        %1016 = vmatprep.subr.mxu0 0.0
        %1017 = vmatpush2.msra.mxu0 0.0
        %1018 = vmatprep.subr.mxu0 0.0
        %1019 = vmatpush2.msra.mxu0 0.0
        %1020 = vmatprep.subr.mxu0 0.0
        %1021 = vmatpush2.msra.mxu0 0.0
        %1022 = vmatprep.subr.mxu0 0.0
        %1023 = vmatpush2.msra.mxu0 0.0
        %1024 = vmatprep.mubr.f32.mxu0 0.0
        %1025 = vmatmul.mubr.f32.gmra.mxu0 %v823
        %v1026 = vpop.f32.mrf.mxu0
        %v1027 = vadd.f32 %v814, %v1026
        %v1028 = vpop.f32.mrf.mxu0
        %1029 = vmatprep.mubr.f32.mxu0 0.0
        %1030 = vmatmul.mubr.f32.gmra.mxu0 %v826
        %v1031 = vpop.f32.mrf.mxu0
        %v1032 = vadd.f32 %v819, %v1031
        %v1033 = vpop.f32.mrf.mxu0
        %1034 = vdwg.mxu0
        %v1035 = vmax.f32 %v1027, 0.0
        %v1036 = vmax.f32 %v1032, 0.0
        %v1037 = vmul.f32 %v1035, %v630
        %v1038 = vmul.f32 %v1036, %v630
        %v1039 = vld [vmem:[%s6] sm:$0xff]
        %v1040 = vld [vmem:[%s6 + $0x8] sm:$0xff]
        %v1041 = vld [vmem:[%s6 + $0x10] sm:$0xff]
        %v1042 = vld [vmem:[%s6 + $0x18] sm:$0xff]
        %v1043 = vld [vmem:[%s6 + $0x20] sm:$0xff]
        %v1044 = vld [vmem:[%s6 + $0x28] sm:$0xff]
        %v1045 = vld [vmem:[%s6 + $0x30] sm:$0xff]
        %v1046 = vld [vmem:[%s6 + $0x38] sm:$0xff]
        %v1047 = vld [vmem:[%s6 + $0x40] sm:$0xff]
        %v1048 = vld [vmem:[%s6 + $0x48] sm:$0xff]
        %v1049 = vld [vmem:[%s6 + $0x50] sm:$0xff]
        %v1050 = vld [vmem:[%s6 + $0x58] sm:$0xff]
        %v1051 = vld [vmem:[%s6 + $0x60] sm:$0xff]
        %v1052 = vld [vmem:[%s6 + $0x68] sm:$0xff]
        %v1053 = vld [vmem:[%s6 + $0x70] sm:$0xff]
        %v1054 = vld [vmem:[%s6 + $0x78] sm:$0xff]
        %v1055 = vlaneseq
        %v1056 = vshrl.u32 %v1055, 7
        %v1057 = vadd.s32 %v1056, 8
        %v1058 = vadd.s32 %v1056, 16
        %v1059 = vadd.s32 %v1056, 24
        %v1060 = vadd.s32 %v1056, 32
        %v1061 = vadd.s32 %v1056, 40
        %v1062 = vadd.s32 %v1056, 48
        %v1063 = vadd.s32 %v1056, 56
        %v1064 = vadd.s32 %v1056, 64
        %v1065 = vadd.s32 %v1056, 72
        %v1066 = vadd.s32 %v1056, 80
        %v1067 = vadd.s32 %v1056, 88
        %v1068 = vadd.s32 %v1056, 96
        %v1069 = vadd.s32 %v1056, 104
        %v1070 = vadd.s32 %v1056, 112
        %v1071 = vadd.s32 %v1056, 120
        %vm1072 = vcmp.lt.s32.totalorder %v1056, 68
        %vm1073 = vcmp.lt.s32.totalorder %v1057, 68
        %vm1074 = vcmp.lt.s32.totalorder %v1058, 68
        %vm1075 = vcmp.lt.s32.totalorder %v1059, 68
        %vm1076 = vcmp.lt.s32.totalorder %v1060, 68
        %vm1077 = vcmp.lt.s32.totalorder %v1061, 68
        %vm1078 = vcmp.lt.s32.totalorder %v1062, 68
        %vm1079 = vcmp.lt.s32.totalorder %v1063, 68
        %vm1080 = vcmp.lt.s32.totalorder %v1064, 68
        %vm1081 = vcmp.lt.s32.totalorder %v1065, 68
        %vm1082 = vcmp.lt.s32.totalorder %v1066, 68
        %vm1083 = vcmp.lt.s32.totalorder %v1067, 68
        %vm1084 = vcmp.lt.s32.totalorder %v1068, 68
        %vm1085 = vcmp.lt.s32.totalorder %v1069, 68
        %vm1086 = vcmp.lt.s32.totalorder %v1070, 68
        %vm1087 = vcmp.lt.s32.totalorder %v1071, 68
        %v1088 = vsel %vm1072, 1, 0
        %v1089 = vsel %vm1073, 1, 0
        %v1090 = vsel %vm1074, 1, 0
        %v1091 = vsel %vm1075, 1, 0
        %v1092 = vsel %vm1076, 1, 0
        %v1093 = vsel %vm1077, 1, 0
        %v1094 = vsel %vm1078, 1, 0
        %v1095 = vsel %vm1079, 1, 0
        %v1096 = vsel %vm1080, 1, 0
        %v1097 = vsel %vm1081, 1, 0
        %v1098 = vsel %vm1082, 1, 0
        %v1099 = vsel %vm1083, 1, 0
        %v1100 = vsel %vm1084, 1, 0
        %v1101 = vsel %vm1085, 1, 0
        %v1102 = vsel %vm1086, 1, 0
        %v1103 = vsel %vm1087, 1, 0
        %v1104 = vcvt.s32.f32 %v1088
        %v1105 = vcvt.s32.f32 %v1089
        %v1106 = vcvt.s32.f32 %v1090
        %v1107 = vcvt.s32.f32 %v1091
        %v1108 = vcvt.s32.f32 %v1092
        %v1109 = vcvt.s32.f32 %v1093
        %v1110 = vcvt.s32.f32 %v1094
        %v1111 = vcvt.s32.f32 %v1095
        %v1112 = vcvt.s32.f32 %v1096
        %v1113 = vcvt.s32.f32 %v1097
        %v1114 = vcvt.s32.f32 %v1098
        %v1115 = vcvt.s32.f32 %v1099
        %v1116 = vcvt.s32.f32 %v1100
        %v1117 = vcvt.s32.f32 %v1101
        %v1118 = vcvt.s32.f32 %v1102
        %v1119 = vcvt.s32.f32 %v1103
        %1121 = vset.pattern.permute.xlu0 0
        %1122 = vperm.xlu0 %1121, %v1039
        %v1123 = vpop.permute.xlu0 %1122
        %1126 = vset.pattern.permute.xlu0 0
        %1127 = vperm.xlu0 %1126, %v1040
        %v1128 = vpop.permute.xlu0 %1127
        %1131 = vset.pattern.permute.xlu0 0
        %1132 = vperm.xlu0 %1131, %v1041
        %v1133 = vpop.permute.xlu0 %1132
        %1136 = vset.pattern.permute.xlu0 0
        %1137 = vperm.xlu0 %1136, %v1042
        %v1138 = vpop.permute.xlu0 %1137
        %1141 = vset.pattern.permute.xlu0 0
        %1142 = vperm.xlu0 %1141, %v1043
        %v1143 = vpop.permute.xlu0 %1142
        %1146 = vset.pattern.permute.xlu0 0
        %1147 = vperm.xlu0 %1146, %v1044
        %v1148 = vpop.permute.xlu0 %1147
        %1151 = vset.pattern.permute.xlu0 0
        %1152 = vperm.xlu0 %1151, %v1045
        %v1153 = vpop.permute.xlu0 %1152
        %1156 = vset.pattern.permute.xlu0 0
        %1157 = vperm.xlu0 %1156, %v1046
        %v1158 = vpop.permute.xlu0 %1157
        %1161 = vset.pattern.permute.xlu0 0
        %1162 = vperm.xlu0 %1161, %v1047
        %v1163 = vpop.permute.xlu0 %1162
        %1166 = vset.pattern.permute.xlu0 0
        %1167 = vperm.xlu0 %1166, %v1048
        %v1168 = vpop.permute.xlu0 %1167
        %1171 = vset.pattern.permute.xlu0 0
        %1172 = vperm.xlu0 %1171, %v1049
        %v1173 = vpop.permute.xlu0 %1172
        %1176 = vset.pattern.permute.xlu0 0
        %1177 = vperm.xlu0 %1176, %v1050
        %v1178 = vpop.permute.xlu0 %1177
        %1181 = vset.pattern.permute.xlu0 0
        %1182 = vperm.xlu0 %1181, %v1051
        %v1183 = vpop.permute.xlu0 %1182
        %1186 = vset.pattern.permute.xlu0 0
        %1187 = vperm.xlu0 %1186, %v1052
        %v1188 = vpop.permute.xlu0 %1187
        %1191 = vset.pattern.permute.xlu0 0
        %1192 = vperm.xlu0 %1191, %v1053
        %v1193 = vpop.permute.xlu0 %1192
        %1196 = vset.pattern.permute.xlu0 0
        %1197 = vperm.xlu0 %1196, %v1054
        %v1198 = vpop.permute.xlu0 %1197
        %v1200 = vsub.f32 %v1123, %v640
        %v1201 = vsub.f32 %v1128, %v640
        %v1202 = vsub.f32 %v1133, %v640
        %v1203 = vsub.f32 %v1138, %v640
        %v1204 = vsub.f32 %v1143, %v640
        %v1205 = vsub.f32 %v1148, %v640
        %v1206 = vsub.f32 %v1153, %v640
        %v1207 = vsub.f32 %v1158, %v640
        %v1208 = vsub.f32 %v1163, %v640
        %v1209 = vsub.f32 %v1168, %v640
        %v1210 = vsub.f32 %v1173, %v640
        %v1211 = vsub.f32 %v1178, %v640
        %v1212 = vsub.f32 %v1183, %v640
        %v1213 = vsub.f32 %v1188, %v640
        %v1214 = vsub.f32 %v1193, %v640
        %v1215 = vsub.f32 %v1198, %v640
        %v1216 = vmul.f32 %v1200, %v1200
        %v1217 = vmul.f32 %v1201, %v1201
        %v1218 = vmul.f32 %v1202, %v1202
        %v1219 = vmul.f32 %v1203, %v1203
        %v1220 = vmul.f32 %v1204, %v1204
        %v1221 = vmul.f32 %v1205, %v1205
        %v1222 = vmul.f32 %v1206, %v1206
        %v1223 = vmul.f32 %v1207, %v1207
        %v1224 = vmul.f32 %v1208, %v1208
        %v1225 = vmul.f32 %v1209, %v1209
        %v1226 = vmul.f32 %v1210, %v1210
        %v1227 = vmul.f32 %v1211, %v1211
        %v1228 = vmul.f32 %v1212, %v1212
        %v1229 = vmul.f32 %v1213, %v1213
        %v1230 = vmul.f32 %v1214, %v1214
        %v1231 = vmul.f32 %v1215, %v1215
        %v1232 = vsub.f32 0.0, %v1216
        %v1233 = vsub.f32 0.0, %v1217
        %v1234 = vsub.f32 0.0, %v1218
        %v1235 = vsub.f32 0.0, %v1219
        %v1236 = vsub.f32 0.0, %v1220
        %v1237 = vsub.f32 0.0, %v1221
        %v1238 = vsub.f32 0.0, %v1222
        %v1239 = vsub.f32 0.0, %v1223
        %v1240 = vsub.f32 0.0, %v1224
        %v1241 = vsub.f32 0.0, %v1225
        %v1242 = vsub.f32 0.0, %v1226
        %v1243 = vsub.f32 0.0, %v1227
        %v1244 = vsub.f32 0.0, %v1228
        %v1245 = vsub.f32 0.0, %v1229
        %v1246 = vsub.f32 0.0, %v1230
        %v1247 = vsub.f32 0.0, %v1231
        %s1248 = sld [smem:[#allocation2 + $0x28]]
        %v1249 = vstv %s1248
        %v1250 = vmul.f32 %v1232, %v1249
        %v1251 = vmul.f32 %v1233, %v1249
        %v1252 = vmul.f32 %v1234, %v1249
        %v1253 = vmul.f32 %v1235, %v1249
        %v1254 = vmul.f32 %v1236, %v1249
        %v1255 = vmul.f32 %v1237, %v1249
        %v1256 = vmul.f32 %v1238, %v1249
        %v1257 = vmul.f32 %v1239, %v1249
        %v1258 = vmul.f32 %v1240, %v1249
        %v1259 = vmul.f32 %v1241, %v1249
        %v1260 = vmul.f32 %v1242, %v1249
        %v1261 = vmul.f32 %v1243, %v1249
        %v1262 = vmul.f32 %v1244, %v1249
        %v1263 = vmul.f32 %v1245, %v1249
        %v1264 = vmul.f32 %v1246, %v1249
        %v1265 = vmul.f32 %v1247, %v1249
        %v1266 = vmul.f32 %v1250, 1.442695
        %v1267 = vpow.pop %v1266
        %v1268 = vmul.f32 %v1251, 1.442695
        %v1269 = vpow.pop %v1268
        %v1270 = vmul.f32 %v1252, 1.442695
        %v1271 = vpow.pop %v1270
        %v1272 = vmul.f32 %v1253, 1.442695
        %v1273 = vpow.pop %v1272
        %v1274 = vmul.f32 %v1254, 1.442695
        %v1275 = vpow.pop %v1274
        %v1276 = vmul.f32 %v1255, 1.442695
        %v1277 = vpow.pop %v1276
        %v1278 = vmul.f32 %v1256, 1.442695
        %v1279 = vpow.pop %v1278
        %v1280 = vmul.f32 %v1257, 1.442695
        %v1281 = vpow.pop %v1280
        %v1282 = vmul.f32 %v1258, 1.442695
        %v1283 = vpow.pop %v1282
        %v1284 = vmul.f32 %v1259, 1.442695
        %v1285 = vpow.pop %v1284
        %v1286 = vmul.f32 %v1260, 1.442695
        %v1287 = vpow.pop %v1286
        %v1288 = vmul.f32 %v1261, 1.442695
        %v1289 = vpow.pop %v1288
        %v1290 = vmul.f32 %v1262, 1.442695
        %v1291 = vpow.pop %v1290
        %v1292 = vmul.f32 %v1263, 1.442695
        %v1293 = vpow.pop %v1292
        %v1294 = vmul.f32 %v1264, 1.442695
        %v1295 = vpow.pop %v1294
        %v1296 = vmul.f32 %v1265, 1.442695
        %v1297 = vpow.pop %v1296
        %v1298 = vmul.f32 %v1267, %v1104
        %v1299 = vmul.f32 %v1269, %v1105
        %v1300 = vmul.f32 %v1271, %v1106
        %v1301 = vmul.f32 %v1273, %v1107
        %v1302 = vmul.f32 %v1275, %v1108
        %v1303 = vmul.f32 %v1277, %v1109
        %v1304 = vmul.f32 %v1279, %v1110
        %v1305 = vmul.f32 %v1281, %v1111
        %v1306 = vmul.f32 %v1283, %v1112
        %v1307 = vmul.f32 %v1285, %v1113
        %v1308 = vmul.f32 %v1287, %v1114
        %v1309 = vmul.f32 %v1289, %v1115
        %v1310 = vmul.f32 %v1291, %v1116
        %v1311 = vmul.f32 %v1293, %v1117
        %v1312 = vmul.f32 %v1295, %v1118
        %v1313 = vmul.f32 %v1297, %v1119
        %v1314 = vadd.f32 %v1298, %v1299
        %v1315 = vadd.f32 %v1314, %v1300
        %v1316 = vadd.f32 %v1315, %v1301
        %v1317 = vadd.f32 %v1316, %v1302
        %v1318 = vadd.f32 %v1317, %v1303
        %v1319 = vadd.f32 %v1318, %v1304
        %v1320 = vadd.f32 %v1319, %v1305
        %v1321 = vadd.f32 %v1320, %v1306
        %v1322 = vadd.f32 %v1321, %v1307
        %v1323 = vadd.f32 %v1322, %v1308
        %v1324 = vadd.f32 %v1323, %v1309
        %v1325 = vadd.f32 %v1324, %v1310
        %v1326 = vadd.f32 %v1325, %v1311
        %v1327 = vadd.f32 %v1326, %v1312
        %v1328 = vadd.f32 %v1327, %v1313
        %v1329 = vrot.slane %v1328, 4
        %v1330 = vadd.f32 %v1328, %v1329
        %v1331 = vrot.slane %v1330, 2
        %v1332 = vadd.f32 %v1330, %v1331
        %v1333 = vrot.slane %v1332, 1
        %v1334 = vadd.f32 %v1332, %v1333
        %v1335 = vadd.f32 %v1334, 0.0
        %v1336 = vmul.f32 %v1335, 0.014705882
        %v1337 = vld [vmem:[%s13] sm:$0xff]
        %v1338 = vld [vmem:[%s13 + $0x8] sm:$0xff]
        %s1339 = scalar_lea.vmem %s13, 16
        %v1340 = vld [vmem:[%s1339] sm:$0xff]
        %v1341 = vld [vmem:[%s1339 + $0x8] sm:$0xff]
        %1343 = vset.pattern.permute.xlu0 0
        %1344 = vperm.xlu0 %1343, %v1340
        %v1345 = vpop.permute.xlu0 %1344
        %1348 = vset.pattern.permute.xlu0 0
        %1349 = vperm.xlu0 %1348, %v1341
        %v1350 = vpop.permute.xlu0 %1349
        %v1352 = vmul.f32 %v1345, %v1336
        %v1353 = vmul.f32 %v1350, %v1336
        %1355 = vset.pattern.permute.xlu0 0
        %1356 = vperm.xlu0 %1355, %v1337
        %v1357 = vpop.permute.xlu0 %1356
        %1360 = vset.pattern.permute.xlu0 0
        %1361 = vperm.xlu0 %1360, %v1338
        %v1362 = vpop.permute.xlu0 %1361
        %v1364 = vadd.f32 %v1357, %v1352
        %v1365 = vadd.f32 %v1362, %v1353
        %v1366 = vmul.f32 %v1364, %v630
        %v1367 = vmul.f32 %v1365, %v630
        %1369 = vset.pattern.permute.xlu0 0
        %1370 = vperm.xlu0 %1369, %v624
        %v1371 = vpop.permute.xlu0 %1370
        %1374 = vset.pattern.permute.xlu0 0
        %1375 = vperm.xlu0 %1374, %v625
        %v1376 = vpop.permute.xlu0 %1375
        %v1378 = vsub.f32 %v1371, %v640
        %v1379 = vsub.f32 %v1376, %v640
        %v1380 = vmul.f32 %v1378, %v1378
        %v1381 = vmul.f32 %v1379, %v1379
        %s1382 = sld [smem:[#allocation2 + $0x29]]
        %v1383 = vsub.f32 0.0, %v1380
        %v1384 = vsub.f32 0.0, %v1381
        %s1385 = sld [smem:[#allocation2 + $0x2b]]
        %v1386 = vstv %s1385
        %v1387 = vmul.f32 %v1383, %v1386
        %v1388 = vmul.f32 %v1384, %v1386
        %v1389 = vmul.f32 %v1387, 1.442695
        %v1390 = vpow.pop %v1389
        %v1391 = vmul.f32 %v1388, 1.442695
        %v1392 = vpow.pop %v1391
        %v1393 = vlaneseq
        %v1394 = vshrl.u32 %v1393, 7
        %v1395 = vsub.s32 0, %v1394
        %v1396 = vrot.slane %v905, %v1395
        %v1397 = vmul.f32 %v1396, %v1390
        %v1398 = vmul.f32 %v1396, %v1392
        %1399 = vadd.xlane.f32.xlu0 %v1397
        %v1400 = vpop.xlane.xlu0 %1399
        %1401 = vadd.xlane.f32.xlu0 %v1398
        %v1402 = vpop.xlane.xlu0 %1401
        %s1403 = sld [smem:[#allocation2 + $0x3b]]
        %v1404 = vstv %s1403
        %v1405 = vmul.f32 %v1404, %v1400
        %v1406 = vmul.f32 %v1404, %v1402
        %v1407 = vadd.f32 %v1405, 0.0
        %v1408 = vadd.f32 %v1406, 0.0
        %s1409 = sld [smem:[#allocation2 + $0x2c]]
        %v1410 = vstv %s1409
        %v1411 = vmul.f32 %v1383, %v1410
        %v1412 = vmul.f32 %v1384, %v1410
        %v1413 = vmul.f32 %v1411, 1.442695
        %v1414 = vpow.pop %v1413
        %v1415 = vmul.f32 %v1412, 1.442695
        %v1416 = vpow.pop %v1415
        %v1417 = vlaneseq
        %v1418 = vshrl.u32 %v1417, 7
        %v1419 = vsub.s32 1, %v1418
        %v1420 = vrot.slane %v905, %v1419
        %v1421 = vmul.f32 %v1420, %v1414
        %v1422 = vmul.f32 %v1420, %v1416
        %1423 = vadd.xlane.f32.xlu0 %v1421
        %v1424 = vpop.xlane.xlu0 %1423
        %1425 = vadd.xlane.f32.xlu0 %v1422
        %v1426 = vpop.xlane.xlu0 %1425
        %s1427 = sld [smem:[#allocation2 + $0x3c]]
        %v1428 = vstv %s1427
        %v1429 = vmul.f32 %v1428, %v1424
        %v1430 = vmul.f32 %v1428, %v1426
        %v1431 = vadd.f32 %v1407, %v1429
        %v1432 = vadd.f32 %v1408, %v1430
        %s1433 = sld [smem:[#allocation2 + $0x2d]]
        %v1434 = vstv %s1433
        %v1435 = vmul.f32 %v1383, %v1434
        %v1436 = vmul.f32 %v1384, %v1434
        %v1437 = vmul.f32 %v1435, 1.442695
        %v1438 = vpow.pop %v1437
        %v1439 = vmul.f32 %v1436, 1.442695
        %v1440 = vpow.pop %v1439
        %v1441 = vlaneseq
        %v1442 = vshrl.u32 %v1441, 7
        %v1443 = vsub.s32 2, %v1442
        %v1444 = vrot.slane %v905, %v1443
        %v1445 = vmul.f32 %v1444, %v1438
        %v1446 = vmul.f32 %v1444, %v1440
        %1447 = vadd.xlane.f32.xlu0 %v1445
        %v1448 = vpop.xlane.xlu0 %1447
        %1449 = vadd.xlane.f32.xlu0 %v1446
        %v1450 = vpop.xlane.xlu0 %1449
        %s1451 = sld [smem:[#allocation2 + $0x3d]]
        %v1452 = vstv %s1451
        %v1453 = vmul.f32 %v1452, %v1448
        %v1454 = vmul.f32 %v1452, %v1450
        %v1455 = vadd.f32 %v1431, %v1453
        %v1456 = vadd.f32 %v1432, %v1454
        %s1457 = sld [smem:[#allocation2 + $0x2e]]
        %v1458 = vstv %s1457
        %v1459 = vmul.f32 %v1383, %v1458
        %v1460 = vmul.f32 %v1384, %v1458
        %v1461 = vmul.f32 %v1459, 1.442695
        %v1462 = vpow.pop %v1461
        %v1463 = vmul.f32 %v1460, 1.442695
        %v1464 = vpow.pop %v1463
        %v1465 = vlaneseq
        %v1466 = vshrl.u32 %v1465, 7
        %v1467 = vsub.s32 3, %v1466
        %v1468 = vrot.slane %v905, %v1467
        %v1469 = vmul.f32 %v1468, %v1462
        %v1470 = vmul.f32 %v1468, %v1464
        %1471 = vadd.xlane.f32.xlu0 %v1469
        %v1472 = vpop.xlane.xlu0 %1471
        %1473 = vadd.xlane.f32.xlu0 %v1470
        %v1474 = vpop.xlane.xlu0 %1473
        %s1475 = sld [smem:[#allocation2 + $0x3e]]
        %v1476 = vstv %s1475
        %v1477 = vmul.f32 %v1476, %v1472
        %v1478 = vmul.f32 %v1476, %v1474
        %v1479 = vadd.f32 %v1455, %v1477
        %v1480 = vadd.f32 %v1456, %v1478
        %s1481 = sld [smem:[#allocation2 + $0x2f]]
        %v1482 = vstv %s1481
        %v1483 = vmul.f32 %v1383, %v1482
        %v1484 = vmul.f32 %v1384, %v1482
        %v1485 = vmul.f32 %v1483, 1.442695
        %v1486 = vpow.pop %v1485
        %v1487 = vmul.f32 %v1484, 1.442695
        %v1488 = vpow.pop %v1487
        %v1489 = vlaneseq
        %v1490 = vshrl.u32 %v1489, 7
        %v1491 = vsub.s32 4, %v1490
        %v1492 = vrot.slane %v905, %v1491
        %v1493 = vmul.f32 %v1492, %v1486
        %v1494 = vmul.f32 %v1492, %v1488
        %1495 = vadd.xlane.f32.xlu0 %v1493
        %v1496 = vpop.xlane.xlu0 %1495
        %1497 = vadd.xlane.f32.xlu0 %v1494
        %v1498 = vpop.xlane.xlu0 %1497
        %s1499 = sld [smem:[#allocation2 + $0x3f]]
        %v1500 = vstv %s1499
        %v1501 = vmul.f32 %v1500, %v1496
        %v1502 = vmul.f32 %v1500, %v1498
        %v1503 = vadd.f32 %v1479, %v1501
        %v1504 = vadd.f32 %v1480, %v1502
        %s1505 = sld [smem:[#allocation2 + $0x30]]
        %v1506 = vstv %s1505
        %v1507 = vmul.f32 %v1383, %v1506
        %v1508 = vmul.f32 %v1384, %v1506
        %v1509 = vmul.f32 %v1507, 1.442695
        %v1510 = vpow.pop %v1509
        %v1511 = vmul.f32 %v1508, 1.442695
        %v1512 = vpow.pop %v1511
        %v1513 = vlaneseq
        %v1514 = vshrl.u32 %v1513, 7
        %v1515 = vsub.s32 5, %v1514
        %v1516 = vrot.slane %v905, %v1515
        %v1517 = vmul.f32 %v1516, %v1510
        %v1518 = vmul.f32 %v1516, %v1512
        %1519 = vadd.xlane.f32.xlu0 %v1517
        %v1520 = vpop.xlane.xlu0 %1519
        %1521 = vadd.xlane.f32.xlu0 %v1518
        %v1522 = vpop.xlane.xlu0 %1521
        %s1523 = sld [smem:[#allocation2 + $0x40]]
        %v1524 = vstv %s1523
        %v1525 = vmul.f32 %v1524, %v1520
        %v1526 = vmul.f32 %v1524, %v1522
        %v1527 = vadd.f32 %v1503, %v1525
        %v1528 = vadd.f32 %v1504, %v1526
        %s1529 = sld [smem:[#allocation2 + $0x31]]
        %v1530 = vstv %s1529
        %v1531 = vmul.f32 %v1383, %v1530
        %v1532 = vmul.f32 %v1384, %v1530
        %v1533 = vmul.f32 %v1531, 1.442695
        %v1534 = vpow.pop %v1533
        %v1535 = vmul.f32 %v1532, 1.442695
        %v1536 = vpow.pop %v1535
        %v1537 = vlaneseq
        %v1538 = vshrl.u32 %v1537, 7
        %v1539 = vsub.s32 6, %v1538
        %v1540 = vrot.slane %v905, %v1539
        %v1541 = vmul.f32 %v1540, %v1534
        %v1542 = vmul.f32 %v1540, %v1536
        %1543 = vadd.xlane.f32.xlu0 %v1541
        %v1544 = vpop.xlane.xlu0 %1543
        %1545 = vadd.xlane.f32.xlu0 %v1542
        %v1546 = vpop.xlane.xlu0 %1545
        %s1547 = sld [smem:[#allocation2 + $0x41]]
        %v1548 = vstv %s1547
        %v1549 = vmul.f32 %v1548, %v1544
        %v1550 = vmul.f32 %v1548, %v1546
        %v1551 = vadd.f32 %v1527, %v1549
        %v1552 = vadd.f32 %v1528, %v1550
        %s1553 = sld [smem:[#allocation2 + $0x32]]
        %v1554 = vstv %s1553
        %v1555 = vmul.f32 %v1383, %v1554
        %v1556 = vmul.f32 %v1384, %v1554
        %v1557 = vmul.f32 %v1555, 1.442695
        %v1558 = vpow.pop %v1557
        %v1559 = vmul.f32 %v1556, 1.442695
        %v1560 = vpow.pop %v1559
        %v1561 = vlaneseq
        %v1562 = vshrl.u32 %v1561, 7
        %v1563 = vsub.s32 7, %v1562
        %v1564 = vrot.slane %v905, %v1563
        %v1565 = vmul.f32 %v1564, %v1558
        %v1566 = vmul.f32 %v1564, %v1560
        %1567 = vadd.xlane.f32.xlu0 %v1565
        %v1568 = vpop.xlane.xlu0 %1567
        %1569 = vadd.xlane.f32.xlu0 %v1566
        %v1570 = vpop.xlane.xlu0 %1569
        %s1571 = sld [smem:[#allocation2 + $0x42]]
        %v1572 = vstv %s1571
        %v1573 = vmul.f32 %v1572, %v1568
        %v1574 = vmul.f32 %v1572, %v1570
        %v1575 = vadd.f32 %v1551, %v1573
        %v1576 = vadd.f32 %v1552, %v1574
        %s1577 = sld [smem:[#allocation2 + $0x33]]
        %v1578 = vstv %s1577
        %v1579 = vmul.f32 %v1383, %v1578
        %v1580 = vmul.f32 %v1384, %v1578
        %v1581 = vmul.f32 %v1579, 1.442695
        %v1582 = vpow.pop %v1581
        %v1583 = vmul.f32 %v1580, 1.442695
        %v1584 = vpow.pop %v1583
        %v1585 = vlaneseq
        %v1586 = vshrl.u32 %v1585, 7
        %v1587 = vsub.s32 0, %v1586
        %v1588 = vrot.slane %v906, %v1587
        %v1589 = vmul.f32 %v1588, %v1582
        %v1590 = vmul.f32 %v1588, %v1584
        %1591 = vadd.xlane.f32.xlu0 %v1589
        %v1592 = vpop.xlane.xlu0 %1591
        %1593 = vadd.xlane.f32.xlu0 %v1590
        %v1594 = vpop.xlane.xlu0 %1593
        %s1595 = sld [smem:[#allocation2 + $0x43]]
        %v1596 = vstv %s1595
        %v1597 = vmul.f32 %v1596, %v1592
        %v1598 = vmul.f32 %v1596, %v1594
        %v1599 = vadd.f32 %v1575, %v1597
        %v1600 = vadd.f32 %v1576, %v1598
        %s1601 = sld [smem:[#allocation2 + $0x34]]
        %v1602 = vstv %s1601
        %v1603 = vmul.f32 %v1383, %v1602
        %v1604 = vmul.f32 %v1384, %v1602
        %v1605 = vmul.f32 %v1603, 1.442695
        %v1606 = vpow.pop %v1605
        %v1607 = vmul.f32 %v1604, 1.442695
        %v1608 = vpow.pop %v1607
        %v1609 = vlaneseq
        %v1610 = vshrl.u32 %v1609, 7
        %v1611 = vsub.s32 1, %v1610
        %v1612 = vrot.slane %v906, %v1611
        %v1613 = vmul.f32 %v1612, %v1606
        %v1614 = vmul.f32 %v1612, %v1608
        %1615 = vadd.xlane.f32.xlu0 %v1613
        %v1616 = vpop.xlane.xlu0 %1615
        %1617 = vadd.xlane.f32.xlu0 %v1614
        %v1618 = vpop.xlane.xlu0 %1617
        %s1619 = sld [smem:[#allocation2 + $0x44]]
        %v1620 = vstv %s1619
        %v1621 = vmul.f32 %v1620, %v1616
        %v1622 = vmul.f32 %v1620, %v1618
        %v1623 = vadd.f32 %v1599, %v1621
        %v1624 = vadd.f32 %v1600, %v1622
        %s1625 = sld [smem:[#allocation2 + $0x35]]
        %v1626 = vstv %s1625
        %v1627 = vmul.f32 %v1383, %v1626
        %v1628 = vmul.f32 %v1384, %v1626
        %v1629 = vmul.f32 %v1627, 1.442695
        %v1630 = vpow.pop %v1629
        %v1631 = vmul.f32 %v1628, 1.442695
        %v1632 = vpow.pop %v1631
        %v1633 = vlaneseq
        %v1634 = vshrl.u32 %v1633, 7
        %v1635 = vsub.s32 2, %v1634
        %v1636 = vrot.slane %v906, %v1635
        %v1637 = vmul.f32 %v1636, %v1630
        %v1638 = vmul.f32 %v1636, %v1632
        %1639 = vadd.xlane.f32.xlu0 %v1637
        %v1640 = vpop.xlane.xlu0 %1639
        %1641 = vadd.xlane.f32.xlu0 %v1638
        %v1642 = vpop.xlane.xlu0 %1641
        %s1643 = sld [smem:[#allocation2 + $0x45]]
        %v1644 = vstv %s1643
        %v1645 = vmul.f32 %v1644, %v1640
        %v1646 = vmul.f32 %v1644, %v1642
        %v1647 = vadd.f32 %v1623, %v1645
        %v1648 = vadd.f32 %v1624, %v1646
        %s1649 = sld [smem:[#allocation2 + $0x36]]
        %v1650 = vstv %s1649
        %v1651 = vmul.f32 %v1383, %v1650
        %v1652 = vmul.f32 %v1384, %v1650
        %v1653 = vmul.f32 %v1651, 1.442695
        %v1654 = vpow.pop %v1653
        %v1655 = vmul.f32 %v1652, 1.442695
        %v1656 = vpow.pop %v1655
        %v1657 = vlaneseq
        %v1658 = vshrl.u32 %v1657, 7
        %v1659 = vsub.s32 3, %v1658
        %v1660 = vrot.slane %v906, %v1659
        %v1661 = vmul.f32 %v1660, %v1654
        %v1662 = vmul.f32 %v1660, %v1656
        %1663 = vadd.xlane.f32.xlu0 %v1661
        %v1664 = vpop.xlane.xlu0 %1663
        %1665 = vadd.xlane.f32.xlu0 %v1662
        %v1666 = vpop.xlane.xlu0 %1665
        %s1667 = sld [smem:[#allocation2 + $0x46]]
        %v1668 = vstv %s1667
        %v1669 = vmul.f32 %v1668, %v1664
        %v1670 = vmul.f32 %v1668, %v1666
        %v1671 = vadd.f32 %v1647, %v1669
        %v1672 = vadd.f32 %v1648, %v1670
        %s1673 = sld [smem:[#allocation2 + $0x37]]
        %v1674 = vstv %s1673
        %v1675 = vmul.f32 %v1383, %v1674
        %v1676 = vmul.f32 %v1384, %v1674
        %v1677 = vmul.f32 %v1675, 1.442695
        %v1678 = vpow.pop %v1677
        %v1679 = vmul.f32 %v1676, 1.442695
        %v1680 = vpow.pop %v1679
        %v1681 = vlaneseq
        %v1682 = vshrl.u32 %v1681, 7
        %v1683 = vsub.s32 4, %v1682
        %v1684 = vrot.slane %v906, %v1683
        %v1685 = vmul.f32 %v1684, %v1678
        %v1686 = vmul.f32 %v1684, %v1680
        %1687 = vadd.xlane.f32.xlu0 %v1685
        %v1688 = vpop.xlane.xlu0 %1687
        %1689 = vadd.xlane.f32.xlu0 %v1686
        %v1690 = vpop.xlane.xlu0 %1689
        %s1691 = sld [smem:[#allocation2 + $0x47]]
        %v1692 = vstv %s1691
        %v1693 = vmul.f32 %v1692, %v1688
        %v1694 = vmul.f32 %v1692, %v1690
        %v1695 = vadd.f32 %v1671, %v1693
        %v1696 = vadd.f32 %v1672, %v1694
        %s1697 = sld [smem:[#allocation2 + $0x38]]
        %v1698 = vstv %s1697
        %v1699 = vmul.f32 %v1383, %v1698
        %v1700 = vmul.f32 %v1384, %v1698
        %v1701 = vmul.f32 %v1699, 1.442695
        %v1702 = vpow.pop %v1701
        %v1703 = vmul.f32 %v1700, 1.442695
        %v1704 = vpow.pop %v1703
        %v1705 = vlaneseq
        %v1706 = vshrl.u32 %v1705, 7
        %v1707 = vsub.s32 5, %v1706
        %v1708 = vrot.slane %v906, %v1707
        %v1709 = vmul.f32 %v1708, %v1702
        %v1710 = vmul.f32 %v1708, %v1704
        %1711 = vadd.xlane.f32.xlu0 %v1709
        %v1712 = vpop.xlane.xlu0 %1711
        %1713 = vadd.xlane.f32.xlu0 %v1710
        %v1714 = vpop.xlane.xlu0 %1713
        %s1715 = sld [smem:[#allocation2 + $0x48]]
        %v1716 = vstv %s1715
        %v1717 = vmul.f32 %v1716, %v1712
        %v1718 = vmul.f32 %v1716, %v1714
        %v1719 = vadd.f32 %v1695, %v1717
        %v1720 = vadd.f32 %v1696, %v1718
        %s1721 = sld [smem:[#allocation2 + $0x39]]
        %v1722 = vstv %s1721
        %v1723 = vmul.f32 %v1383, %v1722
        %v1724 = vmul.f32 %v1384, %v1722
        %v1725 = vmul.f32 %v1723, 1.442695
        %v1726 = vpow.pop %v1725
        %v1727 = vmul.f32 %v1724, 1.442695
        %v1728 = vpow.pop %v1727
        %v1729 = vlaneseq
        %v1730 = vshrl.u32 %v1729, 7
        %v1731 = vsub.s32 6, %v1730
        %v1732 = vrot.slane %v906, %v1731
        %v1733 = vmul.f32 %v1732, %v1726
        %v1734 = vmul.f32 %v1732, %v1728
        %1735 = vadd.xlane.f32.xlu0 %v1733
        %v1736 = vpop.xlane.xlu0 %1735
        %1737 = vadd.xlane.f32.xlu0 %v1734
        %v1738 = vpop.xlane.xlu0 %1737
        %s1739 = sld [smem:[#allocation2 + $0x49]]
        %v1740 = vstv %s1739
        %v1741 = vmul.f32 %v1740, %v1736
        %v1742 = vmul.f32 %v1740, %v1738
        %v1743 = vadd.f32 %v1719, %v1741
        %v1744 = vadd.f32 %v1720, %v1742
        %s1745 = sld [smem:[#allocation2 + $0x3a]]
        %v1746 = vstv %s1745
        %v1747 = vmul.f32 %v1383, %v1746
        %v1748 = vmul.f32 %v1384, %v1746
        %v1749 = vmul.f32 %v1747, 1.442695
        %v1750 = vpow.pop %v1749
        %v1751 = vmul.f32 %v1748, 1.442695
        %v1752 = vpow.pop %v1751
        %v1753 = vlaneseq
        %v1754 = vshrl.u32 %v1753, 7
        %v1755 = vsub.s32 7, %v1754
        %v1756 = vrot.slane %v906, %v1755
        %v1757 = vmul.f32 %v1756, %v1750
        %v1758 = vmul.f32 %v1756, %v1752
        %1759 = vadd.xlane.f32.xlu0 %v1757
        %v1760 = vpop.xlane.xlu0 %1759
        %1761 = vadd.xlane.f32.xlu0 %v1758
        %v1762 = vpop.xlane.xlu0 %1761
        %s1763 = sld [smem:[#allocation2 + $0x4a]]
        %v1764 = vstv %s1763
        %v1765 = vmul.f32 %v1764, %v1760
        %v1766 = vmul.f32 %v1764, %v1762
        %v1767 = vadd.f32 %v1743, %v1765
        %v1768 = vadd.f32 %v1744, %v1766
        %v1769 = vstv %s1382
        %v1770 = vadd.f32 %v1769, %v1767
        %v1771 = vadd.f32 %v1769, %v1768
        %s1772 = sld [smem:[#allocation2 + $0x2a]]
        %s1773 = sld [smem:[#allocation2 + $0x4b]]
        %v1774 = vstv %s1773
        %v1775 = vmul.f32 %v1383, %v1774
        %v1776 = vmul.f32 %v1384, %v1774
        %v1777 = vmul.f32 %v1775, 1.442695
        %v1778 = vpow.pop %v1777
        %v1779 = vmul.f32 %v1776, 1.442695
        %v1780 = vpow.pop %v1779
        %v1781 = vlaneseq
        %v1782 = vshrl.u32 %v1781, 7
        %v1783 = vsub.s32 0, %v1782
        %v1784 = vrot.slane %v1037, %v1783
        %v1785 = vmul.f32 %v1784, %v1778
        %v1786 = vmul.f32 %v1784, %v1780
        %1787 = vadd.xlane.f32.xlu0 %v1785
        %v1788 = vpop.xlane.xlu0 %1787
        %1789 = vadd.xlane.f32.xlu0 %v1786
        %v1790 = vpop.xlane.xlu0 %1789
        %s1791 = sld [smem:[#allocation2 + $0x6b]]
        %v1792 = vstv %s1791
        %v1793 = vmul.f32 %v1792, %v1788
        %v1794 = vmul.f32 %v1792, %v1790
        %v1795 = vadd.f32 %v1793, 0.0
        %v1796 = vadd.f32 %v1794, 0.0
        %s1797 = sld [smem:[#allocation2 + $0x4c]]
        %v1798 = vstv %s1797
        %v1799 = vmul.f32 %v1383, %v1798
        %v1800 = vmul.f32 %v1384, %v1798
        %v1801 = vmul.f32 %v1799, 1.442695
        %v1802 = vpow.pop %v1801
        %v1803 = vmul.f32 %v1800, 1.442695
        %v1804 = vpow.pop %v1803
        %v1805 = vlaneseq
        %v1806 = vshrl.u32 %v1805, 7
        %v1807 = vsub.s32 1, %v1806
        %v1808 = vrot.slane %v1037, %v1807
        %v1809 = vmul.f32 %v1808, %v1802
        %v1810 = vmul.f32 %v1808, %v1804
        %1811 = vadd.xlane.f32.xlu0 %v1809
        %v1812 = vpop.xlane.xlu0 %1811
        %1813 = vadd.xlane.f32.xlu0 %v1810
        %v1814 = vpop.xlane.xlu0 %1813
        %s1815 = sld [smem:[#allocation2 + $0x6c]]
        %v1816 = vstv %s1815
        %v1817 = vmul.f32 %v1816, %v1812
        %v1818 = vmul.f32 %v1816, %v1814
        %v1819 = vadd.f32 %v1795, %v1817
        %v1820 = vadd.f32 %v1796, %v1818
        %s1821 = sld [smem:[#allocation2 + $0x4d]]
        %v1822 = vstv %s1821
        %v1823 = vmul.f32 %v1383, %v1822
        %v1824 = vmul.f32 %v1384, %v1822
        %v1825 = vmul.f32 %v1823, 1.442695
        %v1826 = vpow.pop %v1825
        %v1827 = vmul.f32 %v1824, 1.442695
        %v1828 = vpow.pop %v1827
        %v1829 = vlaneseq
        %v1830 = vshrl.u32 %v1829, 7
        %v1831 = vsub.s32 2, %v1830
        %v1832 = vrot.slane %v1037, %v1831
        %v1833 = vmul.f32 %v1832, %v1826
        %v1834 = vmul.f32 %v1832, %v1828
        %1835 = vadd.xlane.f32.xlu0 %v1833
        %v1836 = vpop.xlane.xlu0 %1835
        %1837 = vadd.xlane.f32.xlu0 %v1834
        %v1838 = vpop.xlane.xlu0 %1837
        %s1839 = sld [smem:[#allocation2 + $0x6d]]
        %v1840 = vstv %s1839
        %v1841 = vmul.f32 %v1840, %v1836
        %v1842 = vmul.f32 %v1840, %v1838
        %v1843 = vadd.f32 %v1819, %v1841
        %v1844 = vadd.f32 %v1820, %v1842
        %s1845 = sld [smem:[#allocation2 + $0x4e]]
        %v1846 = vstv %s1845
        %v1847 = vmul.f32 %v1383, %v1846
        %v1848 = vmul.f32 %v1384, %v1846
        %v1849 = vmul.f32 %v1847, 1.442695
        %v1850 = vpow.pop %v1849
        %v1851 = vmul.f32 %v1848, 1.442695
        %v1852 = vpow.pop %v1851
        %v1853 = vlaneseq
        %v1854 = vshrl.u32 %v1853, 7
        %v1855 = vsub.s32 3, %v1854
        %v1856 = vrot.slane %v1037, %v1855
        %v1857 = vmul.f32 %v1856, %v1850
        %v1858 = vmul.f32 %v1856, %v1852
        %1859 = vadd.xlane.f32.xlu0 %v1857
        %v1860 = vpop.xlane.xlu0 %1859
        %1861 = vadd.xlane.f32.xlu0 %v1858
        %v1862 = vpop.xlane.xlu0 %1861
        %s1863 = sld [smem:[#allocation2 + $0x6e]]
        %v1864 = vstv %s1863
        %v1865 = vmul.f32 %v1864, %v1860
        %v1866 = vmul.f32 %v1864, %v1862
        %v1867 = vadd.f32 %v1843, %v1865
        %v1868 = vadd.f32 %v1844, %v1866
        %s1869 = sld [smem:[#allocation2 + $0x4f]]
        %v1870 = vstv %s1869
        %v1871 = vmul.f32 %v1383, %v1870
        %v1872 = vmul.f32 %v1384, %v1870
        %v1873 = vmul.f32 %v1871, 1.442695
        %v1874 = vpow.pop %v1873
        %v1875 = vmul.f32 %v1872, 1.442695
        %v1876 = vpow.pop %v1875
        %v1877 = vlaneseq
        %v1878 = vshrl.u32 %v1877, 7
        %v1879 = vsub.s32 4, %v1878
        %v1880 = vrot.slane %v1037, %v1879
        %v1881 = vmul.f32 %v1880, %v1874
        %v1882 = vmul.f32 %v1880, %v1876
        %1883 = vadd.xlane.f32.xlu0 %v1881
        %v1884 = vpop.xlane.xlu0 %1883
        %1885 = vadd.xlane.f32.xlu0 %v1882
        %v1886 = vpop.xlane.xlu0 %1885
        %s1887 = sld [smem:[#allocation2 + $0x6f]]
        %v1888 = vstv %s1887
        %v1889 = vmul.f32 %v1888, %v1884
        %v1890 = vmul.f32 %v1888, %v1886
        %v1891 = vadd.f32 %v1867, %v1889
        %v1892 = vadd.f32 %v1868, %v1890
        %s1893 = sld [smem:[#allocation2 + $0x50]]
        %v1894 = vstv %s1893
        %v1895 = vmul.f32 %v1383, %v1894
        %v1896 = vmul.f32 %v1384, %v1894
        %v1897 = vmul.f32 %v1895, 1.442695
        %v1898 = vpow.pop %v1897
        %v1899 = vmul.f32 %v1896, 1.442695
        %v1900 = vpow.pop %v1899
        %v1901 = vlaneseq
        %v1902 = vshrl.u32 %v1901, 7
        %v1903 = vsub.s32 5, %v1902
        %v1904 = vrot.slane %v1037, %v1903
        %v1905 = vmul.f32 %v1904, %v1898
        %v1906 = vmul.f32 %v1904, %v1900
        %1907 = vadd.xlane.f32.xlu0 %v1905
        %v1908 = vpop.xlane.xlu0 %1907
        %1909 = vadd.xlane.f32.xlu0 %v1906
        %v1910 = vpop.xlane.xlu0 %1909
        %s1911 = sld [smem:[#allocation2 + $0x70]]
        %v1912 = vstv %s1911
        %v1913 = vmul.f32 %v1912, %v1908
        %v1914 = vmul.f32 %v1912, %v1910
        %v1915 = vadd.f32 %v1891, %v1913
        %v1916 = vadd.f32 %v1892, %v1914
        %s1917 = sld [smem:[#allocation2 + $0x51]]
        %v1918 = vstv %s1917
        %v1919 = vmul.f32 %v1383, %v1918
        %v1920 = vmul.f32 %v1384, %v1918
        %v1921 = vmul.f32 %v1919, 1.442695
        %v1922 = vpow.pop %v1921
        %v1923 = vmul.f32 %v1920, 1.442695
        %v1924 = vpow.pop %v1923
        %v1925 = vlaneseq
        %v1926 = vshrl.u32 %v1925, 7
        %v1927 = vsub.s32 6, %v1926
        %v1928 = vrot.slane %v1037, %v1927
        %v1929 = vmul.f32 %v1928, %v1922
        %v1930 = vmul.f32 %v1928, %v1924
        %1931 = vadd.xlane.f32.xlu0 %v1929
        %v1932 = vpop.xlane.xlu0 %1931
        %1933 = vadd.xlane.f32.xlu0 %v1930
        %v1934 = vpop.xlane.xlu0 %1933
        %s1935 = sld [smem:[#allocation2 + $0x71]]
        %v1936 = vstv %s1935
        %v1937 = vmul.f32 %v1936, %v1932
        %v1938 = vmul.f32 %v1936, %v1934
        %v1939 = vadd.f32 %v1915, %v1937
        %v1940 = vadd.f32 %v1916, %v1938
        %s1941 = sld [smem:[#allocation2 + $0x52]]
        %v1942 = vstv %s1941
        %v1943 = vmul.f32 %v1383, %v1942
        %v1944 = vmul.f32 %v1384, %v1942
        %v1945 = vmul.f32 %v1943, 1.442695
        %v1946 = vpow.pop %v1945
        %v1947 = vmul.f32 %v1944, 1.442695
        %v1948 = vpow.pop %v1947
        %v1949 = vlaneseq
        %v1950 = vshrl.u32 %v1949, 7
        %v1951 = vsub.s32 7, %v1950
        %v1952 = vrot.slane %v1037, %v1951
        %v1953 = vmul.f32 %v1952, %v1946
        %v1954 = vmul.f32 %v1952, %v1948
        %1955 = vadd.xlane.f32.xlu0 %v1953
        %v1956 = vpop.xlane.xlu0 %1955
        %1957 = vadd.xlane.f32.xlu0 %v1954
        %v1958 = vpop.xlane.xlu0 %1957
        %s1959 = sld [smem:[#allocation2 + $0x72]]
        %v1960 = vstv %s1959
        %v1961 = vmul.f32 %v1960, %v1956
        %v1962 = vmul.f32 %v1960, %v1958
        %v1963 = vadd.f32 %v1939, %v1961
        %v1964 = vadd.f32 %v1940, %v1962
        %s1965 = sld [smem:[#allocation2 + $0x53]]
        %v1966 = vstv %s1965
        %v1967 = vmul.f32 %v1383, %v1966
        %v1968 = vmul.f32 %v1384, %v1966
        %v1969 = vmul.f32 %v1967, 1.442695
        %v1970 = vpow.pop %v1969
        %v1971 = vmul.f32 %v1968, 1.442695
        %v1972 = vpow.pop %v1971
        %v1973 = vlaneseq
        %v1974 = vshrl.u32 %v1973, 7
        %v1975 = vsub.s32 0, %v1974
        %v1976 = vrot.slane %v1038, %v1975
        %v1977 = vmul.f32 %v1976, %v1970
        %v1978 = vmul.f32 %v1976, %v1972
        %1979 = vadd.xlane.f32.xlu0 %v1977
        %v1980 = vpop.xlane.xlu0 %1979
        %1981 = vadd.xlane.f32.xlu0 %v1978
        %v1982 = vpop.xlane.xlu0 %1981
        %s1983 = sld [smem:[#allocation2 + $0x73]]
        %v1984 = vstv %s1983
        %v1985 = vmul.f32 %v1984, %v1980
        %v1986 = vmul.f32 %v1984, %v1982
        %v1987 = vadd.f32 %v1963, %v1985
        %v1988 = vadd.f32 %v1964, %v1986
        %s1989 = sld [smem:[#allocation2 + $0x54]]
        %v1990 = vstv %s1989
        %v1991 = vmul.f32 %v1383, %v1990
        %v1992 = vmul.f32 %v1384, %v1990
        %v1993 = vmul.f32 %v1991, 1.442695
        %v1994 = vpow.pop %v1993
        %v1995 = vmul.f32 %v1992, 1.442695
        %v1996 = vpow.pop %v1995
        %v1997 = vlaneseq
        %v1998 = vshrl.u32 %v1997, 7
        %v1999 = vsub.s32 1, %v1998
        %v2000 = vrot.slane %v1038, %v1999
        %v2001 = vmul.f32 %v2000, %v1994
        %v2002 = vmul.f32 %v2000, %v1996
        %2003 = vadd.xlane.f32.xlu0 %v2001
        %v2004 = vpop.xlane.xlu0 %2003
        %2005 = vadd.xlane.f32.xlu0 %v2002
        %v2006 = vpop.xlane.xlu0 %2005
        %s2007 = sld [smem:[#allocation2 + $0x74]]
        %v2008 = vstv %s2007
        %v2009 = vmul.f32 %v2008, %v2004
        %v2010 = vmul.f32 %v2008, %v2006
        %v2011 = vadd.f32 %v1987, %v2009
        %v2012 = vadd.f32 %v1988, %v2010
        %s2013 = sld [smem:[#allocation2 + $0x55]]
        %v2014 = vstv %s2013
        %v2015 = vmul.f32 %v1383, %v2014
        %v2016 = vmul.f32 %v1384, %v2014
        %v2017 = vmul.f32 %v2015, 1.442695
        %v2018 = vpow.pop %v2017
        %v2019 = vmul.f32 %v2016, 1.442695
        %v2020 = vpow.pop %v2019
        %v2021 = vlaneseq
        %v2022 = vshrl.u32 %v2021, 7
        %v2023 = vsub.s32 2, %v2022
        %v2024 = vrot.slane %v1038, %v2023
        %v2025 = vmul.f32 %v2024, %v2018
        %v2026 = vmul.f32 %v2024, %v2020
        %2027 = vadd.xlane.f32.xlu0 %v2025
        %v2028 = vpop.xlane.xlu0 %2027
        %2029 = vadd.xlane.f32.xlu0 %v2026
        %v2030 = vpop.xlane.xlu0 %2029
        %s2031 = sld [smem:[#allocation2 + $0x75]]
        %v2032 = vstv %s2031
        %v2033 = vmul.f32 %v2032, %v2028
        %v2034 = vmul.f32 %v2032, %v2030
        %v2035 = vadd.f32 %v2011, %v2033
        %v2036 = vadd.f32 %v2012, %v2034
        %s2037 = sld [smem:[#allocation2 + $0x56]]
        %v2038 = vstv %s2037
        %v2039 = vmul.f32 %v1383, %v2038
        %v2040 = vmul.f32 %v1384, %v2038
        %v2041 = vmul.f32 %v2039, 1.442695
        %v2042 = vpow.pop %v2041
        %v2043 = vmul.f32 %v2040, 1.442695
        %v2044 = vpow.pop %v2043
        %v2045 = vlaneseq
        %v2046 = vshrl.u32 %v2045, 7
        %v2047 = vsub.s32 3, %v2046
        %v2048 = vrot.slane %v1038, %v2047
        %v2049 = vmul.f32 %v2048, %v2042
        %v2050 = vmul.f32 %v2048, %v2044
        %2051 = vadd.xlane.f32.xlu0 %v2049
        %v2052 = vpop.xlane.xlu0 %2051
        %2053 = vadd.xlane.f32.xlu0 %v2050
        %v2054 = vpop.xlane.xlu0 %2053
        %s2055 = sld [smem:[#allocation2 + $0x76]]
        %v2056 = vstv %s2055
        %v2057 = vmul.f32 %v2056, %v2052
        %v2058 = vmul.f32 %v2056, %v2054
        %v2059 = vadd.f32 %v2035, %v2057
        %v2060 = vadd.f32 %v2036, %v2058
        %s2061 = sld [smem:[#allocation2 + $0x57]]
        %v2062 = vstv %s2061
        %v2063 = vmul.f32 %v1383, %v2062
        %v2064 = vmul.f32 %v1384, %v2062
        %v2065 = vmul.f32 %v2063, 1.442695
        %v2066 = vpow.pop %v2065
        %v2067 = vmul.f32 %v2064, 1.442695
        %v2068 = vpow.pop %v2067
        %v2069 = vlaneseq
        %v2070 = vshrl.u32 %v2069, 7
        %v2071 = vsub.s32 4, %v2070
        %v2072 = vrot.slane %v1038, %v2071
        %v2073 = vmul.f32 %v2072, %v2066
        %v2074 = vmul.f32 %v2072, %v2068
        %2075 = vadd.xlane.f32.xlu0 %v2073
        %v2076 = vpop.xlane.xlu0 %2075
        %2077 = vadd.xlane.f32.xlu0 %v2074
        %v2078 = vpop.xlane.xlu0 %2077
        %s2079 = sld [smem:[#allocation2 + $0x77]]
        %v2080 = vstv %s2079
        %v2081 = vmul.f32 %v2080, %v2076
        %v2082 = vmul.f32 %v2080, %v2078
        %v2083 = vadd.f32 %v2059, %v2081
        %v2084 = vadd.f32 %v2060, %v2082
        %s2085 = sld [smem:[#allocation2 + $0x58]]
        %v2086 = vstv %s2085
        %v2087 = vmul.f32 %v1383, %v2086
        %v2088 = vmul.f32 %v1384, %v2086
        %v2089 = vmul.f32 %v2087, 1.442695
        %v2090 = vpow.pop %v2089
        %v2091 = vmul.f32 %v2088, 1.442695
        %v2092 = vpow.pop %v2091
        %v2093 = vlaneseq
        %v2094 = vshrl.u32 %v2093, 7
        %v2095 = vsub.s32 5, %v2094
        %v2096 = vrot.slane %v1038, %v2095
        %v2097 = vmul.f32 %v2096, %v2090
        %v2098 = vmul.f32 %v2096, %v2092
        %2099 = vadd.xlane.f32.xlu0 %v2097
        %v2100 = vpop.xlane.xlu0 %2099
        %2101 = vadd.xlane.f32.xlu0 %v2098
        %v2102 = vpop.xlane.xlu0 %2101
        %s2103 = sld [smem:[#allocation2 + $0x78]]
        %v2104 = vstv %s2103
        %v2105 = vmul.f32 %v2104, %v2100
        %v2106 = vmul.f32 %v2104, %v2102
        %v2107 = vadd.f32 %v2083, %v2105
        %v2108 = vadd.f32 %v2084, %v2106
        %s2109 = sld [smem:[#allocation2 + $0x59]]
        %v2110 = vstv %s2109
        %v2111 = vmul.f32 %v1383, %v2110
        %v2112 = vmul.f32 %v1384, %v2110
        %v2113 = vmul.f32 %v2111, 1.442695
        %v2114 = vpow.pop %v2113
        %v2115 = vmul.f32 %v2112, 1.442695
        %v2116 = vpow.pop %v2115
        %v2117 = vlaneseq
        %v2118 = vshrl.u32 %v2117, 7
        %v2119 = vsub.s32 6, %v2118
        %v2120 = vrot.slane %v1038, %v2119
        %v2121 = vmul.f32 %v2120, %v2114
        %v2122 = vmul.f32 %v2120, %v2116
        %2123 = vadd.xlane.f32.xlu0 %v2121
        %v2124 = vpop.xlane.xlu0 %2123
        %2125 = vadd.xlane.f32.xlu0 %v2122
        %v2126 = vpop.xlane.xlu0 %2125
        %s2127 = sld [smem:[#allocation2 + $0x79]]
        %v2128 = vstv %s2127
        %v2129 = vmul.f32 %v2128, %v2124
        %v2130 = vmul.f32 %v2128, %v2126
        %v2131 = vadd.f32 %v2107, %v2129
        %v2132 = vadd.f32 %v2108, %v2130
        %s2133 = sld [smem:[#allocation2 + $0x5a]]
        %v2134 = vstv %s2133
        %v2135 = vmul.f32 %v1383, %v2134
        %v2136 = vmul.f32 %v1384, %v2134
        %v2137 = vmul.f32 %v2135, 1.442695
        %v2138 = vpow.pop %v2137
        %v2139 = vmul.f32 %v2136, 1.442695
        %v2140 = vpow.pop %v2139
        %v2141 = vlaneseq
        %v2142 = vshrl.u32 %v2141, 7
        %v2143 = vsub.s32 7, %v2142
        %v2144 = vrot.slane %v1038, %v2143
        %v2145 = vmul.f32 %v2144, %v2138
        %v2146 = vmul.f32 %v2144, %v2140
        %2147 = vadd.xlane.f32.xlu0 %v2145
        %v2148 = vpop.xlane.xlu0 %2147
        %2149 = vadd.xlane.f32.xlu0 %v2146
        %v2150 = vpop.xlane.xlu0 %2149
        %s2151 = sld [smem:[#allocation2 + $0x7a]]
        %v2152 = vstv %s2151
        %v2153 = vmul.f32 %v2152, %v2148
        %v2154 = vmul.f32 %v2152, %v2150
        %v2155 = vadd.f32 %v2131, %v2153
        %v2156 = vadd.f32 %v2132, %v2154
        %v2157 = vstv %s1772
        %v2158 = vadd.f32 %v2157, %v2155
        %v2159 = vadd.f32 %v2157, %v2156
        %s2160 = sld [smem:[#allocation2 + $0x5b]]
        %v2161 = vstv %s2160
        %v2162 = vmul.f32 %v1383, %v2161
        %v2163 = vmul.f32 %v1384, %v2161
        %v2164 = vmul.f32 %v2162, 1.442695
        %v2165 = vpow.pop %v2164
        %v2166 = vmul.f32 %v2163, 1.442695
        %v2167 = vpow.pop %v2166
        %v2168 = vlaneseq
        %v2169 = vshrl.u32 %v2168, 7
        %v2170 = vsub.s32 0, %v2169
        %v2171 = vrot.slane %v1366, %v2170
        %v2172 = vmul.f32 %v2171, %v2165
        %v2173 = vmul.f32 %v2171, %v2167
        %2174 = vadd.xlane.f32.xlu0 %v2172
        %v2175 = vpop.xlane.xlu0 %2174
        %2176 = vadd.xlane.f32.xlu0 %v2173
        %v2177 = vpop.xlane.xlu0 %2176
        %s2178 = sld [smem:[#allocation2 + $0x7b]]
        %v2179 = vstv %s2178
        %v2180 = vmul.f32 %v2179, %v2175
        %v2181 = vmul.f32 %v2179, %v2177
        %v2182 = vadd.f32 %v2180, 0.0
        %v2183 = vadd.f32 %v2181, 0.0
        %s2184 = sld [smem:[#allocation2 + $0x5c]]
        %v2185 = vstv %s2184
        %v2186 = vmul.f32 %v1383, %v2185
        %v2187 = vmul.f32 %v1384, %v2185
        %v2188 = vmul.f32 %v2186, 1.442695
        %v2189 = vpow.pop %v2188
        %v2190 = vmul.f32 %v2187, 1.442695
        %v2191 = vpow.pop %v2190
        %v2192 = vlaneseq
        %v2193 = vshrl.u32 %v2192, 7
        %v2194 = vsub.s32 1, %v2193
        %v2195 = vrot.slane %v1366, %v2194
        %v2196 = vmul.f32 %v2195, %v2189
        %v2197 = vmul.f32 %v2195, %v2191
        %2198 = vadd.xlane.f32.xlu0 %v2196
        %v2199 = vpop.xlane.xlu0 %2198
        %2200 = vadd.xlane.f32.xlu0 %v2197
        %v2201 = vpop.xlane.xlu0 %2200
        %s2202 = sld [smem:[#allocation2 + $0x7c]]
        %v2203 = vstv %s2202
        %v2204 = vmul.f32 %v2203, %v2199
        %v2205 = vmul.f32 %v2203, %v2201
        %v2206 = vadd.f32 %v2182, %v2204
        %v2207 = vadd.f32 %v2183, %v2205
        %s2208 = sld [smem:[#allocation2 + $0x5d]]
        %v2209 = vstv %s2208
        %v2210 = vmul.f32 %v1383, %v2209
        %v2211 = vmul.f32 %v1384, %v2209
        %v2212 = vmul.f32 %v2210, 1.442695
        %v2213 = vpow.pop %v2212
        %v2214 = vmul.f32 %v2211, 1.442695
        %v2215 = vpow.pop %v2214
        %v2216 = vlaneseq
        %v2217 = vshrl.u32 %v2216, 7
        %v2218 = vsub.s32 2, %v2217
        %v2219 = vrot.slane %v1366, %v2218
        %v2220 = vmul.f32 %v2219, %v2213
        %v2221 = vmul.f32 %v2219, %v2215
        %2222 = vadd.xlane.f32.xlu0 %v2220
        %v2223 = vpop.xlane.xlu0 %2222
        %2224 = vadd.xlane.f32.xlu0 %v2221
        %v2225 = vpop.xlane.xlu0 %2224
        %s2226 = sld [smem:[#allocation2 + $0x7d]]
        %v2227 = vstv %s2226
        %v2228 = vmul.f32 %v2227, %v2223
        %v2229 = vmul.f32 %v2227, %v2225
        %v2230 = vadd.f32 %v2206, %v2228
        %v2231 = vadd.f32 %v2207, %v2229
        %s2232 = sld [smem:[#allocation2 + $0x5e]]
        %v2233 = vstv %s2232
        %v2234 = vmul.f32 %v1383, %v2233
        %v2235 = vmul.f32 %v1384, %v2233
        %v2236 = vmul.f32 %v2234, 1.442695
        %v2237 = vpow.pop %v2236
        %v2238 = vmul.f32 %v2235, 1.442695
        %v2239 = vpow.pop %v2238
        %v2240 = vlaneseq
        %v2241 = vshrl.u32 %v2240, 7
        %v2242 = vsub.s32 3, %v2241
        %v2243 = vrot.slane %v1366, %v2242
        %v2244 = vmul.f32 %v2243, %v2237
        %v2245 = vmul.f32 %v2243, %v2239
        %2246 = vadd.xlane.f32.xlu0 %v2244
        %v2247 = vpop.xlane.xlu0 %2246
        %2248 = vadd.xlane.f32.xlu0 %v2245
        %v2249 = vpop.xlane.xlu0 %2248
        %s2250 = sld [smem:[#allocation2 + $0x7e]]
        %v2251 = vstv %s2250
        %v2252 = vmul.f32 %v2251, %v2247
        %v2253 = vmul.f32 %v2251, %v2249
        %v2254 = vadd.f32 %v2230, %v2252
        %v2255 = vadd.f32 %v2231, %v2253
        %s2256 = sld [smem:[#allocation2 + $0x5f]]
        %v2257 = vstv %s2256
        %v2258 = vmul.f32 %v1383, %v2257
        %v2259 = vmul.f32 %v1384, %v2257
        %v2260 = vmul.f32 %v2258, 1.442695
        %v2261 = vpow.pop %v2260
        %v2262 = vmul.f32 %v2259, 1.442695
        %v2263 = vpow.pop %v2262
        %v2264 = vlaneseq
        %v2265 = vshrl.u32 %v2264, 7
        %v2266 = vsub.s32 4, %v2265
        %v2267 = vrot.slane %v1366, %v2266
        %v2268 = vmul.f32 %v2267, %v2261
        %v2269 = vmul.f32 %v2267, %v2263
        %2270 = vadd.xlane.f32.xlu0 %v2268
        %v2271 = vpop.xlane.xlu0 %2270
        %2272 = vadd.xlane.f32.xlu0 %v2269
        %v2273 = vpop.xlane.xlu0 %2272
        %s2274 = sld [smem:[#allocation2 + $0x7f]]
        %v2275 = vstv %s2274
        %v2276 = vmul.f32 %v2275, %v2271
        %v2277 = vmul.f32 %v2275, %v2273
        %v2278 = vadd.f32 %v2254, %v2276
        %v2279 = vadd.f32 %v2255, %v2277
        %s2280 = sld [smem:[#allocation2 + $0x60]]
        %v2281 = vstv %s2280
        %v2282 = vmul.f32 %v1383, %v2281
        %v2283 = vmul.f32 %v1384, %v2281
        %v2284 = vmul.f32 %v2282, 1.442695
        %v2285 = vpow.pop %v2284
        %v2286 = vmul.f32 %v2283, 1.442695
        %v2287 = vpow.pop %v2286
        %v2288 = vlaneseq
        %v2289 = vshrl.u32 %v2288, 7
        %v2290 = vsub.s32 5, %v2289
        %v2291 = vrot.slane %v1366, %v2290
        %v2292 = vmul.f32 %v2291, %v2285
        %v2293 = vmul.f32 %v2291, %v2287
        %2294 = vadd.xlane.f32.xlu0 %v2292
        %v2295 = vpop.xlane.xlu0 %2294
        %2296 = vadd.xlane.f32.xlu0 %v2293
        %v2297 = vpop.xlane.xlu0 %2296
        %s2298 = sld [smem:[#allocation2 + $0x80]]
        %v2299 = vstv %s2298
        %v2300 = vmul.f32 %v2299, %v2295
        %v2301 = vmul.f32 %v2299, %v2297
        %v2302 = vadd.f32 %v2278, %v2300
        %v2303 = vadd.f32 %v2279, %v2301
        %s2304 = sld [smem:[#allocation2 + $0x61]]
        %v2305 = vstv %s2304
        %v2306 = vmul.f32 %v1383, %v2305
        %v2307 = vmul.f32 %v1384, %v2305
        %v2308 = vmul.f32 %v2306, 1.442695
        %v2309 = vpow.pop %v2308
        %v2310 = vmul.f32 %v2307, 1.442695
        %v2311 = vpow.pop %v2310
        %v2312 = vlaneseq
        %v2313 = vshrl.u32 %v2312, 7
        %v2314 = vsub.s32 6, %v2313
        %v2315 = vrot.slane %v1366, %v2314
        %v2316 = vmul.f32 %v2315, %v2309
        %v2317 = vmul.f32 %v2315, %v2311
        %2318 = vadd.xlane.f32.xlu0 %v2316
        %v2319 = vpop.xlane.xlu0 %2318
        %2320 = vadd.xlane.f32.xlu0 %v2317
        %v2321 = vpop.xlane.xlu0 %2320
        %s2322 = sld [smem:[#allocation2 + $0x81]]
        %v2323 = vstv %s2322
        %v2324 = vmul.f32 %v2323, %v2319
        %v2325 = vmul.f32 %v2323, %v2321
        %v2326 = vadd.f32 %v2302, %v2324
        %v2327 = vadd.f32 %v2303, %v2325
        %s2328 = sld [smem:[#allocation2 + $0x62]]
        %v2329 = vstv %s2328
        %v2330 = vmul.f32 %v1383, %v2329
        %v2331 = vmul.f32 %v1384, %v2329
        %v2332 = vmul.f32 %v2330, 1.442695
        %v2333 = vpow.pop %v2332
        %v2334 = vmul.f32 %v2331, 1.442695
        %v2335 = vpow.pop %v2334
        %v2336 = vlaneseq
        %v2337 = vshrl.u32 %v2336, 7
        %v2338 = vsub.s32 7, %v2337
        %v2339 = vrot.slane %v1366, %v2338
        %v2340 = vmul.f32 %v2339, %v2333
        %v2341 = vmul.f32 %v2339, %v2335
        %2342 = vadd.xlane.f32.xlu0 %v2340
        %v2343 = vpop.xlane.xlu0 %2342
        %2344 = vadd.xlane.f32.xlu0 %v2341
        %v2345 = vpop.xlane.xlu0 %2344
        %s2346 = sld [smem:[#allocation2 + $0x82]]
        %v2347 = vstv %s2346
        %v2348 = vmul.f32 %v2347, %v2343
        %v2349 = vmul.f32 %v2347, %v2345
        %v2350 = vadd.f32 %v2326, %v2348
        %v2351 = vadd.f32 %v2327, %v2349
        %s2352 = sld [smem:[#allocation2 + $0x63]]
        %v2353 = vstv %s2352
        %v2354 = vmul.f32 %v1383, %v2353
        %v2355 = vmul.f32 %v1384, %v2353
        %v2356 = vmul.f32 %v2354, 1.442695
        %v2357 = vpow.pop %v2356
        %v2358 = vmul.f32 %v2355, 1.442695
        %v2359 = vpow.pop %v2358
        %v2360 = vlaneseq
        %v2361 = vshrl.u32 %v2360, 7
        %v2362 = vsub.s32 0, %v2361
        %v2363 = vrot.slane %v1367, %v2362
        %v2364 = vmul.f32 %v2363, %v2357
        %v2365 = vmul.f32 %v2363, %v2359
        %2366 = vadd.xlane.f32.xlu0 %v2364
        %v2367 = vpop.xlane.xlu0 %2366
        %2368 = vadd.xlane.f32.xlu0 %v2365
        %v2369 = vpop.xlane.xlu0 %2368
        %s2370 = sld [smem:[#allocation2 + $0x83]]
        %v2371 = vstv %s2370
        %v2372 = vmul.f32 %v2371, %v2367
        %v2373 = vmul.f32 %v2371, %v2369
        %v2374 = vadd.f32 %v2350, %v2372
        %v2375 = vadd.f32 %v2351, %v2373
        %s2376 = sld [smem:[#allocation2 + $0x64]]
        %v2377 = vstv %s2376
        %v2378 = vmul.f32 %v1383, %v2377
        %v2379 = vmul.f32 %v1384, %v2377
        %v2380 = vmul.f32 %v2378, 1.442695
        %v2381 = vpow.pop %v2380
        %v2382 = vmul.f32 %v2379, 1.442695
        %v2383 = vpow.pop %v2382
        %v2384 = vlaneseq
        %v2385 = vshrl.u32 %v2384, 7
        %v2386 = vsub.s32 1, %v2385
        %v2387 = vrot.slane %v1367, %v2386
        %v2388 = vmul.f32 %v2387, %v2381
        %v2389 = vmul.f32 %v2387, %v2383
        %2390 = vadd.xlane.f32.xlu0 %v2388
        %v2391 = vpop.xlane.xlu0 %2390
        %2392 = vadd.xlane.f32.xlu0 %v2389
        %v2393 = vpop.xlane.xlu0 %2392
        %s2394 = sld [smem:[#allocation2 + $0x84]]
        %v2395 = vstv %s2394
        %v2396 = vmul.f32 %v2395, %v2391
        %v2397 = vmul.f32 %v2395, %v2393
        %v2398 = vadd.f32 %v2374, %v2396
        %v2399 = vadd.f32 %v2375, %v2397
        %s2400 = sld [smem:[#allocation2 + $0x65]]
        %v2401 = vstv %s2400
        %v2402 = vmul.f32 %v1383, %v2401
        %v2403 = vmul.f32 %v1384, %v2401
        %v2404 = vmul.f32 %v2402, 1.442695
        %v2405 = vpow.pop %v2404
        %v2406 = vmul.f32 %v2403, 1.442695
        %v2407 = vpow.pop %v2406
        %v2408 = vlaneseq
        %v2409 = vshrl.u32 %v2408, 7
        %v2410 = vsub.s32 2, %v2409
        %v2411 = vrot.slane %v1367, %v2410
        %v2412 = vmul.f32 %v2411, %v2405
        %v2413 = vmul.f32 %v2411, %v2407
        %2414 = vadd.xlane.f32.xlu0 %v2412
        %v2415 = vpop.xlane.xlu0 %2414
        %2416 = vadd.xlane.f32.xlu0 %v2413
        %v2417 = vpop.xlane.xlu0 %2416
        %s2418 = sld [smem:[#allocation2 + $0x85]]
        %v2419 = vstv %s2418
        %v2420 = vmul.f32 %v2419, %v2415
        %v2421 = vmul.f32 %v2419, %v2417
        %v2422 = vadd.f32 %v2398, %v2420
        %v2423 = vadd.f32 %v2399, %v2421
        %s2424 = sld [smem:[#allocation2 + $0x66]]
        %v2425 = vstv %s2424
        %v2426 = vmul.f32 %v1383, %v2425
        %v2427 = vmul.f32 %v1384, %v2425
        %v2428 = vmul.f32 %v2426, 1.442695
        %v2429 = vpow.pop %v2428
        %v2430 = vmul.f32 %v2427, 1.442695
        %v2431 = vpow.pop %v2430
        %v2432 = vlaneseq
        %v2433 = vshrl.u32 %v2432, 7
        %v2434 = vsub.s32 3, %v2433
        %v2435 = vrot.slane %v1367, %v2434
        %v2436 = vmul.f32 %v2435, %v2429
        %v2437 = vmul.f32 %v2435, %v2431
        %2438 = vadd.xlane.f32.xlu0 %v2436
        %v2439 = vpop.xlane.xlu0 %2438
        %2440 = vadd.xlane.f32.xlu0 %v2437
        %v2441 = vpop.xlane.xlu0 %2440
        %s2442 = sld [smem:[#allocation2 + $0x86]]
        %v2443 = vstv %s2442
        %v2444 = vmul.f32 %v2443, %v2439
        %v2445 = vmul.f32 %v2443, %v2441
        %v2446 = vadd.f32 %v2422, %v2444
        %v2447 = vadd.f32 %v2423, %v2445
        %s2448 = sld [smem:[#allocation2 + $0x67]]
        %v2449 = vstv %s2448
        %v2450 = vmul.f32 %v1383, %v2449
        %v2451 = vmul.f32 %v1384, %v2449
        %v2452 = vmul.f32 %v2450, 1.442695
        %v2453 = vpow.pop %v2452
        %v2454 = vmul.f32 %v2451, 1.442695
        %v2455 = vpow.pop %v2454
        %v2456 = vlaneseq
        %v2457 = vshrl.u32 %v2456, 7
        %v2458 = vsub.s32 4, %v2457
        %v2459 = vrot.slane %v1367, %v2458
        %v2460 = vmul.f32 %v2459, %v2453
        %v2461 = vmul.f32 %v2459, %v2455
        %2462 = vadd.xlane.f32.xlu0 %v2460
        %v2463 = vpop.xlane.xlu0 %2462
        %2464 = vadd.xlane.f32.xlu0 %v2461
        %v2465 = vpop.xlane.xlu0 %2464
        %s2466 = sld [smem:[#allocation2 + $0x87]]
        %v2467 = vstv %s2466
        %v2468 = vmul.f32 %v2467, %v2463
        %v2469 = vmul.f32 %v2467, %v2465
        %v2470 = vadd.f32 %v2446, %v2468
        %v2471 = vadd.f32 %v2447, %v2469
        %s2472 = sld [smem:[#allocation2 + $0x68]]
        %v2473 = vstv %s2472
        %v2474 = vmul.f32 %v1383, %v2473
        %v2475 = vmul.f32 %v1384, %v2473
        %v2476 = vmul.f32 %v2474, 1.442695
        %v2477 = vpow.pop %v2476
        %v2478 = vmul.f32 %v2475, 1.442695
        %v2479 = vpow.pop %v2478
        %v2480 = vlaneseq
        %v2481 = vshrl.u32 %v2480, 7
        %v2482 = vsub.s32 5, %v2481
        %v2483 = vrot.slane %v1367, %v2482
        %v2484 = vmul.f32 %v2483, %v2477
        %v2485 = vmul.f32 %v2483, %v2479
        %2486 = vadd.xlane.f32.xlu0 %v2484
        %v2487 = vpop.xlane.xlu0 %2486
        %2488 = vadd.xlane.f32.xlu0 %v2485
        %v2489 = vpop.xlane.xlu0 %2488
        %s2490 = sld [smem:[#allocation2 + $0x88]]
        %v2491 = vstv %s2490
        %v2492 = vmul.f32 %v2491, %v2487
        %v2493 = vmul.f32 %v2491, %v2489
        %v2494 = vadd.f32 %v2470, %v2492
        %v2495 = vadd.f32 %v2471, %v2493
        %s2496 = sld [smem:[#allocation2 + $0x69]]
        %v2497 = vstv %s2496
        %v2498 = vmul.f32 %v1383, %v2497
        %v2499 = vmul.f32 %v1384, %v2497
        %v2500 = vmul.f32 %v2498, 1.442695
        %v2501 = vpow.pop %v2500
        %v2502 = vmul.f32 %v2499, 1.442695
        %v2503 = vpow.pop %v2502
        %v2504 = vlaneseq
        %v2505 = vshrl.u32 %v2504, 7
        %v2506 = vsub.s32 6, %v2505
        %v2507 = vrot.slane %v1367, %v2506
        %v2508 = vmul.f32 %v2507, %v2501
        %v2509 = vmul.f32 %v2507, %v2503
        %2510 = vadd.xlane.f32.xlu0 %v2508
        %v2511 = vpop.xlane.xlu0 %2510
        %2512 = vadd.xlane.f32.xlu0 %v2509
        %v2513 = vpop.xlane.xlu0 %2512
        %s2514 = sld [smem:[#allocation2 + $0x89]]
        %v2515 = vstv %s2514
        %v2516 = vmul.f32 %v2515, %v2511
        %v2517 = vmul.f32 %v2515, %v2513
        %v2518 = vadd.f32 %v2494, %v2516
        %v2519 = vadd.f32 %v2495, %v2517
        %s2520 = sld [smem:[#allocation2 + $0x6a]]
        %v2521 = vstv %s2520
        %v2522 = vmul.f32 %v1383, %v2521
        %v2523 = vmul.f32 %v1384, %v2521
        %v2524 = vmul.f32 %v2522, 1.442695
        %v2525 = vpow.pop %v2524
        %v2526 = vmul.f32 %v2523, 1.442695
        %v2527 = vpow.pop %v2526
        %v2528 = vlaneseq
        %v2529 = vshrl.u32 %v2528, 7
        %v2530 = vsub.s32 7, %v2529
        %v2531 = vrot.slane %v1367, %v2530
        %v2532 = vmul.f32 %v2531, %v2525
        %v2533 = vmul.f32 %v2531, %v2527
        %2534 = vadd.xlane.f32.xlu0 %v2532
        %v2535 = vpop.xlane.xlu0 %2534
        %2536 = vadd.xlane.f32.xlu0 %v2533
        %v2537 = vpop.xlane.xlu0 %2536
        %s2538 = sld [smem:[#allocation2 + $0x8a]]
        %v2539 = vstv %s2538
        %v2540 = vmul.f32 %v2539, %v2535
        %v2541 = vmul.f32 %v2539, %v2537
        %v2542 = vadd.f32 %v2518, %v2540
        %v2543 = vadd.f32 %v2519, %v2541
        %v2544 = vadd.f32 %v2158, %v2542
        %v2545 = vadd.f32 %v2159, %v2543
        %v2546 = vmax.f32 %v2544, 0.0
        %v2547 = vmax.f32 %v2545, 0.0
        %v2548 = vand.u32 2147483647, %v2544
        %v2549 = vand.u32 2147483647, %v2545
        %v2550 = vsub.f32 0.0, %v2548
        %v2551 = vsub.f32 0.0, %v2549
        %v2552 = vmul.f32 %v2550, 1.442695
        %v2553 = vpow.pop %v2552
        %v2554 = vmul.f32 %v2551, 1.442695
        %v2555 = vpow.pop %v2554
        %v2556 = vadd.f32 %v2553, 1.0
        %v2557 = vadd.f32 %v2555, 1.0
        %v2558 = vlog2.pop %v2556
        %v2559 = vmul.f32 %v2558, 0.6931472
        %v2560 = vlog2.pop %v2557
        %v2561 = vmul.f32 %v2560, 0.6931472
        %v2562 = vadd.f32 %v2546, %v2559
        %v2563 = vadd.f32 %v2547, %v2561
        %vm2564 = vcmask 7168
        %2565 = vst.msk [vmem:[%s610] sm:$0xff] %vm2564, %v1770
        %2566 = vst.msk [vmem:[%s610 + $0x8] sm:$0xff] %vm2564, %v1771
        %2567 = vst.msk [vmem:[%s615] sm:$0xff] %vm2564, %v2562
        %2568 = vst.msk [vmem:[%s615 + $0x8] sm:$0xff] %vm2564, %v2563
        %s2569 = sld [smem:[#allocation2 + $0x24]]
        %v2570 = vstv %s2569
        %v2571 = vadd.f32 %v2570, 0.0
        %s2572 = sld [smem:[#allocation2 + $0x4]]
        %v2573 = vstv %s2572
        %v2574 = vmul.f32 %v671, %v2573
        %v2575 = vmul.f32 %v2574, 1.442695
        %v2576 = vpow.pop %v2575
        %s2577 = sld [smem:[#allocation2 + $0xc]]
        %s2578 = sld [smem:[#allocation2 + $0x14]]
        %v2579 = vstv %s2578
        %v2580 = vmul.f32 %v2579, %v676
        %v2581 = vstv %s2577
        %v2582 = vadd.f32 %v2581, %v2580
        %s2583 = sld [smem:[#allocation2 + $0x1c]]
        %v2584 = vstv %s2583
        %v2585 = vmul.f32 %v2584, %v736
        %v2586 = vadd.f32 %v2582, %v2585
        %v2587 = vmul.f32 %v2576, %v2586
        %v2588 = vsel %vm682, %v2587, 0.0
        %v2589 = vrot.slane %v2588, 4
        %v2590 = vadd.f32 %v2588, %v2589
        %v2591 = vrot.slane %v2590, 2
        %v2592 = vadd.f32 %v2590, %v2591
        %v2593 = vrot.slane %v2592, 1
        %v2594 = vadd.f32 %v2592, %v2593
        %v2595 = vadd.f32 %v2571, %v2594
        %s2596 = sld [smem:[#allocation2 + $0x5]]
        %v2597 = vstv %s2596
        %v2598 = vmul.f32 %v671, %v2597
        %v2599 = vmul.f32 %v2598, 1.442695
        %v2600 = vpow.pop %v2599
        %s2601 = sld [smem:[#allocation2 + $0xd]]
        %s2602 = sld [smem:[#allocation2 + $0x15]]
        %v2603 = vstv %s2602
        %v2604 = vmul.f32 %v2603, %v676
        %v2605 = vstv %s2601
        %v2606 = vadd.f32 %v2605, %v2604
        %s2607 = sld [smem:[#allocation2 + $0x1d]]
        %v2608 = vstv %s2607
        %v2609 = vmul.f32 %v2608, %v736
        %v2610 = vadd.f32 %v2606, %v2609
        %v2611 = vmul.f32 %v2600, %v2610
        %v2612 = vsel %vm682, %v2611, 0.0
        %v2613 = vrot.slane %v2612, 4
        %v2614 = vadd.f32 %v2612, %v2613
        %v2615 = vrot.slane %v2614, 2
        %v2616 = vadd.f32 %v2614, %v2615
        %v2617 = vrot.slane %v2616, 1
        %v2618 = vadd.f32 %v2616, %v2617
        %v2619 = vadd.f32 %v2595, %v2618
        %s2620 = sld [smem:[#allocation2 + $0x6]]
        %v2621 = vstv %s2620
        %v2622 = vmul.f32 %v671, %v2621
        %v2623 = vmul.f32 %v2622, 1.442695
        %v2624 = vpow.pop %v2623
        %s2625 = sld [smem:[#allocation2 + $0xe]]
        %s2626 = sld [smem:[#allocation2 + $0x16]]
        %v2627 = vstv %s2626
        %v2628 = vmul.f32 %v2627, %v676
        %v2629 = vstv %s2625
        %v2630 = vadd.f32 %v2629, %v2628
        %s2631 = sld [smem:[#allocation2 + $0x1e]]
        %v2632 = vstv %s2631
        %v2633 = vmul.f32 %v2632, %v736
        %v2634 = vadd.f32 %v2630, %v2633
        %v2635 = vmul.f32 %v2624, %v2634
        %v2636 = vsel %vm682, %v2635, 0.0
        %v2637 = vrot.slane %v2636, 4
        %v2638 = vadd.f32 %v2636, %v2637
        %v2639 = vrot.slane %v2638, 2
        %v2640 = vadd.f32 %v2638, %v2639
        %v2641 = vrot.slane %v2640, 1
        %v2642 = vadd.f32 %v2640, %v2641
        %v2643 = vadd.f32 %v2619, %v2642
        %s2644 = sld [smem:[#allocation2 + $0x7]]
        %v2645 = vstv %s2644
        %v2646 = vmul.f32 %v671, %v2645
        %v2647 = vmul.f32 %v2646, 1.442695
        %v2648 = vpow.pop %v2647
        %s2649 = sld [smem:[#allocation2 + $0xf]]
        %s2650 = sld [smem:[#allocation2 + $0x17]]
        %v2651 = vstv %s2650
        %v2652 = vmul.f32 %v2651, %v676
        %v2653 = vstv %s2649
        %v2654 = vadd.f32 %v2653, %v2652
        %s2655 = sld [smem:[#allocation2 + $0x1f]]
        %v2656 = vstv %s2655
        %v2657 = vmul.f32 %v2656, %v736
        %v2658 = vadd.f32 %v2654, %v2657
        %v2659 = vmul.f32 %v2648, %v2658
        %v2660 = vsel %vm682, %v2659, 0.0
        %v2661 = vrot.slane %v2660, 4
        %v2662 = vadd.f32 %v2660, %v2661
        %v2663 = vrot.slane %v2662, 2
        %v2664 = vadd.f32 %v2662, %v2663
        %v2665 = vrot.slane %v2664, 1
        %v2666 = vadd.f32 %v2664, %v2665
        %v2667 = vadd.f32 %v2643, %v2666
        %s2668 = sld [smem:[#allocation2 + $0x8]]
        %v2669 = vstv %s2668
        %v2670 = vmul.f32 %v671, %v2669
        %v2671 = vmul.f32 %v2670, 1.442695
        %v2672 = vpow.pop %v2671
        %s2673 = sld [smem:[#allocation2 + $0x10]]
        %s2674 = sld [smem:[#allocation2 + $0x18]]
        %v2675 = vstv %s2674
        %v2676 = vmul.f32 %v2675, %v676
        %v2677 = vstv %s2673
        %v2678 = vadd.f32 %v2677, %v2676
        %s2679 = sld [smem:[#allocation2 + $0x20]]
        %v2680 = vstv %s2679
        %v2681 = vmul.f32 %v2680, %v736
        %v2682 = vadd.f32 %v2678, %v2681
        %v2683 = vmul.f32 %v2672, %v2682
        %v2684 = vsel %vm682, %v2683, 0.0
        %v2685 = vrot.slane %v2684, 4
        %v2686 = vadd.f32 %v2684, %v2685
        %v2687 = vrot.slane %v2686, 2
        %v2688 = vadd.f32 %v2686, %v2687
        %v2689 = vrot.slane %v2688, 1
        %v2690 = vadd.f32 %v2688, %v2689
        %v2691 = vadd.f32 %v2667, %v2690
        %s2692 = sld [smem:[#allocation2 + $0x9]]
        %v2693 = vstv %s2692
        %v2694 = vmul.f32 %v671, %v2693
        %v2695 = vmul.f32 %v2694, 1.442695
        %v2696 = vpow.pop %v2695
        %s2697 = sld [smem:[#allocation2 + $0x11]]
        %s2698 = sld [smem:[#allocation2 + $0x19]]
        %v2699 = vstv %s2698
        %v2700 = vmul.f32 %v2699, %v676
        %v2701 = vstv %s2697
        %v2702 = vadd.f32 %v2701, %v2700
        %s2703 = sld [smem:[#allocation2 + $0x21]]
        %v2704 = vstv %s2703
        %v2705 = vmul.f32 %v2704, %v736
        %v2706 = vadd.f32 %v2702, %v2705
        %v2707 = vmul.f32 %v2696, %v2706
        %v2708 = vsel %vm682, %v2707, 0.0
        %v2709 = vrot.slane %v2708, 4
        %v2710 = vadd.f32 %v2708, %v2709
        %v2711 = vrot.slane %v2710, 2
        %v2712 = vadd.f32 %v2710, %v2711
        %v2713 = vrot.slane %v2712, 1
        %v2714 = vadd.f32 %v2712, %v2713
        %v2715 = vadd.f32 %v2691, %v2714
        %s2716 = sld [smem:[#allocation2 + $0xa]]
        %v2717 = vstv %s2716
        %v2718 = vmul.f32 %v671, %v2717
        %v2719 = vmul.f32 %v2718, 1.442695
        %v2720 = vpow.pop %v2719
        %s2721 = sld [smem:[#allocation2 + $0x12]]
        %s2722 = sld [smem:[#allocation2 + $0x1a]]
        %v2723 = vstv %s2722
        %v2724 = vmul.f32 %v2723, %v676
        %v2725 = vstv %s2721
        %v2726 = vadd.f32 %v2725, %v2724
        %s2727 = sld [smem:[#allocation2 + $0x22]]
        %v2728 = vstv %s2727
        %v2729 = vmul.f32 %v2728, %v736
        %v2730 = vadd.f32 %v2726, %v2729
        %v2731 = vmul.f32 %v2720, %v2730
        %v2732 = vsel %vm682, %v2731, 0.0
        %v2733 = vrot.slane %v2732, 4
        %v2734 = vadd.f32 %v2732, %v2733
        %v2735 = vrot.slane %v2734, 2
        %v2736 = vadd.f32 %v2734, %v2735
        %v2737 = vrot.slane %v2736, 1
        %v2738 = vadd.f32 %v2736, %v2737
        %v2739 = vadd.f32 %v2715, %v2738
        %s2740 = sld [smem:[#allocation2 + $0xb]]
        %v2741 = vstv %s2740
        %v2742 = vmul.f32 %v671, %v2741
        %v2743 = vmul.f32 %v2742, 1.442695
        %v2744 = vpow.pop %v2743
        %s2745 = sld [smem:[#allocation2 + $0x13]]
        %s2746 = sld [smem:[#allocation2 + $0x1b]]
        %v2747 = vstv %s2746
        %v2748 = vmul.f32 %v2747, %v676
        %v2749 = vstv %s2745
        %v2750 = vadd.f32 %v2749, %v2748
        %s2751 = sld [smem:[#allocation2 + $0x23]]
        %v2752 = vstv %s2751
        %v2753 = vmul.f32 %v2752, %v736
        %v2754 = vadd.f32 %v2750, %v2753
        %v2755 = vmul.f32 %v2744, %v2754
        %v2756 = vsel %vm682, %v2755, 0.0
        %v2757 = vrot.slane %v2756, 4
        %v2758 = vadd.f32 %v2756, %v2757
        %v2759 = vrot.slane %v2758, 2
        %v2760 = vadd.f32 %v2758, %v2759
        %v2761 = vrot.slane %v2760, 1
        %v2762 = vadd.f32 %v2760, %v2761
        %v2763 = vadd.f32 %v2739, %v2762
        %v2764 = vsub.f32 %v2763, %v622
        %v2765 = vmul.f32 %v2764, %v2764
        %vm2766 = vcmask 57344
        %v2767 = vsel %vm2766, %v2765, 0.0
        %2768 = vadd.xlane.f32.xlu0 %v2767
        %v2769 = vpop.xlane.xlu0 %2768
        %v2770 = vadd.f32 %v2769, 0.0
        %vm2771 = vcmask 0
        %2772 = vst.msk [vmem:[%s618] sm:$0x1] %vm2771, %v2770
        %p2773 = scmp.lt.s32.totalorder %s29, 1
        %s2774 = scalar_select %p2773, %s29, 1
        %s2775 = smul.addr %s2774, 2
        %s2776 = smul.addr %s2775, 8
        %s2777 = scalar_lea.vmem %s14, %s2776
        %p2778 = scmp.lt.s32.totalorder %s29, 1
        %s2779 = scalar_select %p2778, %s29, 1
        %s2780 = smul.addr %s2779, 2
        %s2781 = smul.addr %s2780, 8
        %s2782 = scalar_lea.vmem %s15, %s2781
        %p2783 = scmp.lt.s32.totalorder %s29, 1
        %s2784 = scalar_select %p2783, %s29, 1
        %s2785 = scalar_lea.vmem %s16, %s2784
        // Predicated region
        $region81: #{tpu_custom_call.1} parent=75 // pred_check
          %p2786 = pneg %p366
        $region82: #{tpu_custom_call.1} parent=75 // pred_check_branch
          %2788 = sbr.rel (%p2786) target = $region84
        $region83: #{tpu_custom_call.1} parent=75 // pred_region
          _
        $region84: #{tpu_custom_call.1} parent=75 // pred_fallthru
          _
        // Predicated region
        $region85: #{tpu_custom_call.1} parent=75 // pred_check
          %p2789 = pneg %p392
        $region86: #{tpu_custom_call.1} parent=75 // pred_check_branch
          %2791 = sbr.rel (%p2789) target = $region88
        $region87: #{tpu_custom_call.1} parent=75 // pred_region
          _
        $region88: #{tpu_custom_call.1} parent=75 // pred_fallthru
          _
        // Predicated region
        $region89: #{tpu_custom_call.1} parent=75 // pred_check
          %p2792 = pneg %p418
        $region90: #{tpu_custom_call.1} parent=75 // pred_check_branch
          %2794 = sbr.rel (%p2792) target = $region92
        $region91: #{tpu_custom_call.1} parent=75 // pred_region
          _
        $region92: #{tpu_custom_call.1} parent=75 // pred_fallthru
          _
      $region76: #{tpu_custom_call.1} parent=5 // pred_fallthru
        _
      %p2795 = scmp.le.s32.totalorder 2, %s24
      // Predicated region
      $region93: #{tpu_custom_call.1} parent=5 // pred_check
        %p2796 = pneg %p2795
      $region94: #{tpu_custom_call.1} parent=5 // pred_check_branch
        %2798 = sbr.rel (%p2796) target = $region96
      $region95: #{tpu_custom_call.1} parent=5 // pred_region
        %s2799 = ssub.s32 %s24, 2
        // Predicated region
        $region97: #{tpu_custom_call.1} parent=95 // pred_check
          %p2800 = pneg %p372
        $region98: #{tpu_custom_call.1} parent=95 // pred_check_branch
          %2802 = sbr.rel (%p2800) target = $region100
        $region99: #{tpu_custom_call.1} parent=95 // pred_region
          %p2803 = scmp.lt.s32.totalorder %s30, 1
          %s2804 = scalar_select %p2803, %s30, 1
          %s2805 = smul.addr %s2804, 2
          %s2806 = smul.addr %s2805, 8
          %s2807 = scalar_lea.vmem %s14, %s2806
        $region100: #{tpu_custom_call.1} parent=95 // pred_fallthru
          _
        // Predicated region
        $region101: #{tpu_custom_call.1} parent=95 // pred_check
          %p2808 = pneg %p398
        $region102: #{tpu_custom_call.1} parent=95 // pred_check_branch
          %2810 = sbr.rel (%p2808) target = $region104
        $region103: #{tpu_custom_call.1} parent=95 // pred_region
          %p2811 = scmp.lt.s32.totalorder %s30, 1
          %s2812 = scalar_select %p2811, %s30, 1
          %s2813 = smul.addr %s2812, 2
          %s2814 = smul.addr %s2813, 8
          %s2815 = scalar_lea.vmem %s15, %s2814
        $region104: #{tpu_custom_call.1} parent=95 // pred_fallthru
          _
        // Predicated region
        $region105: #{tpu_custom_call.1} parent=95 // pred_check
          %p2816 = pneg %p424
        $region106: #{tpu_custom_call.1} parent=95 // pred_check_branch
          %2818 = sbr.rel (%p2816) target = $region108
        $region107: #{tpu_custom_call.1} parent=95 // pred_region
          %p2819 = scmp.lt.s32.totalorder %s30, 1
          %s2820 = scalar_select %p2819, %s30, 1
          %s2821 = scalar_lea.vmem %s16, %s2820
        $region108: #{tpu_custom_call.1} parent=95 // pred_fallthru
          _
      $region96: #{tpu_custom_call.1} parent=5 // pred_fallthru
        _
    $region6: #{tpu_custom_call.1} parent=1 // loop_footer
      %s28 = sadd.s32 1, %s24
    $region7: #{tpu_custom_call.1} parent=1 // loop_footer_branch
      %23 = sbr.rel target = $region3
    $region8: #{tpu_custom_call.1} parent=1 // loop_exit
      _
    %2822 = vsyncpa [#allocation3], 1
    %s2823 = scalar_lea.sflag [#allocation3], 1
    %2824 = vsyncpa %s2823, 1

</llo_original>
